<compile_context>
chip_gen: v7x
topology: tpu7x:2x2x1
jax: 0.10.0
libtpu: 0.0.40
codegen_flags: <defaults>
</compile_context>

<pallas_src>
import functools
import math

import jax
import jax.numpy as jnp
from jax import lax
from jax.experimental import pallas as pl
from jax.experimental.pallas import tpu as pltpu


# --------------------------------------------------------------------------- #
# helpers
# --------------------------------------------------------------------------- #
def _pick_tile(n, target):
    """Largest t <= target that divides n and is 8-aligned (or the full dim)."""
    for t in range(min(n, target), 0, -1):
        if n % t == 0 and (t == n or t % 8 == 0):
            return t
    return n


def _padded_bytes(shape, dtype):
    shape = tuple(shape)
    if len(shape) == 1:
        shape = (1,) + shape
    *lead, r, c = shape
    r = -(-r // 8) * 8
    c = -(-c // 128) * 128
    n = 1
    for d in lead:
        n *= d
    return n * r * c * jnp.dtype(dtype).itemsize


def _vmem_limit(byte_list):
    est = 2 * int(sum(byte_list))                       # double-buffer headroom
    return int(min(max(est, 32 * 1024 * 1024), 64 * 1024 * 1024))


# --------------------------------------------------------------------------- #
# fused LayerNorm + Multi-Head Attention + residual
# --------------------------------------------------------------------------- #
def mha_kernel(x_ref, mask_ref, lna_ref, lnb_ref,
               wq_ref, bq_ref, wk_ref, bk_ref, wv_ref, bv_ref,
               wo_ref, bo_ref, o_ref,
               xn_sc, q_sc, k_sc, v_sc, ctx_sc,
               *, n_heads, eps, q_tile, mm_dtype):
    S, D = x_ref.shape[1], x_ref.shape[2]
    dk = D // n_heads
    scale = 1.0 / math.sqrt(dk)
    qt = pl.program_id(1)
    q0 = pl.multiple_of(qt * q_tile, q_tile)

    # ---- fused LayerNorm-1 (torch.std semantics: ddof=1, eps added to std) ----
    x = x_ref[0].astype(jnp.float32)                                  # (S, D)
    mean = jnp.mean(x, axis=-1, keepdims=True)
    var = jnp.sum((x - mean) ** 2, axis=-1, keepdims=True) * (1.0 / (D - 1))
    inv = 1.0 / (jnp.sqrt(var) + eps)                                 # one divide / row
    xn = (lna_ref[...] * (x - mean)) * inv + lnb_ref[...]             # (S, D) f32
    xn_mm = xn.astype(mm_dtype)
    xn_sc[...] = xn_mm

    # ---- full-width K / V projections: (S,D)@(D,D) bf16 MXU, f32 accumulate ----
    k_sc[...] = (jnp.dot(xn_mm, wk_ref[...], preferred_element_type=jnp.float32)
                 + bk_ref[...]).astype(mm_dtype)
    v_sc[...] = (jnp.dot(xn_mm, wv_ref[...], preferred_element_type=jnp.float32)
                 + bv_ref[...]).astype(mm_dtype)

    # ---- Q projection for this query tile only ----
    xn_q = xn_sc[pl.ds(q0, q_tile), :]                                # (TQ, D)
    q_sc[...] = (jnp.dot(xn_q, wq_ref[...], preferred_element_type=jnp.float32)
                 + bq_ref[...]).astype(mm_dtype)

    # ---- additive key-mask bias, hoisted out of the head loop ----
    bias = jnp.where(mask_ref[0] == 0, jnp.float32(-1e9), jnp.float32(0.0))  # (1, S)

    # ---- per-head scaled-dot-product attention ----
    # TODO(synk): flash-style KV tiling with online softmax for long S (bounds
    # the (TQ,S) scores / VMEM to O(S*tile) instead of full S).
    for h in range(n_heads):                 # per-head results flushed to VMEM scratch
        qh = q_sc[:, h * dk:(h + 1) * dk]                             # (TQ, dk)
        kh = k_sc[:, h * dk:(h + 1) * dk]                             # (S,  dk)
        vh = v_sc[:, h * dk:(h + 1) * dk]                             # (S,  dk)
        s = lax.dot_general(qh, kh, (((1,), (1,)), ((), ())),
                            preferred_element_type=jnp.float32) * scale + bias
        s = s - jnp.max(s, axis=-1, keepdims=True)
        p = jnp.exp(s)
        p = p * pl.reciprocal(jnp.sum(p, axis=-1, keepdims=True), approx=True)
        ctx_sc[:, h * dk:(h + 1) * dk] = jnp.dot(
            p.astype(mm_dtype), vh, preferred_element_type=jnp.float32)

    # ---- single full-width output projection + residual ----
    out = jnp.dot(ctx_sc[...].astype(mm_dtype), wo_ref[...],
                  preferred_element_type=jnp.float32) + bo_ref[...]
    res = x_ref[0, pl.ds(q0, q_tile), :].astype(jnp.float32)
    o_ref[0] = (res + out).astype(o_ref.dtype)


def mha_block(x, mask, lp, n_heads, eps, *, mm_dtype=jnp.bfloat16,
              q_tile_target=128):
    B, S, D = x.shape
    TQ = _pick_tile(S, q_tile_target)
    QT = S // TQ
    f32 = jnp.float32
    row = lambda v: v.reshape(1, -1).astype(f32)

    wq = lp["wq"].astype(mm_dtype); wk = lp["wk"].astype(mm_dtype)
    wv = lp["wv"].astype(mm_dtype); wo = lp["wo"].astype(mm_dtype)
    bq, bk, bv, bo = row(lp["bq"]), row(lp["bk"]), row(lp["bv"]), row(lp["bo"])
    lna, lnb = row(lp["ln1_alpha"]), row(lp["ln1_beta"])

    const = lambda shape: pl.BlockSpec(shape, lambda b, q: (0, 0))
    vmem = _vmem_limit([
        _padded_bytes((1, S, D), x.dtype),
        _padded_bytes((1, 1, S), mask.dtype),
        2 * _padded_bytes((1, D), f32),
        4 * _padded_bytes((D, D), mm_dtype),
        4 * _padded_bytes((1, D), f32),
        _padded_bytes((1, TQ, D), x.dtype),
        3 * _padded_bytes((S, D), mm_dtype),
        _padded_bytes((TQ, D), mm_dtype),
        _padded_bytes((TQ, D), f32),
    ])

    return pl.pallas_call(
        functools.partial(mha_kernel, n_heads=n_heads, eps=eps,
                          q_tile=TQ, mm_dtype=mm_dtype),
        out_shape=jax.ShapeDtypeStruct((B, S, D), x.dtype),
        grid=(B, QT),
        in_specs=[
            pl.BlockSpec((1, S, D), lambda b, q: (b, 0, 0)),   # x (LN in + residual)
            pl.BlockSpec((1, 1, S), lambda b, q: (b, 0, 0)),   # key mask
            const((1, D)), const((1, D)),                      # ln1 alpha / beta
            const((D, D)), const((1, D)),                      # Wq, bq
            const((D, D)), const((1, D)),                      # Wk, bk
            const((D, D)), const((1, D)),                      # Wv, bv
            const((D, D)), const((1, D)),                      # Wo, bo
        ],
        out_specs=pl.BlockSpec((1, TQ, D), lambda b, q: (b, q, 0)),
        scratch_shapes=[
            pltpu.VMEM((S, D), mm_dtype),    # xn
            pltpu.VMEM((TQ, D), mm_dtype),   # q
            pltpu.VMEM((S, D), mm_dtype),    # k
            pltpu.VMEM((S, D), mm_dtype),    # v
            pltpu.VMEM((TQ, D), jnp.float32),  # concatenated heads
        ],
        compiler_params=pltpu.CompilerParams(
            dimension_semantics=("parallel", "parallel"),
            vmem_limit_bytes=vmem),
    )(x, mask, lna, lnb, wq, bq, wk, bk, wv, bv, wo, bo)


# --------------------------------------------------------------------------- #
# fused LayerNorm + FeedForward + residual
# --------------------------------------------------------------------------- #
def ffn_kernel(x_ref, lna_ref, lnb_ref, w1_ref, b1_ref, w2_ref, b2_ref, o_ref,
               *, eps, mm_dtype):
    x = x_ref[...].astype(jnp.float32)                                # (TM, D)
    D = x.shape[-1]
    mean = jnp.mean(x, axis=-1, keepdims=True)
    var = jnp.sum((x - mean) ** 2, axis=-1, keepdims=True) * (1.0 / (D - 1))
    inv = 1.0 / (jnp.sqrt(var) + eps)
    xn = (lna_ref[...] * (x - mean)) * inv + lnb_ref[...]
    h = jnp.dot(xn.astype(mm_dtype), w1_ref[...],
                preferred_element_type=jnp.float32) + b1_ref[...]
    h = jnp.maximum(h, 0.0)
    out = jnp.dot(h.astype(mm_dtype), w2_ref[...],
                  preferred_element_type=jnp.float32) + b2_ref[...]
    o_ref[...] = (x + out).astype(o_ref.dtype)


def ffn_block(x, lp, eps, *, mm_dtype=jnp.bfloat16, row_tile_target=256):
    B, S, D = x.shape
    N = B * S
    F = lp["w1"].shape[1]
    TM = _pick_tile(N, row_tile_target)
    f32 = jnp.float32
    row = lambda v: v.reshape(1, -1).astype(f32)

    x2 = x.reshape(N, D)
    w1 = lp["w1"].astype(mm_dtype); w2 = lp["w2"].astype(mm_dtype)
    b1, b2 = row(lp["b1"]), row(lp["b2"])
    lna, lnb = row(lp["ln2_alpha"]), row(lp["ln2_beta"])

    vmem = _vmem_limit([
        2 * _padded_bytes((TM, D), x.dtype),      # x block + out block
        2 * _padded_bytes((1, D), f32),
        _padded_bytes((D, F), mm_dtype),
        _padded_bytes((1, F), f32),
        _padded_bytes((F, D), mm_dtype),
        _padded_bytes((1, D), f32),
        _padded_bytes((TM, F), f32),              # hidden activation
    ])

    out = pl.pallas_call(
        functools.partial(ffn_kernel, eps=eps, mm_dtype=mm_dtype),
        out_shape=jax.ShapeDtypeStruct((N, D), x.dtype),
        grid=(N // TM,),
        in_specs=[
            pl.BlockSpec((TM, D), lambda i: (i, 0)),   # x (LN in + residual)
            pl.BlockSpec((1, D), lambda i: (0, 0)),
            pl.BlockSpec((1, D), lambda i: (0, 0)),
            pl.BlockSpec((D, F), lambda i: (0, 0)),
            pl.BlockSpec((1, F), lambda i: (0, 0)),
            pl.BlockSpec((F, D), lambda i: (0, 0)),
            pl.BlockSpec((1, D), lambda i: (0, 0)),
        ],
        out_specs=pl.BlockSpec((TM, D), lambda i: (i, 0)),
        input_output_aliases={0: 0},               # residual aliased in place
        compiler_params=pltpu.CompilerParams(
            dimension_semantics=("parallel",),
            vmem_limit_bytes=vmem),
    )(x2, lna, lnb, w1, b1, w2, b2)
    return out.reshape(B, S, D)


# --------------------------------------------------------------------------- #
# Encoder glue (one MHA call + one FFN call per layer)
# --------------------------------------------------------------------------- #
def encoder_forward(x, mask, layers, n_heads, eps):
    for lp in layers:
        x = mha_block(x, mask, lp, n_heads, eps)
        x = ffn_block(x, lp, eps)
    return x


# --------------------------------------------------------------------------- #
# Pure-JAX reference (matches the PyTorch module, f32)
# --------------------------------------------------------------------------- #
def ref_forward(x, mask, layers, n_heads, eps):
    def ln(x, a, b):
        m = jnp.mean(x, -1, keepdims=True)
        v = jnp.sum((x - m) ** 2, -1, keepdims=True) / (x.shape[-1] - 1)
        return a * (x - m) / (jnp.sqrt(v) + eps) + b

    for lp in layers:
        h = ln(x, lp["ln1_alpha"], lp["ln1_beta"])
        B, S, D = h.shape
        dk = D // n_heads
        q = (h @ lp["wq"] + lp["bq"]).reshape(B, S, n_heads, dk).transpose(0, 2, 1, 3)
        k = (h @ lp["wk"] + lp["bk"]).reshape(B, S, n_heads, dk).transpose(0, 2, 1, 3)
        v = (h @ lp["wv"] + lp["bv"]).reshape(B, S, n_heads, dk).transpose(0, 2, 1, 3)
        s = jnp.einsum("bhqd,bhkd->bhqk", q, k) / math.sqrt(dk)
        s = jnp.where(mask[:, None, :, :] == 0, -1e9, s)
        p = jax.nn.softmax(s, axis=-1)
        o = jnp.einsum("bhqk,bhkd->bhqd", p, v).transpose(0, 2, 1, 3).reshape(B, S, D)
        x = x + (o @ lp["wo"] + lp["bo"])
        h = ln(x, lp["ln2_alpha"], lp["ln2_beta"])
        x = x + (jnp.maximum(h @ lp["w1"] + lp["b1"], 0.0) @ lp["w2"] + lp["b2"])
    return x


# --------------------------------------------------------------------------- #
# main
# --------------------------------------------------------------------------- #
if __name__ == "__main__":
    B, S, D, H, FF, L = 2, 8, 32, 4, 64, 2
    EPS = 1e-6
    key = jax.random.PRNGKey(0)

    def init_layer(k):
        ks = jax.random.split(k, 8)
        w = lambda kk, shape: jax.random.normal(kk, shape, jnp.float32) * 0.05
        return {
            "ln1_alpha": jnp.ones((D,), jnp.float32), "ln1_beta": jnp.zeros((D,), jnp.float32),
            "wq": w(ks[0], (D, D)), "bq": jnp.zeros((D,), jnp.float32),
            "wk": w(ks[1], (D, D)), "bk": jnp.zeros((D,), jnp.float32),
            "wv": w(ks[2], (D, D)), "bv": jnp.zeros((D,), jnp.float32),
            "wo": w(ks[3], (D, D)), "bo": jnp.zeros((D,), jnp.float32),
            "ln2_alpha": jnp.ones((D,), jnp.float32), "ln2_beta": jnp.zeros((D,), jnp.float32),
            "w1": w(ks[4], (D, FF)), "b1": jnp.zeros((FF,), jnp.float32),
            "w2": w(ks[5], (FF, D)), "b2": jnp.zeros((D,), jnp.float32),
        }

    keys = jax.random.split(key, L + 1)
    layers = [init_layer(keys[i]) for i in range(L)]
    x = jax.random.normal(keys[L], (B, S, D), jnp.float32)

    # padding mask: batch 1 has its last two key positions masked out
    mask = jnp.ones((B, 1, S), jnp.float32).at[1, 0, S - 2:].set(0.0)

    out = jax.jit(lambda x, m: encoder_forward(x, m, layers, H, EPS))(x, mask)
    out = jax.block_until_ready(out)

    ref = ref_forward(x, mask, layers, H, EPS)
    assert out.shape == (B, S, D)
    max_err = float(jnp.max(jnp.abs(out - ref)))
    # bf16 MXU operands (f32 accumulation) => slightly looser tolerance than f32
    assert jnp.allclose(out, ref, rtol=2e-2, atol=2e-2), f"mismatch vs reference, max|err|={max_err}"
    print("KERNEL_OK")
</pallas_src>

<mosaic_0001>
module attributes {stable_mosaic.version = 11 : i64} {
  func.func @mha_kernel(%arg0: i32, %arg1: i32, %arg2: memref<1x8x32xf32, #tpu.memory_space<vmem>>, %arg3: memref<1x1x8xf32, #tpu.memory_space<vmem>>, %arg4: memref<1x32xf32, #tpu.memory_space<vmem>>, %arg5: memref<1x32xf32, #tpu.memory_space<vmem>>, %arg6: memref<32x32xbf16, #tpu.memory_space<vmem>>, %arg7: memref<1x32xf32, #tpu.memory_space<vmem>>, %arg8: memref<32x32xbf16, #tpu.memory_space<vmem>>, %arg9: memref<1x32xf32, #tpu.memory_space<vmem>>, %arg10: memref<32x32xbf16, #tpu.memory_space<vmem>>, %arg11: memref<1x32xf32, #tpu.memory_space<vmem>>, %arg12: memref<32x32xbf16, #tpu.memory_space<vmem>>, %arg13: memref<1x32xf32, #tpu.memory_space<vmem>>, %arg14: memref<1x8x32xf32, #tpu.memory_space<vmem>>, %arg15: memref<8x32xbf16, #tpu.memory_space<vmem>>, %arg16: memref<8x32xbf16, #tpu.memory_space<vmem>>, %arg17: memref<8x32xbf16, #tpu.memory_space<vmem>>, %arg18: memref<8x32xbf16, #tpu.memory_space<vmem>>, %arg19: memref<8x32xf32, #tpu.memory_space<vmem>>) attributes {dimension_semantics = [#tpu.dimension_semantics<parallel>, #tpu.dimension_semantics<parallel>], iteration_bounds = array<i64: 2, 1>, scalar_prefetch = 0 : i64, scratch_operands = 5 : i64, tpu.core_type = #tpu.core_type<tc>, window_params = [{transform_indices = @transform_0, window_bounds = array<i64: 1, 8, 32>}, {transform_indices = @transform_1, window_bounds = array<i64: 1, 1, 8>}, {pipeline_mode = #tpu.pipeline_mode<synchronous>, transform_indices = @transform_2, window_bounds = array<i64: 1, 32>}, {pipeline_mode = #tpu.pipeline_mode<synchronous>, transform_indices = @transform_3, window_bounds = array<i64: 1, 32>}, {pipeline_mode = #tpu.pipeline_mode<synchronous>, transform_indices = @transform_4, window_bounds = array<i64: 32, 32>}, {pipeline_mode = #tpu.pipeline_mode<synchronous>, transform_indices = @transform_5, window_bounds = array<i64: 1, 32>}, {pipeline_mode = #tpu.pipeline_mode<synchronous>, transform_indices = @transform_6, window_bounds = array<i64: 32, 32>}, {pipeline_mode = #tpu.pipeline_mode<synchronous>, transform_indices = @transform_7, window_bounds = array<i64: 1, 32>}, {pipeline_mode = #tpu.pipeline_mode<synchronous>, transform_indices = @transform_8, window_bounds = array<i64: 32, 32>}, {pipeline_mode = #tpu.pipeline_mode<synchronous>, transform_indices = @transform_9, window_bounds = array<i64: 1, 32>}, {pipeline_mode = #tpu.pipeline_mode<synchronous>, transform_indices = @transform_10, window_bounds = array<i64: 32, 32>}, {pipeline_mode = #tpu.pipeline_mode<synchronous>, transform_indices = @transform_11, window_bounds = array<i64: 1, 32>}, {transform_indices = @transform_12, window_bounds = array<i64: 1, 8, 32>}]} {
    %c8_i32 = arith.constant 8 : i32
    %0 = arith.muli %arg1, %c8_i32 : i32
    %1 = tpu.assume_multiple %0, 8 : i32
    %c0 = arith.constant 0 : index
    %c0_0 = arith.constant 0 : index
    %c0_1 = arith.constant 0 : index
    %2 = vector.load %arg2[%c0, %c0_0, %c0_1] : memref<1x8x32xf32, #tpu.memory_space<vmem>>, vector<1x8x32xf32>
    %3 = vector.shape_cast %2 : vector<1x8x32xf32> to vector<8x32xf32>
    %cst = arith.constant dense<0.000000e+00> : vector<8xf32>
    %4 = vector.multi_reduction <add>, %3, %cst [1] : vector<8x32xf32> to vector<8xf32>
    %5 = vector.shape_cast %4 : vector<8xf32> to vector<8x1xf32>
    %cst_2 = arith.constant 3.200000e+01 : f32
    %6 = vector.broadcast %cst_2 : f32 to vector<8x1xf32>
    %7 = arith.divf %5, %6 : vector<8x1xf32>
    %8 = vector.broadcast %7 : vector<8x1xf32> to vector<8x32xf32>
    %9 = arith.subf %3, %8 : vector<8x32xf32>
    %10 = arith.mulf %9, %9 : vector<8x32xf32>
    %cst_3 = arith.constant dense<0.000000e+00> : vector<8xf32>
    %11 = vector.multi_reduction <add>, %10, %cst_3 [1] : vector<8x32xf32> to vector<8xf32>
    %12 = vector.shape_cast %11 : vector<8xf32> to vector<8x1xf32>
    %cst_4 = arith.constant 0.0322580636 : f32
    %13 = vector.broadcast %cst_4 : f32 to vector<8x1xf32>
    %14 = arith.mulf %12, %13 : vector<8x1xf32>
    %15 = math.sqrt %14 : vector<8x1xf32>
    %cst_5 = arith.constant 9.99999997E-7 : f32
    %16 = vector.broadcast %cst_5 : f32 to vector<8x1xf32>
    %17 = arith.addf %15, %16 : vector<8x1xf32>
    %cst_6 = arith.constant 1.000000e+00 : f32
    %18 = vector.broadcast %cst_6 : f32 to vector<8x1xf32>
    %19 = arith.divf %18, %17 : vector<8x1xf32>
    %c0_7 = arith.constant 0 : index
    %c0_8 = arith.constant 0 : index
    %20 = vector.load %arg4[%c0_7, %c0_8] : memref<1x32xf32, #tpu.memory_space<vmem>>, vector<1x32xf32>
    %21 = vector.broadcast %7 : vector<8x1xf32> to vector<8x32xf32>
    %22 = arith.subf %3, %21 : vector<8x32xf32>
    %23 = vector.broadcast %20 : vector<1x32xf32> to vector<8x32xf32>
    %24 = arith.mulf %23, %22 : vector<8x32xf32>
    %25 = vector.broadcast %19 : vector<8x1xf32> to vector<8x32xf32>
    %26 = arith.mulf %24, %25 : vector<8x32xf32>
    %c0_9 = arith.constant 0 : index
    %c0_10 = arith.constant 0 : index
    %27 = vector.load %arg5[%c0_9, %c0_10] : memref<1x32xf32, #tpu.memory_space<vmem>>, vector<1x32xf32>
    %28 = vector.broadcast %27 : vector<1x32xf32> to vector<8x32xf32>
    %29 = arith.addf %26, %28 : vector<8x32xf32>
    %30 = arith.truncf %29 : vector<8x32xf32> to vector<8x32xbf16>
    %c0_11 = arith.constant 0 : index
    %c0_12 = arith.constant 0 : index
    %31 = vector.load %arg15[%c0_11, %c0_12] : memref<8x32xbf16, #tpu.memory_space<vmem>>, vector<8x32xbf16>
    tpu.vector_store %arg15[%c0_11, %c0_12], %30 {strides = array<i32>} : memref<8x32xbf16, #tpu.memory_space<vmem>>, vector<8x32xbf16>,
    %c0_13 = arith.constant 0 : index
    %c0_14 = arith.constant 0 : index
    %32 = vector.load %arg8[%c0_13, %c0_14] : memref<32x32xbf16, #tpu.memory_space<vmem>>, vector<32x32xbf16>
    %cst_15 = arith.constant dense<0.000000e+00> : vector<8x32xf32>
    %33 = tpu.matmul %30, %32, %cst_15 {dimension_numbers = #tpu.dot_dimension_numbers<[1], [0], [0], [1], [0, 0, 1, 1], [], []>} : vector<8x32xbf16>, vector<32x32xbf16>, vector<8x32xf32> -> vector<8x32xf32>
    %c0_16 = arith.constant 0 : index
    %c0_17 = arith.constant 0 : index
    %34 = vector.load %arg9[%c0_16, %c0_17] : memref<1x32xf32, #tpu.memory_space<vmem>>, vector<1x32xf32>
    %35 = vector.broadcast %34 : vector<1x32xf32> to vector<8x32xf32>
    %36 = arith.addf %33, %35 : vector<8x32xf32>
    %37 = arith.truncf %36 : vector<8x32xf32> to vector<8x32xbf16>
    %c0_18 = arith.constant 0 : index
    %c0_19 = arith.constant 0 : index
    %38 = vector.load %arg17[%c0_18, %c0_19] : memref<8x32xbf16, #tpu.memory_space<vmem>>, vector<8x32xbf16>
    tpu.vector_store %arg17[%c0_18, %c0_19], %37 {strides = array<i32>} : memref<8x32xbf16, #tpu.memory_space<vmem>>, vector<8x32xbf16>,
    %c0_20 = arith.constant 0 : index
    %c0_21 = arith.constant 0 : index
    %39 = vector.load %arg10[%c0_20, %c0_21] : memref<32x32xbf16, #tpu.memory_space<vmem>>, vector<32x32xbf16>
    %cst_22 = arith.constant dense<0.000000e+00> : vector<8x32xf32>
    %40 = tpu.matmul %30, %39, %cst_22 {dimension_numbers = #tpu.dot_dimension_numbers<[1], [0], [0], [1], [0, 0, 1, 1], [], []>} : vector<8x32xbf16>, vector<32x32xbf16>, vector<8x32xf32> -> vector<8x32xf32>
    %c0_23 = arith.constant 0 : index
    %c0_24 = arith.constant 0 : index
    %41 = vector.load %arg11[%c0_23, %c0_24] : memref<1x32xf32, #tpu.memory_space<vmem>>, vector<1x32xf32>
    %42 = vector.broadcast %41 : vector<1x32xf32> to vector<8x32xf32>
    %43 = arith.addf %40, %42 : vector<8x32xf32>
    %44 = arith.truncf %43 : vector<8x32xf32> to vector<8x32xbf16>
    %c0_25 = arith.constant 0 : index
    %c0_26 = arith.constant 0 : index
    %45 = vector.load %arg18[%c0_25, %c0_26] : memref<8x32xbf16, #tpu.memory_space<vmem>>, vector<8x32xbf16>
    tpu.vector_store %arg18[%c0_25, %c0_26], %44 {strides = array<i32>} : memref<8x32xbf16, #tpu.memory_space<vmem>>, vector<8x32xbf16>,
    %46 = arith.index_cast %1 : i32 to index
    %c0_27 = arith.constant 0 : index
    %47 = vector.load %arg15[%46, %c0_27] : memref<8x32xbf16, #tpu.memory_space<vmem>>, vector<8x32xbf16>
    %c0_28 = arith.constant 0 : index
    %c0_29 = arith.constant 0 : index
    %48 = vector.load %arg6[%c0_28, %c0_29] : memref<32x32xbf16, #tpu.memory_space<vmem>>, vector<32x32xbf16>
    %cst_30 = arith.constant dense<0.000000e+00> : vector<8x32xf32>
    %49 = tpu.matmul %47, %48, %cst_30 {dimension_numbers = #tpu.dot_dimension_numbers<[1], [0], [0], [1], [0, 0, 1, 1], [], []>} : vector<8x32xbf16>, vector<32x32xbf16>, vector<8x32xf32> -> vector<8x32xf32>
    %c0_31 = arith.constant 0 : index
    %c0_32 = arith.constant 0 : index
    %50 = vector.load %arg7[%c0_31, %c0_32] : memref<1x32xf32, #tpu.memory_space<vmem>>, vector<1x32xf32>
    %51 = vector.broadcast %50 : vector<1x32xf32> to vector<8x32xf32>
    %52 = arith.addf %49, %51 : vector<8x32xf32>
    %53 = arith.truncf %52 : vector<8x32xf32> to vector<8x32xbf16>
    %c0_33 = arith.constant 0 : index
    %c0_34 = arith.constant 0 : index
    %54 = vector.load %arg16[%c0_33, %c0_34] : memref<8x32xbf16, #tpu.memory_space<vmem>>, vector<8x32xbf16>
    tpu.vector_store %arg16[%c0_33, %c0_34], %53 {strides = array<i32>} : memref<8x32xbf16, #tpu.memory_space<vmem>>, vector<8x32xbf16>,
    %c0_35 = arith.constant 0 : index
    %c0_36 = arith.constant 0 : index
    %c0_37 = arith.constant 0 : index
    %55 = vector.load %arg3[%c0_35, %c0_36, %c0_37] : memref<1x1x8xf32, #tpu.memory_space<vmem>>, vector<1x1x8xf32>
    %56 = vector.shape_cast %55 : vector<1x1x8xf32> to vector<1x8xf32>
    %cst_38 = arith.constant 0.000000e+00 : f32
    %57 = vector.broadcast %cst_38 : f32 to vector<1x8xf32>
    %58 = arith.cmpf oeq, %56, %57 : vector<1x8xf32>
    %cst_39 = arith.constant -1.000000e+09 : f32
    %cst_40 = arith.constant 0.000000e+00 : f32
    %59 = vector.broadcast %cst_39 : f32 to vector<1x8xf32>
    %60 = vector.broadcast %cst_40 : f32 to vector<1x8xf32>
    %61 = arith.select %58, %59, %60 : vector<1x8xi1>, vector<1x8xf32>
    %c0_41 = arith.constant 0 : index
    %c0_42 = arith.constant 0 : index
    %62 = vector.load %arg16[%c0_41, %c0_42] : memref<8x32xbf16, #tpu.memory_space<vmem>>, vector<8x8xbf16>
    %c0_43 = arith.constant 0 : index
    %c0_44 = arith.constant 0 : index
    %63 = vector.load %arg17[%c0_43, %c0_44] : memref<8x32xbf16, #tpu.memory_space<vmem>>, vector<8x8xbf16>
    %c0_45 = arith.constant 0 : index
    %c0_46 = arith.constant 0 : index
    %64 = vector.load %arg18[%c0_45, %c0_46] : memref<8x32xbf16, #tpu.memory_space<vmem>>, vector<8x8xbf16>
    %cst_47 = arith.constant dense<0.000000e+00> : vector<8x8xf32>
    %65 = tpu.matmul %62, %63, %cst_47 {dimension_numbers = #tpu.dot_dimension_numbers<[1], [1], [0], [0], [0, 0, 1, 0], [], []>} : vector<8x8xbf16>, vector<8x8xbf16>, vector<8x8xf32> -> vector<8x8xf32>
    %cst_48 = arith.constant 0.353553385 : f32
    %66 = vector.broadcast %cst_48 : f32 to vector<8x8xf32>
    %67 = arith.mulf %65, %66 : vector<8x8xf32>
    %68 = vector.broadcast %61 : vector<1x8xf32> to vector<8x8xf32>
    %69 = arith.addf %67, %68 : vector<8x8xf32>
    %cst_49 = arith.constant dense<0xFF800000> : vector<8xf32>
    %70 = vector.multi_reduction <maximumf>, %69, %cst_49 [1] : vector<8x8xf32> to vector<8xf32>
    %71 = vector.shape_cast %70 : vector<8xf32> to vector<8x1xf32>
    %72 = vector.broadcast %71 : vector<8x1xf32> to vector<8x8xf32>
    %73 = arith.subf %69, %72 : vector<8x8xf32>
    %74 = math.exp %73 : vector<8x8xf32>
    %cst_50 = arith.constant dense<0.000000e+00> : vector<8xf32>
    %75 = vector.multi_reduction <add>, %74, %cst_50 [1] : vector<8x8xf32> to vector<8xf32>
    %76 = vector.shape_cast %75 : vector<8xf32> to vector<8x1xf32>
    %77 = tpu.reciprocal %76 {approx = true} : vector<8x1xf32> -> vector<8x1xf32>
    %78 = vector.broadcast %77 : vector<8x1xf32> to vector<8x8xf32>
    %79 = arith.mulf %74, %78 : vector<8x8xf32>
    %80 = arith.truncf %79 : vector<8x8xf32> to vector<8x8xbf16>
    %cst_51 = arith.constant dense<0.000000e+00> : vector<8x8xf32>
    %81 = tpu.matmul %80, %64, %cst_51 {dimension_numbers = #tpu.dot_dimension_numbers<[1], [0], [0], [1], [0, 0, 1, 1], [], []>} : vector<8x8xbf16>, vector<8x8xbf16>, vector<8x8xf32> -> vector<8x8xf32>
    %c0_52 = arith.constant 0 : index
    %c0_53 = arith.constant 0 : index
    %82 = vector.load %arg19[%c0_52, %c0_53] : memref<8x32xf32, #tpu.memory_space<vmem>>, vector<8x8xf32>
    tpu.vector_store %arg19[%c0_52, %c0_53], %81 {strides = array<i32>} : memref<8x32xf32, #tpu.memory_space<vmem>>, vector<8x8xf32>,
    %c0_54 = arith.constant 0 : index
    %c8 = arith.constant 8 : index
    %83 = vector.load %arg16[%c0_54, %c8] : memref<8x32xbf16, #tpu.memory_space<vmem>>, vector<8x8xbf16>
    %c0_55 = arith.constant 0 : index
    %c8_56 = arith.constant 8 : index
    %84 = vector.load %arg17[%c0_55, %c8_56] : memref<8x32xbf16, #tpu.memory_space<vmem>>, vector<8x8xbf16>
    %c0_57 = arith.constant 0 : index
    %c8_58 = arith.constant 8 : index
    %85 = vector.load %arg18[%c0_57, %c8_58] : memref<8x32xbf16, #tpu.memory_space<vmem>>, vector<8x8xbf16>
    %cst_59 = arith.constant dense<0.000000e+00> : vector<8x8xf32>
    %86 = tpu.matmul %83, %84, %cst_59 {dimension_numbers = #tpu.dot_dimension_numbers<[1], [1], [0], [0], [0, 0, 1, 0], [], []>} : vector<8x8xbf16>, vector<8x8xbf16>, vector<8x8xf32> -> vector<8x8xf32>
    %cst_60 = arith.constant 0.353553385 : f32
    %87 = vector.broadcast %cst_60 : f32 to vector<8x8xf32>
    %88 = arith.mulf %86, %87 : vector<8x8xf32>
    %89 = vector.broadcast %61 : vector<1x8xf32> to vector<8x8xf32>
    %90 = arith.addf %88, %89 : vector<8x8xf32>
    %cst_61 = arith.constant dense<0xFF800000> : vector<8xf32>
    %91 = vector.multi_reduction <maximumf>, %90, %cst_61 [1] : vector<8x8xf32> to vector<8xf32>
    %92 = vector.shape_cast %91 : vector<8xf32> to vector<8x1xf32>
    %93 = vector.broadcast %92 : vector<8x1xf32> to vector<8x8xf32>
    %94 = arith.subf %90, %93 : vector<8x8xf32>
    %95 = math.exp %94 : vector<8x8xf32>
    %cst_62 = arith.constant dense<0.000000e+00> : vector<8xf32>
    %96 = vector.multi_reduction <add>, %95, %cst_62 [1] : vector<8x8xf32> to vector<8xf32>
    %97 = vector.shape_cast %96 : vector<8xf32> to vector<8x1xf32>
    %98 = tpu.reciprocal %97 {approx = true} : vector<8x1xf32> -> vector<8x1xf32>
    %99 = vector.broadcast %98 : vector<8x1xf32> to vector<8x8xf32>
    %100 = arith.mulf %95, %99 : vector<8x8xf32>
    %101 = arith.truncf %100 : vector<8x8xf32> to vector<8x8xbf16>
    %cst_63 = arith.constant dense<0.000000e+00> : vector<8x8xf32>
    %102 = tpu.matmul %101, %85, %cst_63 {dimension_numbers = #tpu.dot_dimension_numbers<[1], [0], [0], [1], [0, 0, 1, 1], [], []>} : vector<8x8xbf16>, vector<8x8xbf16>, vector<8x8xf32> -> vector<8x8xf32>
    %c0_64 = arith.constant 0 : index
    %c8_65 = arith.constant 8 : index
    %103 = vector.load %arg19[%c0_64, %c8_65] : memref<8x32xf32, #tpu.memory_space<vmem>>, vector<8x8xf32>
    tpu.vector_store %arg19[%c0_64, %c8_65], %102 {strides = array<i32>} : memref<8x32xf32, #tpu.memory_space<vmem>>, vector<8x8xf32>,
    %c0_66 = arith.constant 0 : index
    %c16 = arith.constant 16 : index
    %104 = vector.load %arg16[%c0_66, %c16] : memref<8x32xbf16, #tpu.memory_space<vmem>>, vector<8x8xbf16>
    %c0_67 = arith.constant 0 : index
    %c16_68 = arith.constant 16 : index
    %105 = vector.load %arg17[%c0_67, %c16_68] : memref<8x32xbf16, #tpu.memory_space<vmem>>, vector<8x8xbf16>
    %c0_69 = arith.constant 0 : index
    %c16_70 = arith.constant 16 : index
    %106 = vector.load %arg18[%c0_69, %c16_70] : memref<8x32xbf16, #tpu.memory_space<vmem>>, vector<8x8xbf16>
    %cst_71 = arith.constant dense<0.000000e+00> : vector<8x8xf32>
    %107 = tpu.matmul %104, %105, %cst_71 {dimension_numbers = #tpu.dot_dimension_numbers<[1], [1], [0], [0], [0, 0, 1, 0], [], []>} : vector<8x8xbf16>, vector<8x8xbf16>, vector<8x8xf32> -> vector<8x8xf32>
    %cst_72 = arith.constant 0.353553385 : f32
    %108 = vector.broadcast %cst_72 : f32 to vector<8x8xf32>
    %109 = arith.mulf %107, %108 : vector<8x8xf32>
    %110 = vector.broadcast %61 : vector<1x8xf32> to vector<8x8xf32>
    %111 = arith.addf %109, %110 : vector<8x8xf32>
    %cst_73 = arith.constant dense<0xFF800000> : vector<8xf32>
    %112 = vector.multi_reduction <maximumf>, %111, %cst_73 [1] : vector<8x8xf32> to vector<8xf32>
    %113 = vector.shape_cast %112 : vector<8xf32> to vector<8x1xf32>
    %114 = vector.broadcast %113 : vector<8x1xf32> to vector<8x8xf32>
    %115 = arith.subf %111, %114 : vector<8x8xf32>
    %116 = math.exp %115 : vector<8x8xf32>
    %cst_74 = arith.constant dense<0.000000e+00> : vector<8xf32>
    %117 = vector.multi_reduction <add>, %116, %cst_74 [1] : vector<8x8xf32> to vector<8xf32>
    %118 = vector.shape_cast %117 : vector<8xf32> to vector<8x1xf32>
    %119 = tpu.reciprocal %118 {approx = true} : vector<8x1xf32> -> vector<8x1xf32>
    %120 = vector.broadcast %119 : vector<8x1xf32> to vector<8x8xf32>
    %121 = arith.mulf %116, %120 : vector<8x8xf32>
    %122 = arith.truncf %121 : vector<8x8xf32> to vector<8x8xbf16>
    %cst_75 = arith.constant dense<0.000000e+00> : vector<8x8xf32>
    %123 = tpu.matmul %122, %106, %cst_75 {dimension_numbers = #tpu.dot_dimension_numbers<[1], [0], [0], [1], [0, 0, 1, 1], [], []>} : vector<8x8xbf16>, vector<8x8xbf16>, vector<8x8xf32> -> vector<8x8xf32>
    %c0_76 = arith.constant 0 : index
    %c16_77 = arith.constant 16 : index
    %124 = vector.load %arg19[%c0_76, %c16_77] : memref<8x32xf32, #tpu.memory_space<vmem>>, vector<8x8xf32>
    tpu.vector_store %arg19[%c0_76, %c16_77], %123 {strides = array<i32>} : memref<8x32xf32, #tpu.memory_space<vmem>>, vector<8x8xf32>,
    %c0_78 = arith.constant 0 : index
    %c24 = arith.constant 24 : index
    %125 = vector.load %arg16[%c0_78, %c24] : memref<8x32xbf16, #tpu.memory_space<vmem>>, vector<8x8xbf16>
    %c0_79 = arith.constant 0 : index
    %c24_80 = arith.constant 24 : index
    %126 = vector.load %arg17[%c0_79, %c24_80] : memref<8x32xbf16, #tpu.memory_space<vmem>>, vector<8x8xbf16>
    %c0_81 = arith.constant 0 : index
    %c24_82 = arith.constant 24 : index
    %127 = vector.load %arg18[%c0_81, %c24_82] : memref<8x32xbf16, #tpu.memory_space<vmem>>, vector<8x8xbf16>
    %cst_83 = arith.constant dense<0.000000e+00> : vector<8x8xf32>
    %128 = tpu.matmul %125, %126, %cst_83 {dimension_numbers = #tpu.dot_dimension_numbers<[1], [1], [0], [0], [0, 0, 1, 0], [], []>} : vector<8x8xbf16>, vector<8x8xbf16>, vector<8x8xf32> -> vector<8x8xf32>
    %cst_84 = arith.constant 0.353553385 : f32
    %129 = vector.broadcast %cst_84 : f32 to vector<8x8xf32>
    %130 = arith.mulf %128, %129 : vector<8x8xf32>
    %131 = vector.broadcast %61 : vector<1x8xf32> to vector<8x8xf32>
    %132 = arith.addf %130, %131 : vector<8x8xf32>
    %cst_85 = arith.constant dense<0xFF800000> : vector<8xf32>
    %133 = vector.multi_reduction <maximumf>, %132, %cst_85 [1] : vector<8x8xf32> to vector<8xf32>
    %134 = vector.shape_cast %133 : vector<8xf32> to vector<8x1xf32>
    %135 = vector.broadcast %134 : vector<8x1xf32> to vector<8x8xf32>
    %136 = arith.subf %132, %135 : vector<8x8xf32>
    %137 = math.exp %136 : vector<8x8xf32>
    %cst_86 = arith.constant dense<0.000000e+00> : vector<8xf32>
    %138 = vector.multi_reduction <add>, %137, %cst_86 [1] : vector<8x8xf32> to vector<8xf32>
    %139 = vector.shape_cast %138 : vector<8xf32> to vector<8x1xf32>
    %140 = tpu.reciprocal %139 {approx = true} : vector<8x1xf32> -> vector<8x1xf32>
    %141 = vector.broadcast %140 : vector<8x1xf32> to vector<8x8xf32>
    %142 = arith.mulf %137, %141 : vector<8x8xf32>
    %143 = arith.truncf %142 : vector<8x8xf32> to vector<8x8xbf16>
    %cst_87 = arith.constant dense<0.000000e+00> : vector<8x8xf32>
    %144 = tpu.matmul %143, %127, %cst_87 {dimension_numbers = #tpu.dot_dimension_numbers<[1], [0], [0], [1], [0, 0, 1, 1], [], []>} : vector<8x8xbf16>, vector<8x8xbf16>, vector<8x8xf32> -> vector<8x8xf32>
    %c0_88 = arith.constant 0 : index
    %c24_89 = arith.constant 24 : index
    %145 = vector.load %arg19[%c0_88, %c24_89] : memref<8x32xf32, #tpu.memory_space<vmem>>, vector<8x8xf32>
    tpu.vector_store %arg19[%c0_88, %c24_89], %144 {strides = array<i32>} : memref<8x32xf32, #tpu.memory_space<vmem>>, vector<8x8xf32>,
    %c0_90 = arith.constant 0 : index
    %c0_91 = arith.constant 0 : index
    %146 = vector.load %arg19[%c0_90, %c0_91] : memref<8x32xf32, #tpu.memory_space<vmem>>, vector<8x32xf32>
    %147 = arith.truncf %146 : vector<8x32xf32> to vector<8x32xbf16>
    %c0_92 = arith.constant 0 : index
    %c0_93 = arith.constant 0 : index
    %148 = vector.load %arg12[%c0_92, %c0_93] : memref<32x32xbf16, #tpu.memory_space<vmem>>, vector<32x32xbf16>
    %cst_94 = arith.constant dense<0.000000e+00> : vector<8x32xf32>
    %149 = tpu.matmul %147, %148, %cst_94 {dimension_numbers = #tpu.dot_dimension_numbers<[1], [0], [0], [1], [0, 0, 1, 1], [], []>} : vector<8x32xbf16>, vector<32x32xbf16>, vector<8x32xf32> -> vector<8x32xf32>
    %c0_95 = arith.constant 0 : index
    %c0_96 = arith.constant 0 : index
    %150 = vector.load %arg13[%c0_95, %c0_96] : memref<1x32xf32, #tpu.memory_space<vmem>>, vector<1x32xf32>
    %151 = vector.broadcast %150 : vector<1x32xf32> to vector<8x32xf32>
    %152 = arith.addf %149, %151 : vector<8x32xf32>
    %c0_97 = arith.constant 0 : index
    %153 = arith.index_cast %1 : i32 to index
    %c0_98 = arith.constant 0 : index
    %154 = vector.load %arg2[%c0_97, %153, %c0_98] : memref<1x8x32xf32, #tpu.memory_space<vmem>>, vector<1x8x32xf32>
    %155 = vector.shape_cast %154 : vector<1x8x32xf32> to vector<8x32xf32>
    %156 = arith.addf %155, %152 : vector<8x32xf32>
    %c0_99 = arith.constant 0 : index
    %c0_100 = arith.constant 0 : index
    %c0_101 = arith.constant 0 : index
    %157 = vector.load %arg14[%c0_99, %c0_100, %c0_101] : memref<1x8x32xf32, #tpu.memory_space<vmem>>, vector<1x8x32xf32>
    %158 = vector.shape_cast %157 : vector<1x8x32xf32> to vector<8x32xf32>
    %159 = vector.shape_cast %156 : vector<8x32xf32> to vector<1x8x32xf32>
    tpu.vector_store %arg14[%c0_99, %c0_100, %c0_101], %159 {strides = array<i32>} : memref<1x8x32xf32, #tpu.memory_space<vmem>>, vector<1x8x32xf32>,
    return
  }
  func.func @transform_0(%arg0: i32, %arg1: i32) -> (i32, i32, i32) {
    %c0_i32 = arith.constant 0 : i32
    %c0_i32_0 = arith.constant 0 : i32
    %c0_i32_1 = arith.constant 0 : i32
    return %arg0, %c0_i32, %c0_i32_0 : i32, i32, i32
  }
  func.func @transform_1(%arg0: i32, %arg1: i32) -> (i32, i32, i32) {
    %c0_i32 = arith.constant 0 : i32
    %c0_i32_0 = arith.constant 0 : i32
    %c0_i32_1 = arith.constant 0 : i32
    return %arg0, %c0_i32, %c0_i32_0 : i32, i32, i32
  }
  func.func @transform_2(%arg0: i32, %arg1: i32) -> (i32, i32) {
    %c0_i32 = arith.constant 0 : i32
    %c0_i32_0 = arith.constant 0 : i32
    %c0_i32_1 = arith.constant 0 : i32
    return %c0_i32, %c0_i32_0 : i32, i32
  }
  func.func @transform_3(%arg0: i32, %arg1: i32) -> (i32, i32) {
    %c0_i32 = arith.constant 0 : i32
    %c0_i32_0 = arith.constant 0 : i32
    %c0_i32_1 = arith.constant 0 : i32
    return %c0_i32, %c0_i32_0 : i32, i32
  }
  func.func @transform_4(%arg0: i32, %arg1: i32) -> (i32, i32) {
    %c0_i32 = arith.constant 0 : i32
    %c0_i32_0 = arith.constant 0 : i32
    %c0_i32_1 = arith.constant 0 : i32
    return %c0_i32, %c0_i32_0 : i32, i32
  }
  func.func @transform_5(%arg0: i32, %arg1: i32) -> (i32, i32) {
    %c0_i32 = arith.constant 0 : i32
    %c0_i32_0 = arith.constant 0 : i32
    %c0_i32_1 = arith.constant 0 : i32
    return %c0_i32, %c0_i32_0 : i32, i32
  }
  func.func @transform_6(%arg0: i32, %arg1: i32) -> (i32, i32) {
    %c0_i32 = arith.constant 0 : i32
    %c0_i32_0 = arith.constant 0 : i32
    %c0_i32_1 = arith.constant 0 : i32
    return %c0_i32, %c0_i32_0 : i32, i32
  }
  func.func @transform_7(%arg0: i32, %arg1: i32) -> (i32, i32) {
    %c0_i32 = arith.constant 0 : i32
    %c0_i32_0 = arith.constant 0 : i32
    %c0_i32_1 = arith.constant 0 : i32
    return %c0_i32, %c0_i32_0 : i32, i32
  }
  func.func @transform_8(%arg0: i32, %arg1: i32) -> (i32, i32) {
    %c0_i32 = arith.constant 0 : i32
    %c0_i32_0 = arith.constant 0 : i32
    %c0_i32_1 = arith.constant 0 : i32
    return %c0_i32, %c0_i32_0 : i32, i32
  }
  func.func @transform_9(%arg0: i32, %arg1: i32) -> (i32, i32) {
    %c0_i32 = arith.constant 0 : i32
    %c0_i32_0 = arith.constant 0 : i32
    %c0_i32_1 = arith.constant 0 : i32
    return %c0_i32, %c0_i32_0 : i32, i32
  }
  func.func @transform_10(%arg0: i32, %arg1: i32) -> (i32, i32) {
    %c0_i32 = arith.constant 0 : i32
    %c0_i32_0 = arith.constant 0 : i32
    %c0_i32_1 = arith.constant 0 : i32
    return %c0_i32, %c0_i32_0 : i32, i32
  }
  func.func @transform_11(%arg0: i32, %arg1: i32) -> (i32, i32) {
    %c0_i32 = arith.constant 0 : i32
    %c0_i32_0 = arith.constant 0 : i32
    %c0_i32_1 = arith.constant 0 : i32
    return %c0_i32, %c0_i32_0 : i32, i32
  }
  func.func @transform_12(%arg0: i32, %arg1: i32) -> (i32, i32, i32) {
    %c0_i32 = arith.constant 0 : i32
    %c0_i32_0 = arith.constant 0 : i32
    return %arg0, %arg1, %c0_i32 : i32, i32, i32
  }
}

module attributes {stable_mosaic.version = 11 : i64} {
  func.func @ffn_kernel(%arg0: i32, %arg1: memref<16x32xf32, #tpu.memory_space<vmem>>, %arg2: memref<1x32xf32, #tpu.memory_space<vmem>>, %arg3: memref<1x32xf32, #tpu.memory_space<vmem>>, %arg4: memref<32x64xbf16, #tpu.memory_space<vmem>>, %arg5: memref<1x64xf32, #tpu.memory_space<vmem>>, %arg6: memref<64x32xbf16, #tpu.memory_space<vmem>>, %arg7: memref<1x32xf32, #tpu.memory_space<vmem>>, %arg8: memref<16x32xf32, #tpu.memory_space<vmem>>) attributes {dimension_semantics = [#tpu.dimension_semantics<parallel>], iteration_bounds = array<i64: 1>, scalar_prefetch = 0 : i64, scratch_operands = 0 : i64, tpu.core_type = #tpu.core_type<tc>, window_params = [{transform_indices = @transform_0, window_bounds = array<i64: 16, 32>}, {pipeline_mode = #tpu.pipeline_mode<synchronous>, transform_indices = @transform_1, window_bounds = array<i64: 1, 32>}, {pipeline_mode = #tpu.pipeline_mode<synchronous>, transform_indices = @transform_2, window_bounds = array<i64: 1, 32>}, {pipeline_mode = #tpu.pipeline_mode<synchronous>, transform_indices = @transform_3, window_bounds = array<i64: 32, 64>}, {pipeline_mode = #tpu.pipeline_mode<synchronous>, transform_indices = @transform_4, window_bounds = array<i64: 1, 64>}, {pipeline_mode = #tpu.pipeline_mode<synchronous>, transform_indices = @transform_5, window_bounds = array<i64: 64, 32>}, {pipeline_mode = #tpu.pipeline_mode<synchronous>, transform_indices = @transform_6, window_bounds = array<i64: 1, 32>}, {transform_indices = @transform_7, window_bounds = array<i64: 16, 32>}]} {
    %c0 = arith.constant 0 : index
    %c0_0 = arith.constant 0 : index
    %0 = vector.load %arg1[%c0, %c0_0] : memref<16x32xf32, #tpu.memory_space<vmem>>, vector<16x32xf32>
    %cst = arith.constant dense<0.000000e+00> : vector<16xf32>
    %1 = vector.multi_reduction <add>, %0, %cst [1] : vector<16x32xf32> to vector<16xf32>
    %2 = vector.shape_cast %1 : vector<16xf32> to vector<16x1xf32>
    %cst_1 = arith.constant 3.200000e+01 : f32
    %3 = vector.broadcast %cst_1 : f32 to vector<16x1xf32>
    %4 = arith.divf %2, %3 : vector<16x1xf32>
    %5 = vector.broadcast %4 : vector<16x1xf32> to vector<16x32xf32>
    %6 = arith.subf %0, %5 : vector<16x32xf32>
    %7 = arith.mulf %6, %6 : vector<16x32xf32>
    %cst_2 = arith.constant dense<0.000000e+00> : vector<16xf32>
    %8 = vector.multi_reduction <add>, %7, %cst_2 [1] : vector<16x32xf32> to vector<16xf32>
    %9 = vector.shape_cast %8 : vector<16xf32> to vector<16x1xf32>
    %cst_3 = arith.constant 0.0322580636 : f32
    %10 = vector.broadcast %cst_3 : f32 to vector<16x1xf32>
    %11 = arith.mulf %9, %10 : vector<16x1xf32>
    %12 = math.sqrt %11 : vector<16x1xf32>
    %cst_4 = arith.constant 9.99999997E-7 : f32
    %13 = vector.broadcast %cst_4 : f32 to vector<16x1xf32>
    %14 = arith.addf %12, %13 : vector<16x1xf32>
    %cst_5 = arith.constant 1.000000e+00 : f32
    %15 = vector.broadcast %cst_5 : f32 to vector<16x1xf32>
    %16 = arith.divf %15, %14 : vector<16x1xf32>
    %c0_6 = arith.constant 0 : index
    %c0_7 = arith.constant 0 : index
    %17 = vector.load %arg2[%c0_6, %c0_7] : memref<1x32xf32, #tpu.memory_space<vmem>>, vector<1x32xf32>
    %18 = vector.broadcast %4 : vector<16x1xf32> to vector<16x32xf32>
    %19 = arith.subf %0, %18 : vector<16x32xf32>
    %20 = vector.broadcast %17 : vector<1x32xf32> to vector<16x32xf32>
    %21 = arith.mulf %20, %19 : vector<16x32xf32>
    %22 = vector.broadcast %16 : vector<16x1xf32> to vector<16x32xf32>
    %23 = arith.mulf %21, %22 : vector<16x32xf32>
    %c0_8 = arith.constant 0 : index
    %c0_9 = arith.constant 0 : index
    %24 = vector.load %arg3[%c0_8, %c0_9] : memref<1x32xf32, #tpu.memory_space<vmem>>, vector<1x32xf32>
    %25 = vector.broadcast %24 : vector<1x32xf32> to vector<16x32xf32>
    %26 = arith.addf %23, %25 : vector<16x32xf32>
    %27 = arith.truncf %26 : vector<16x32xf32> to vector<16x32xbf16>
    %c0_10 = arith.constant 0 : index
    %c0_11 = arith.constant 0 : index
    %28 = vector.load %arg4[%c0_10, %c0_11] : memref<32x64xbf16, #tpu.memory_space<vmem>>, vector<32x64xbf16>
    %cst_12 = arith.constant dense<0.000000e+00> : vector<16x64xf32>
    %29 = tpu.matmul %27, %28, %cst_12 {dimension_numbers = #tpu.dot_dimension_numbers<[1], [0], [0], [1], [0, 0, 1, 1], [], []>} : vector<16x32xbf16>, vector<32x64xbf16>, vector<16x64xf32> -> vector<16x64xf32>
    %c0_13 = arith.constant 0 : index
    %c0_14 = arith.constant 0 : index
    %30 = vector.load %arg5[%c0_13, %c0_14] : memref<1x64xf32, #tpu.memory_space<vmem>>, vector<1x64xf32>
    %31 = vector.broadcast %30 : vector<1x64xf32> to vector<16x64xf32>
    %32 = arith.addf %29, %31 : vector<16x64xf32>
    %cst_15 = arith.constant 0.000000e+00 : f32
    %33 = vector.broadcast %cst_15 : f32 to vector<16x64xf32>
    %34 = arith.maximumf %32, %33 : vector<16x64xf32>
    %35 = arith.truncf %34 : vector<16x64xf32> to vector<16x64xbf16>
    %c0_16 = arith.constant 0 : index
    %c0_17 = arith.constant 0 : index
    %36 = vector.load %arg6[%c0_16, %c0_17] : memref<64x32xbf16, #tpu.memory_space<vmem>>, vector<64x32xbf16>
    %cst_18 = arith.constant dense<0.000000e+00> : vector<16x32xf32>
    %37 = tpu.matmul %35, %36, %cst_18 {dimension_numbers = #tpu.dot_dimension_numbers<[1], [0], [0], [1], [0, 0, 1, 1], [], []>} : vector<16x64xbf16>, vector<64x32xbf16>, vector<16x32xf32> -> vector<16x32xf32>
    %c0_19 = arith.constant 0 : index
    %c0_20 = arith.constant 0 : index
    %38 = vector.load %arg7[%c0_19, %c0_20] : memref<1x32xf32, #tpu.memory_space<vmem>>, vector<1x32xf32>
    %39 = vector.broadcast %38 : vector<1x32xf32> to vector<16x32xf32>
    %40 = arith.addf %37, %39 : vector<16x32xf32>
    %41 = arith.addf %0, %40 : vector<16x32xf32>
    %c0_21 = arith.constant 0 : index
    %c0_22 = arith.constant 0 : index
    %42 = vector.load %arg8[%c0_21, %c0_22] : memref<16x32xf32, #tpu.memory_space<vmem>>, vector<16x32xf32>
    tpu.vector_store %arg8[%c0_21, %c0_22], %41 {strides = array<i32>} : memref<16x32xf32, #tpu.memory_space<vmem>>, vector<16x32xf32>,
    return
  }
  func.func @transform_0(%arg0: i32) -> (i32, i32) {
    %c0_i32 = arith.constant 0 : i32
    %c0_i32_0 = arith.constant 0 : i32
    return %arg0, %c0_i32 : i32, i32
  }
  func.func @transform_1(%arg0: i32) -> (i32, i32) {
    %c0_i32 = arith.constant 0 : i32
    %c0_i32_0 = arith.constant 0 : i32
    %c0_i32_1 = arith.constant 0 : i32
    return %c0_i32, %c0_i32_0 : i32, i32
  }
  func.func @transform_2(%arg0: i32) -> (i32, i32) {
    %c0_i32 = arith.constant 0 : i32
    %c0_i32_0 = arith.constant 0 : i32
    %c0_i32_1 = arith.constant 0 : i32
    return %c0_i32, %c0_i32_0 : i32, i32
  }
  func.func @transform_3(%arg0: i32) -> (i32, i32) {
    %c0_i32 = arith.constant 0 : i32
    %c0_i32_0 = arith.constant 0 : i32
    %c0_i32_1 = arith.constant 0 : i32
    return %c0_i32, %c0_i32_0 : i32, i32
  }
  func.func @transform_4(%arg0: i32) -> (i32, i32) {
    %c0_i32 = arith.constant 0 : i32
    %c0_i32_0 = arith.constant 0 : i32
    %c0_i32_1 = arith.constant 0 : i32
    return %c0_i32, %c0_i32_0 : i32, i32
  }
  func.func @transform_5(%arg0: i32) -> (i32, i32) {
    %c0_i32 = arith.constant 0 : i32
    %c0_i32_0 = arith.constant 0 : i32
    %c0_i32_1 = arith.constant 0 : i32
    return %c0_i32, %c0_i32_0 : i32, i32
  }
  func.func @transform_6(%arg0: i32) -> (i32, i32) {
    %c0_i32 = arith.constant 0 : i32
    %c0_i32_0 = arith.constant 0 : i32
    %c0_i32_1 = arith.constant 0 : i32
    return %c0_i32, %c0_i32_0 : i32, i32
  }
  func.func @transform_7(%arg0: i32) -> (i32, i32) {
    %c0_i32 = arith.constant 0 : i32
    %c0_i32_0 = arith.constant 0 : i32
    return %arg0, %c0_i32 : i32, i32
  }
}

module attributes {stable_mosaic.version = 11 : i64} {
  func.func @mha_kernel(%arg0: i32, %arg1: i32, %arg2: memref<1x8x32xf32, #tpu.memory_space<vmem>>, %arg3: memref<1x1x8xf32, #tpu.memory_space<vmem>>, %arg4: memref<1x32xf32, #tpu.memory_space<vmem>>, %arg5: memref<1x32xf32, #tpu.memory_space<vmem>>, %arg6: memref<32x32xbf16, #tpu.memory_space<vmem>>, %arg7: memref<1x32xf32, #tpu.memory_space<vmem>>, %arg8: memref<32x32xbf16, #tpu.memory_space<vmem>>, %arg9: memref<1x32xf32, #tpu.memory_space<vmem>>, %arg10: memref<32x32xbf16, #tpu.memory_space<vmem>>, %arg11: memref<1x32xf32, #tpu.memory_space<vmem>>, %arg12: memref<32x32xbf16, #tpu.memory_space<vmem>>, %arg13: memref<1x32xf32, #tpu.memory_space<vmem>>, %arg14: memref<1x8x32xf32, #tpu.memory_space<vmem>>, %arg15: memref<8x32xbf16, #tpu.memory_space<vmem>>, %arg16: memref<8x32xbf16, #tpu.memory_space<vmem>>, %arg17: memref<8x32xbf16, #tpu.memory_space<vmem>>, %arg18: memref<8x32xbf16, #tpu.memory_space<vmem>>, %arg19: memref<8x32xf32, #tpu.memory_space<vmem>>) attributes {dimension_semantics = [#tpu.dimension_semantics<parallel>, #tpu.dimension_semantics<parallel>], iteration_bounds = array<i64: 2, 1>, scalar_prefetch = 0 : i64, scratch_operands = 5 : i64, tpu.core_type = #tpu.core_type<tc>, window_params = [{transform_indices = @transform_0, window_bounds = array<i64: 1, 8, 32>}, {transform_indices = @transform_1, window_bounds = array<i64: 1, 1, 8>}, {pipeline_mode = #tpu.pipeline_mode<synchronous>, transform_indices = @transform_2, window_bounds = array<i64: 1, 32>}, {pipeline_mode = #tpu.pipeline_mode<synchronous>, transform_indices = @transform_3, window_bounds = array<i64: 1, 32>}, {pipeline_mode = #tpu.pipeline_mode<synchronous>, transform_indices = @transform_4, window_bounds = array<i64: 32, 32>}, {pipeline_mode = #tpu.pipeline_mode<synchronous>, transform_indices = @transform_5, window_bounds = array<i64: 1, 32>}, {pipeline_mode = #tpu.pipeline_mode<synchronous>, transform_indices = @transform_6, window_bounds = array<i64: 32, 32>}, {pipeline_mode = #tpu.pipeline_mode<synchronous>, transform_indices = @transform_7, window_bounds = array<i64: 1, 32>}, {pipeline_mode = #tpu.pipeline_mode<synchronous>, transform_indices = @transform_8, window_bounds = array<i64: 32, 32>}, {pipeline_mode = #tpu.pipeline_mode<synchronous>, transform_indices = @transform_9, window_bounds = array<i64: 1, 32>}, {pipeline_mode = #tpu.pipeline_mode<synchronous>, transform_indices = @transform_10, window_bounds = array<i64: 32, 32>}, {pipeline_mode = #tpu.pipeline_mode<synchronous>, transform_indices = @transform_11, window_bounds = array<i64: 1, 32>}, {transform_indices = @transform_12, window_bounds = array<i64: 1, 8, 32>}]} {
    %c8_i32 = arith.constant 8 : i32
    %0 = arith.muli %arg1, %c8_i32 : i32
    %1 = tpu.assume_multiple %0, 8 : i32
    %c0 = arith.constant 0 : index
    %c0_0 = arith.constant 0 : index
    %c0_1 = arith.constant 0 : index
    %2 = vector.load %arg2[%c0, %c0_0, %c0_1] : memref<1x8x32xf32, #tpu.memory_space<vmem>>, vector<1x8x32xf32>
    %3 = vector.shape_cast %2 : vector<1x8x32xf32> to vector<8x32xf32>
    %cst = arith.constant dense<0.000000e+00> : vector<8xf32>
    %4 = vector.multi_reduction <add>, %3, %cst [1] : vector<8x32xf32> to vector<8xf32>
    %5 = vector.shape_cast %4 : vector<8xf32> to vector<8x1xf32>
    %cst_2 = arith.constant 3.200000e+01 : f32
    %6 = vector.broadcast %cst_2 : f32 to vector<8x1xf32>
    %7 = arith.divf %5, %6 : vector<8x1xf32>
    %8 = vector.broadcast %7 : vector<8x1xf32> to vector<8x32xf32>
    %9 = arith.subf %3, %8 : vector<8x32xf32>
    %10 = arith.mulf %9, %9 : vector<8x32xf32>
    %cst_3 = arith.constant dense<0.000000e+00> : vector<8xf32>
    %11 = vector.multi_reduction <add>, %10, %cst_3 [1] : vector<8x32xf32> to vector<8xf32>
    %12 = vector.shape_cast %11 : vector<8xf32> to vector<8x1xf32>
    %cst_4 = arith.constant 0.0322580636 : f32
    %13 = vector.broadcast %cst_4 : f32 to vector<8x1xf32>
    %14 = arith.mulf %12, %13 : vector<8x1xf32>
    %15 = math.sqrt %14 : vector<8x1xf32>
    %cst_5 = arith.constant 9.99999997E-7 : f32
    %16 = vector.broadcast %cst_5 : f32 to vector<8x1xf32>
    %17 = arith.addf %15, %16 : vector<8x1xf32>
    %cst_6 = arith.constant 1.000000e+00 : f32
    %18 = vector.broadcast %cst_6 : f32 to vector<8x1xf32>
    %19 = arith.divf %18, %17 : vector<8x1xf32>
    %c0_7 = arith.constant 0 : index
    %c0_8 = arith.constant 0 : index
    %20 = vector.load %arg4[%c0_7, %c0_8] : memref<1x32xf32, #tpu.memory_space<vmem>>, vector<1x32xf32>
    %21 = vector.broadcast %7 : vector<8x1xf32> to vector<8x32xf32>
    %22 = arith.subf %3, %21 : vector<8x32xf32>
    %23 = vector.broadcast %20 : vector<1x32xf32> to vector<8x32xf32>
    %24 = arith.mulf %23, %22 : vector<8x32xf32>
    %25 = vector.broadcast %19 : vector<8x1xf32> to vector<8x32xf32>
    %26 = arith.mulf %24, %25 : vector<8x32xf32>
    %c0_9 = arith.constant 0 : index
    %c0_10 = arith.constant 0 : index
    %27 = vector.load %arg5[%c0_9, %c0_10] : memref<1x32xf32, #tpu.memory_space<vmem>>, vector<1x32xf32>
    %28 = vector.broadcast %27 : vector<1x32xf32> to vector<8x32xf32>
    %29 = arith.addf %26, %28 : vector<8x32xf32>
    %30 = arith.truncf %29 : vector<8x32xf32> to vector<8x32xbf16>
    %c0_11 = arith.constant 0 : index
    %c0_12 = arith.constant 0 : index
    %31 = vector.load %arg15[%c0_11, %c0_12] : memref<8x32xbf16, #tpu.memory_space<vmem>>, vector<8x32xbf16>
    tpu.vector_store %arg15[%c0_11, %c0_12], %30 {strides = array<i32>} : memref<8x32xbf16, #tpu.memory_space<vmem>>, vector<8x32xbf16>,
    %c0_13 = arith.constant 0 : index
    %c0_14 = arith.constant 0 : index
    %32 = vector.load %arg8[%c0_13, %c0_14] : memref<32x32xbf16, #tpu.memory_space<vmem>>, vector<32x32xbf16>
    %cst_15 = arith.constant dense<0.000000e+00> : vector<8x32xf32>
    %33 = tpu.matmul %30, %32, %cst_15 {dimension_numbers = #tpu.dot_dimension_numbers<[1], [0], [0], [1], [0, 0, 1, 1], [], []>} : vector<8x32xbf16>, vector<32x32xbf16>, vector<8x32xf32> -> vector<8x32xf32>
    %c0_16 = arith.constant 0 : index
    %c0_17 = arith.constant 0 : index
    %34 = vector.load %arg9[%c0_16, %c0_17] : memref<1x32xf32, #tpu.memory_space<vmem>>, vector<1x32xf32>
    %35 = vector.broadcast %34 : vector<1x32xf32> to vector<8x32xf32>
    %36 = arith.addf %33, %35 : vector<8x32xf32>
    %37 = arith.truncf %36 : vector<8x32xf32> to vector<8x32xbf16>
    %c0_18 = arith.constant 0 : index
    %c0_19 = arith.constant 0 : index
    %38 = vector.load %arg17[%c0_18, %c0_19] : memref<8x32xbf16, #tpu.memory_space<vmem>>, vector<8x32xbf16>
    tpu.vector_store %arg17[%c0_18, %c0_19], %37 {strides = array<i32>} : memref<8x32xbf16, #tpu.memory_space<vmem>>, vector<8x32xbf16>,
    %c0_20 = arith.constant 0 : index
    %c0_21 = arith.constant 0 : index
    %39 = vector.load %arg10[%c0_20, %c0_21] : memref<32x32xbf16, #tpu.memory_space<vmem>>, vector<32x32xbf16>
    %cst_22 = arith.constant dense<0.000000e+00> : vector<8x32xf32>
    %40 = tpu.matmul %30, %39, %cst_22 {dimension_numbers = #tpu.dot_dimension_numbers<[1], [0], [0], [1], [0, 0, 1, 1], [], []>} : vector<8x32xbf16>, vector<32x32xbf16>, vector<8x32xf32> -> vector<8x32xf32>
    %c0_23 = arith.constant 0 : index
    %c0_24 = arith.constant 0 : index
    %41 = vector.load %arg11[%c0_23, %c0_24] : memref<1x32xf32, #tpu.memory_space<vmem>>, vector<1x32xf32>
    %42 = vector.broadcast %41 : vector<1x32xf32> to vector<8x32xf32>
    %43 = arith.addf %40, %42 : vector<8x32xf32>
    %44 = arith.truncf %43 : vector<8x32xf32> to vector<8x32xbf16>
    %c0_25 = arith.constant 0 : index
    %c0_26 = arith.constant 0 : index
    %45 = vector.load %arg18[%c0_25, %c0_26] : memref<8x32xbf16, #tpu.memory_space<vmem>>, vector<8x32xbf16>
    tpu.vector_store %arg18[%c0_25, %c0_26], %44 {strides = array<i32>} : memref<8x32xbf16, #tpu.memory_space<vmem>>, vector<8x32xbf16>,
    %46 = arith.index_cast %1 : i32 to index
    %c0_27 = arith.constant 0 : index
    %47 = vector.load %arg15[%46, %c0_27] : memref<8x32xbf16, #tpu.memory_space<vmem>>, vector<8x32xbf16>
    %c0_28 = arith.constant 0 : index
    %c0_29 = arith.constant 0 : index
    %48 = vector.load %arg6[%c0_28, %c0_29] : memref<32x32xbf16, #tpu.memory_space<vmem>>, vector<32x32xbf16>
    %cst_30 = arith.constant dense<0.000000e+00> : vector<8x32xf32>
    %49 = tpu.matmul %47, %48, %cst_30 {dimension_numbers = #tpu.dot_dimension_numbers<[1], [0], [0], [1], [0, 0, 1, 1], [], []>} : vector<8x32xbf16>, vector<32x32xbf16>, vector<8x32xf32> -> vector<8x32xf32>
    %c0_31 = arith.constant 0 : index
    %c0_32 = arith.constant 0 : index
    %50 = vector.load %arg7[%c0_31, %c0_32] : memref<1x32xf32, #tpu.memory_space<vmem>>, vector<1x32xf32>
    %51 = vector.broadcast %50 : vector<1x32xf32> to vector<8x32xf32>
    %52 = arith.addf %49, %51 : vector<8x32xf32>
    %53 = arith.truncf %52 : vector<8x32xf32> to vector<8x32xbf16>
    %c0_33 = arith.constant 0 : index
    %c0_34 = arith.constant 0 : index
    %54 = vector.load %arg16[%c0_33, %c0_34] : memref<8x32xbf16, #tpu.memory_space<vmem>>, vector<8x32xbf16>
    tpu.vector_store %arg16[%c0_33, %c0_34], %53 {strides = array<i32>} : memref<8x32xbf16, #tpu.memory_space<vmem>>, vector<8x32xbf16>,
    %c0_35 = arith.constant 0 : index
    %c0_36 = arith.constant 0 : index
    %c0_37 = arith.constant 0 : index
    %55 = vector.load %arg3[%c0_35, %c0_36, %c0_37] : memref<1x1x8xf32, #tpu.memory_space<vmem>>, vector<1x1x8xf32>
    %56 = vector.shape_cast %55 : vector<1x1x8xf32> to vector<1x8xf32>
    %cst_38 = arith.constant 0.000000e+00 : f32
    %57 = vector.broadcast %cst_38 : f32 to vector<1x8xf32>
    %58 = arith.cmpf oeq, %56, %57 : vector<1x8xf32>
    %cst_39 = arith.constant -1.000000e+09 : f32
    %cst_40 = arith.constant 0.000000e+00 : f32
    %59 = vector.broadcast %cst_39 : f32 to vector<1x8xf32>
    %60 = vector.broadcast %cst_40 : f32 to vector<1x8xf32>
    %61 = arith.select %58, %59, %60 : vector<1x8xi1>, vector<1x8xf32>
    %c0_41 = arith.constant 0 : index
    %c0_42 = arith.constant 0 : index
    %62 = vector.load %arg16[%c0_41, %c0_42] : memref<8x32xbf16, #tpu.memory_space<vmem>>, vector<8x8xbf16>
    %c0_43 = arith.constant 0 : index
    %c0_44 = arith.constant 0 : index
    %63 = vector.load %arg17[%c0_43, %c0_44] : memref<8x32xbf16, #tpu.memory_space<vmem>>, vector<8x8xbf16>
    %c0_45 = arith.constant 0 : index
    %c0_46 = arith.constant 0 : index
    %64 = vector.load %arg18[%c0_45, %c0_46] : memref<8x32xbf16, #tpu.memory_space<vmem>>, vector<8x8xbf16>
    %cst_47 = arith.constant dense<0.000000e+00> : vector<8x8xf32>
    %65 = tpu.matmul %62, %63, %cst_47 {dimension_numbers = #tpu.dot_dimension_numbers<[1], [1], [0], [0], [0, 0, 1, 0], [], []>} : vector<8x8xbf16>, vector<8x8xbf16>, vector<8x8xf32> -> vector<8x8xf32>
    %cst_48 = arith.constant 0.353553385 : f32
    %66 = vector.broadcast %cst_48 : f32 to vector<8x8xf32>
    %67 = arith.mulf %65, %66 : vector<8x8xf32>
    %68 = vector.broadcast %61 : vector<1x8xf32> to vector<8x8xf32>
    %69 = arith.addf %67, %68 : vector<8x8xf32>
    %cst_49 = arith.constant dense<0xFF800000> : vector<8xf32>
    %70 = vector.multi_reduction <maximumf>, %69, %cst_49 [1] : vector<8x8xf32> to vector<8xf32>
    %71 = vector.shape_cast %70 : vector<8xf32> to vector<8x1xf32>
    %72 = vector.broadcast %71 : vector<8x1xf32> to vector<8x8xf32>
    %73 = arith.subf %69, %72 : vector<8x8xf32>
    %74 = math.exp %73 : vector<8x8xf32>
    %cst_50 = arith.constant dense<0.000000e+00> : vector<8xf32>
    %75 = vector.multi_reduction <add>, %74, %cst_50 [1] : vector<8x8xf32> to vector<8xf32>
    %76 = vector.shape_cast %75 : vector<8xf32> to vector<8x1xf32>
    %77 = tpu.reciprocal %76 {approx = true} : vector<8x1xf32> -> vector<8x1xf32>
    %78 = vector.broadcast %77 : vector<8x1xf32> to vector<8x8xf32>
    %79 = arith.mulf %74, %78 : vector<8x8xf32>
    %80 = arith.truncf %79 : vector<8x8xf32> to vector<8x8xbf16>
    %cst_51 = arith.constant dense<0.000000e+00> : vector<8x8xf32>
    %81 = tpu.matmul %80, %64, %cst_51 {dimension_numbers = #tpu.dot_dimension_numbers<[1], [0], [0], [1], [0, 0, 1, 1], [], []>} : vector<8x8xbf16>, vector<8x8xbf16>, vector<8x8xf32> -> vector<8x8xf32>
    %c0_52 = arith.constant 0 : index
    %c0_53 = arith.constant 0 : index
    %82 = vector.load %arg19[%c0_52, %c0_53] : memref<8x32xf32, #tpu.memory_space<vmem>>, vector<8x8xf32>
    tpu.vector_store %arg19[%c0_52, %c0_53], %81 {strides = array<i32>} : memref<8x32xf32, #tpu.memory_space<vmem>>, vector<8x8xf32>,
    %c0_54 = arith.constant 0 : index
    %c8 = arith.constant 8 : index
    %83 = vector.load %arg16[%c0_54, %c8] : memref<8x32xbf16, #tpu.memory_space<vmem>>, vector<8x8xbf16>
    %c0_55 = arith.constant 0 : index
    %c8_56 = arith.constant 8 : index
    %84 = vector.load %arg17[%c0_55, %c8_56] : memref<8x32xbf16, #tpu.memory_space<vmem>>, vector<8x8xbf16>
    %c0_57 = arith.constant 0 : index
    %c8_58 = arith.constant 8 : index
    %85 = vector.load %arg18[%c0_57, %c8_58] : memref<8x32xbf16, #tpu.memory_space<vmem>>, vector<8x8xbf16>
    %cst_59 = arith.constant dense<0.000000e+00> : vector<8x8xf32>
    %86 = tpu.matmul %83, %84, %cst_59 {dimension_numbers = #tpu.dot_dimension_numbers<[1], [1], [0], [0], [0, 0, 1, 0], [], []>} : vector<8x8xbf16>, vector<8x8xbf16>, vector<8x8xf32> -> vector<8x8xf32>
    %cst_60 = arith.constant 0.353553385 : f32
    %87 = vector.broadcast %cst_60 : f32 to vector<8x8xf32>
    %88 = arith.mulf %86, %87 : vector<8x8xf32>
    %89 = vector.broadcast %61 : vector<1x8xf32> to vector<8x8xf32>
    %90 = arith.addf %88, %89 : vector<8x8xf32>
    %cst_61 = arith.constant dense<0xFF800000> : vector<8xf32>
    %91 = vector.multi_reduction <maximumf>, %90, %cst_61 [1] : vector<8x8xf32> to vector<8xf32>
    %92 = vector.shape_cast %91 : vector<8xf32> to vector<8x1xf32>
    %93 = vector.broadcast %92 : vector<8x1xf32> to vector<8x8xf32>
    %94 = arith.subf %90, %93 : vector<8x8xf32>
    %95 = math.exp %94 : vector<8x8xf32>
    %cst_62 = arith.constant dense<0.000000e+00> : vector<8xf32>
    %96 = vector.multi_reduction <add>, %95, %cst_62 [1] : vector<8x8xf32> to vector<8xf32>
    %97 = vector.shape_cast %96 : vector<8xf32> to vector<8x1xf32>
    %98 = tpu.reciprocal %97 {approx = true} : vector<8x1xf32> -> vector<8x1xf32>
    %99 = vector.broadcast %98 : vector<8x1xf32> to vector<8x8xf32>
    %100 = arith.mulf %95, %99 : vector<8x8xf32>
    %101 = arith.truncf %100 : vector<8x8xf32> to vector<8x8xbf16>
    %cst_63 = arith.constant dense<0.000000e+00> : vector<8x8xf32>
    %102 = tpu.matmul %101, %85, %cst_63 {dimension_numbers = #tpu.dot_dimension_numbers<[1], [0], [0], [1], [0, 0, 1, 1], [], []>} : vector<8x8xbf16>, vector<8x8xbf16>, vector<8x8xf32> -> vector<8x8xf32>
    %c0_64 = arith.constant 0 : index
    %c8_65 = arith.constant 8 : index
    %103 = vector.load %arg19[%c0_64, %c8_65] : memref<8x32xf32, #tpu.memory_space<vmem>>, vector<8x8xf32>
    tpu.vector_store %arg19[%c0_64, %c8_65], %102 {strides = array<i32>} : memref<8x32xf32, #tpu.memory_space<vmem>>, vector<8x8xf32>,
    %c0_66 = arith.constant 0 : index
    %c16 = arith.constant 16 : index
    %104 = vector.load %arg16[%c0_66, %c16] : memref<8x32xbf16, #tpu.memory_space<vmem>>, vector<8x8xbf16>
    %c0_67 = arith.constant 0 : index
    %c16_68 = arith.constant 16 : index
    %105 = vector.load %arg17[%c0_67, %c16_68] : memref<8x32xbf16, #tpu.memory_space<vmem>>, vector<8x8xbf16>
    %c0_69 = arith.constant 0 : index
    %c16_70 = arith.constant 16 : index
    %106 = vector.load %arg18[%c0_69, %c16_70] : memref<8x32xbf16, #tpu.memory_space<vmem>>, vector<8x8xbf16>
    %cst_71 = arith.constant dense<0.000000e+00> : vector<8x8xf32>
    %107 = tpu.matmul %104, %105, %cst_71 {dimension_numbers = #tpu.dot_dimension_numbers<[1], [1], [0], [0], [0, 0, 1, 0], [], []>} : vector<8x8xbf16>, vector<8x8xbf16>, vector<8x8xf32> -> vector<8x8xf32>
    %cst_72 = arith.constant 0.353553385 : f32
    %108 = vector.broadcast %cst_72 : f32 to vector<8x8xf32>
    %109 = arith.mulf %107, %108 : vector<8x8xf32>
    %110 = vector.broadcast %61 : vector<1x8xf32> to vector<8x8xf32>
    %111 = arith.addf %109, %110 : vector<8x8xf32>
    %cst_73 = arith.constant dense<0xFF800000> : vector<8xf32>
    %112 = vector.multi_reduction <maximumf>, %111, %cst_73 [1] : vector<8x8xf32> to vector<8xf32>
    %113 = vector.shape_cast %112 : vector<8xf32> to vector<8x1xf32>
    %114 = vector.broadcast %113 : vector<8x1xf32> to vector<8x8xf32>
    %115 = arith.subf %111, %114 : vector<8x8xf32>
    %116 = math.exp %115 : vector<8x8xf32>
    %cst_74 = arith.constant dense<0.000000e+00> : vector<8xf32>
    %117 = vector.multi_reduction <add>, %116, %cst_74 [1] : vector<8x8xf32> to vector<8xf32>
    %118 = vector.shape_cast %117 : vector<8xf32> to vector<8x1xf32>
    %119 = tpu.reciprocal %118 {approx = true} : vector<8x1xf32> -> vector<8x1xf32>
    %120 = vector.broadcast %119 : vector<8x1xf32> to vector<8x8xf32>
    %121 = arith.mulf %116, %120 : vector<8x8xf32>
    %122 = arith.truncf %121 : vector<8x8xf32> to vector<8x8xbf16>
    %cst_75 = arith.constant dense<0.000000e+00> : vector<8x8xf32>
    %123 = tpu.matmul %122, %106, %cst_75 {dimension_numbers = #tpu.dot_dimension_numbers<[1], [0], [0], [1], [0, 0, 1, 1], [], []>} : vector<8x8xbf16>, vector<8x8xbf16>, vector<8x8xf32> -> vector<8x8xf32>
    %c0_76 = arith.constant 0 : index
    %c16_77 = arith.constant 16 : index
    %124 = vector.load %arg19[%c0_76, %c16_77] : memref<8x32xf32, #tpu.memory_space<vmem>>, vector<8x8xf32>
    tpu.vector_store %arg19[%c0_76, %c16_77], %123 {strides = array<i32>} : memref<8x32xf32, #tpu.memory_space<vmem>>, vector<8x8xf32>,
    %c0_78 = arith.constant 0 : index
    %c24 = arith.constant 24 : index
    %125 = vector.load %arg16[%c0_78, %c24] : memref<8x32xbf16, #tpu.memory_space<vmem>>, vector<8x8xbf16>
    %c0_79 = arith.constant 0 : index
    %c24_80 = arith.constant 24 : index
    %126 = vector.load %arg17[%c0_79, %c24_80] : memref<8x32xbf16, #tpu.memory_space<vmem>>, vector<8x8xbf16>
    %c0_81 = arith.constant 0 : index
    %c24_82 = arith.constant 24 : index
    %127 = vector.load %arg18[%c0_81, %c24_82] : memref<8x32xbf16, #tpu.memory_space<vmem>>, vector<8x8xbf16>
    %cst_83 = arith.constant dense<0.000000e+00> : vector<8x8xf32>
    %128 = tpu.matmul %125, %126, %cst_83 {dimension_numbers = #tpu.dot_dimension_numbers<[1], [1], [0], [0], [0, 0, 1, 0], [], []>} : vector<8x8xbf16>, vector<8x8xbf16>, vector<8x8xf32> -> vector<8x8xf32>
    %cst_84 = arith.constant 0.353553385 : f32
    %129 = vector.broadcast %cst_84 : f32 to vector<8x8xf32>
    %130 = arith.mulf %128, %129 : vector<8x8xf32>
    %131 = vector.broadcast %61 : vector<1x8xf32> to vector<8x8xf32>
    %132 = arith.addf %130, %131 : vector<8x8xf32>
    %cst_85 = arith.constant dense<0xFF800000> : vector<8xf32>
    %133 = vector.multi_reduction <maximumf>, %132, %cst_85 [1] : vector<8x8xf32> to vector<8xf32>
    %134 = vector.shape_cast %133 : vector<8xf32> to vector<8x1xf32>
    %135 = vector.broadcast %134 : vector<8x1xf32> to vector<8x8xf32>
    %136 = arith.subf %132, %135 : vector<8x8xf32>
    %137 = math.exp %136 : vector<8x8xf32>
    %cst_86 = arith.constant dense<0.000000e+00> : vector<8xf32>
    %138 = vector.multi_reduction <add>, %137, %cst_86 [1] : vector<8x8xf32> to vector<8xf32>
    %139 = vector.shape_cast %138 : vector<8xf32> to vector<8x1xf32>
    %140 = tpu.reciprocal %139 {approx = true} : vector<8x1xf32> -> vector<8x1xf32>
    %141 = vector.broadcast %140 : vector<8x1xf32> to vector<8x8xf32>
    %142 = arith.mulf %137, %141 : vector<8x8xf32>
    %143 = arith.truncf %142 : vector<8x8xf32> to vector<8x8xbf16>
    %cst_87 = arith.constant dense<0.000000e+00> : vector<8x8xf32>
    %144 = tpu.matmul %143, %127, %cst_87 {dimension_numbers = #tpu.dot_dimension_numbers<[1], [0], [0], [1], [0, 0, 1, 1], [], []>} : vector<8x8xbf16>, vector<8x8xbf16>, vector<8x8xf32> -> vector<8x8xf32>
    %c0_88 = arith.constant 0 : index
    %c24_89 = arith.constant 24 : index
    %145 = vector.load %arg19[%c0_88, %c24_89] : memref<8x32xf32, #tpu.memory_space<vmem>>, vector<8x8xf32>
    tpu.vector_store %arg19[%c0_88, %c24_89], %144 {strides = array<i32>} : memref<8x32xf32, #tpu.memory_space<vmem>>, vector<8x8xf32>,
    %c0_90 = arith.constant 0 : index
    %c0_91 = arith.constant 0 : index
    %146 = vector.load %arg19[%c0_90, %c0_91] : memref<8x32xf32, #tpu.memory_space<vmem>>, vector<8x32xf32>
    %147 = arith.truncf %146 : vector<8x32xf32> to vector<8x32xbf16>
    %c0_92 = arith.constant 0 : index
    %c0_93 = arith.constant 0 : index
    %148 = vector.load %arg12[%c0_92, %c0_93] : memref<32x32xbf16, #tpu.memory_space<vmem>>, vector<32x32xbf16>
    %cst_94 = arith.constant dense<0.000000e+00> : vector<8x32xf32>
    %149 = tpu.matmul %147, %148, %cst_94 {dimension_numbers = #tpu.dot_dimension_numbers<[1], [0], [0], [1], [0, 0, 1, 1], [], []>} : vector<8x32xbf16>, vector<32x32xbf16>, vector<8x32xf32> -> vector<8x32xf32>
    %c0_95 = arith.constant 0 : index
    %c0_96 = arith.constant 0 : index
    %150 = vector.load %arg13[%c0_95, %c0_96] : memref<1x32xf32, #tpu.memory_space<vmem>>, vector<1x32xf32>
    %151 = vector.broadcast %150 : vector<1x32xf32> to vector<8x32xf32>
    %152 = arith.addf %149, %151 : vector<8x32xf32>
    %c0_97 = arith.constant 0 : index
    %153 = arith.index_cast %1 : i32 to index
    %c0_98 = arith.constant 0 : index
    %154 = vector.load %arg2[%c0_97, %153, %c0_98] : memref<1x8x32xf32, #tpu.memory_space<vmem>>, vector<1x8x32xf32>
    %155 = vector.shape_cast %154 : vector<1x8x32xf32> to vector<8x32xf32>
    %156 = arith.addf %155, %152 : vector<8x32xf32>
    %c0_99 = arith.constant 0 : index
    %c0_100 = arith.constant 0 : index
    %c0_101 = arith.constant 0 : index
    %157 = vector.load %arg14[%c0_99, %c0_100, %c0_101] : memref<1x8x32xf32, #tpu.memory_space<vmem>>, vector<1x8x32xf32>
    %158 = vector.shape_cast %157 : vector<1x8x32xf32> to vector<8x32xf32>
    %159 = vector.shape_cast %156 : vector<8x32xf32> to vector<1x8x32xf32>
    tpu.vector_store %arg14[%c0_99, %c0_100, %c0_101], %159 {strides = array<i32>} : memref<1x8x32xf32, #tpu.memory_space<vmem>>, vector<1x8x32xf32>,
    return
  }
  func.func @transform_0(%arg0: i32, %arg1: i32) -> (i32, i32, i32) {
    %c0_i32 = arith.constant 0 : i32
    %c0_i32_0 = arith.constant 0 : i32
    %c0_i32_1 = arith.constant 0 : i32
    return %arg0, %c0_i32, %c0_i32_0 : i32, i32, i32
  }
  func.func @transform_1(%arg0: i32, %arg1: i32) -> (i32, i32, i32) {
    %c0_i32 = arith.constant 0 : i32
    %c0_i32_0 = arith.constant 0 : i32
    %c0_i32_1 = arith.constant 0 : i32
    return %arg0, %c0_i32, %c0_i32_0 : i32, i32, i32
  }
  func.func @transform_2(%arg0: i32, %arg1: i32) -> (i32, i32) {
    %c0_i32 = arith.constant 0 : i32
    %c0_i32_0 = arith.constant 0 : i32
    %c0_i32_1 = arith.constant 0 : i32
    return %c0_i32, %c0_i32_0 : i32, i32
  }
  func.func @transform_3(%arg0: i32, %arg1: i32) -> (i32, i32) {
    %c0_i32 = arith.constant 0 : i32
    %c0_i32_0 = arith.constant 0 : i32
    %c0_i32_1 = arith.constant 0 : i32
    return %c0_i32, %c0_i32_0 : i32, i32
  }
  func.func @transform_4(%arg0: i32, %arg1: i32) -> (i32, i32) {
    %c0_i32 = arith.constant 0 : i32
    %c0_i32_0 = arith.constant 0 : i32
    %c0_i32_1 = arith.constant 0 : i32
    return %c0_i32, %c0_i32_0 : i32, i32
  }
  func.func @transform_5(%arg0: i32, %arg1: i32) -> (i32, i32) {
    %c0_i32 = arith.constant 0 : i32
    %c0_i32_0 = arith.constant 0 : i32
    %c0_i32_1 = arith.constant 0 : i32
    return %c0_i32, %c0_i32_0 : i32, i32
  }
  func.func @transform_6(%arg0: i32, %arg1: i32) -> (i32, i32) {
    %c0_i32 = arith.constant 0 : i32
    %c0_i32_0 = arith.constant 0 : i32
    %c0_i32_1 = arith.constant 0 : i32
    return %c0_i32, %c0_i32_0 : i32, i32
  }
  func.func @transform_7(%arg0: i32, %arg1: i32) -> (i32, i32) {
    %c0_i32 = arith.constant 0 : i32
    %c0_i32_0 = arith.constant 0 : i32
    %c0_i32_1 = arith.constant 0 : i32
    return %c0_i32, %c0_i32_0 : i32, i32
  }
  func.func @transform_8(%arg0: i32, %arg1: i32) -> (i32, i32) {
    %c0_i32 = arith.constant 0 : i32
    %c0_i32_0 = arith.constant 0 : i32
    %c0_i32_1 = arith.constant 0 : i32
    return %c0_i32, %c0_i32_0 : i32, i32
  }
  func.func @transform_9(%arg0: i32, %arg1: i32) -> (i32, i32) {
    %c0_i32 = arith.constant 0 : i32
    %c0_i32_0 = arith.constant 0 : i32
    %c0_i32_1 = arith.constant 0 : i32
    return %c0_i32, %c0_i32_0 : i32, i32
  }
  func.func @transform_10(%arg0: i32, %arg1: i32) -> (i32, i32) {
    %c0_i32 = arith.constant 0 : i32
    %c0_i32_0 = arith.constant 0 : i32
    %c0_i32_1 = arith.constant 0 : i32
    return %c0_i32, %c0_i32_0 : i32, i32
  }
  func.func @transform_11(%arg0: i32, %arg1: i32) -> (i32, i32) {
    %c0_i32 = arith.constant 0 : i32
    %c0_i32_0 = arith.constant 0 : i32
    %c0_i32_1 = arith.constant 0 : i32
    return %c0_i32, %c0_i32_0 : i32, i32
  }
  func.func @transform_12(%arg0: i32, %arg1: i32) -> (i32, i32, i32) {
    %c0_i32 = arith.constant 0 : i32
    %c0_i32_0 = arith.constant 0 : i32
    return %arg0, %arg1, %c0_i32 : i32, i32, i32
  }
}

</mosaic_0001>

<llo_original>
// kernel: _lambda_.5
$region0: #{_lambda_.5}
  #allocation0 [shape = 'u32[]', space=smem, size = 0x4, offset = 0x4, fixed_abs, tag = 'smem constant byte address 0x4 - core index']
  #allocation1 [shape = 'u32[144,128]{1,0:T(1,128)}', space=vmem, size = 0x12000, scoped, tag = 'internal scratch']
  %s0 = inlined_call_operand.vmem [shape: f32[16,32], index: 0, kind: input, shape index: {}, may-alias: {0,7}]
  %s1 = inlined_call_operand.vmem [shape: f32[1,32], index: 1, kind: input, shape index: {}]
  %s2 = inlined_call_operand.vmem [shape: f32[1,32], index: 2, kind: input, shape index: {}, may-alias: {2,6}]
  %s3 = inlined_call_operand.vmem [shape: bf16[32,64], index: 3, kind: input, shape index: {}]
  %s4 = inlined_call_operand.vmem [shape: f32[1,64], index: 4, kind: input, shape index: {}]
  %s5 = inlined_call_operand.vmem [shape: bf16[64,32], index: 5, kind: input, shape index: {}]
  %s6 = inlined_call_operand.vmem [shape: f32[1,32], index: 6, kind: input, shape index: {}, may-alias: {2,6}]
  %s7 = inlined_call_operand.vmem [shape: f32[16,32], index: 7, kind: output, shape index: {}, may-alias: {0,7}]
  %s8 = sld [smem:[#allocation0]]
  $region38: #{_lambda_.5} parent=0
    _
  %s10 = ssub.s32 1, %s8
  %s11 = scalar_select 0, %s10, %s8
  // Predicated region
  $region2: #{_lambda_.5} parent=0 // pred_check
    _
  $region3: #{_lambda_.5} parent=0 // pred_check_branch
    %13 = sbr.rel (0) target = $region5
  $region4: #{_lambda_.5} parent=0 // pred_region
    _
  $region5: #{_lambda_.5} parent=0 // pred_fallthru
    _
  // Predicated region
  $region6: #{_lambda_.5} parent=0 // pred_check
    _
  $region7: #{_lambda_.5} parent=0 // pred_check_branch
    %15 = sbr.rel (0) target = $region9
  $region8: #{_lambda_.5} parent=0 // pred_region
    _
  $region9: #{_lambda_.5} parent=0 // pred_fallthru
    _
  // Predicated region
  $region10: #{_lambda_.5} parent=0 // pred_check
    _
  $region11: #{_lambda_.5} parent=0 // pred_check_branch
    %17 = sbr.rel (0) target = $region13
  $region12: #{_lambda_.5} parent=0 // pred_region
    _
  $region13: #{_lambda_.5} parent=0 // pred_fallthru
    _
  // Predicated region
  $region14: #{_lambda_.5} parent=0 // pred_check
    _
  $region15: #{_lambda_.5} parent=0 // pred_check_branch
    %19 = sbr.rel (0) target = $region17
  $region16: #{_lambda_.5} parent=0 // pred_region
    _
  $region17: #{_lambda_.5} parent=0 // pred_fallthru
    _
  // Predicated region
  $region18: #{_lambda_.5} parent=0 // pred_check
    _
  $region19: #{_lambda_.5} parent=0 // pred_check_branch
    %21 = sbr.rel (0) target = $region21
  $region20: #{_lambda_.5} parent=0 // pred_region
    _
  $region21: #{_lambda_.5} parent=0 // pred_fallthru
    _
  // Predicated region
  $region22: #{_lambda_.5} parent=0 // pred_check
    _
  $region23: #{_lambda_.5} parent=0 // pred_check_branch
    %23 = sbr.rel (0) target = $region25
  $region24: #{_lambda_.5} parent=0 // pred_region
    _
  $region25: #{_lambda_.5} parent=0 // pred_fallthru
    _
  // Predicated region
  $region26: #{_lambda_.5} parent=0 // pred_check
    _
  $region27: #{_lambda_.5} parent=0 // pred_check_branch
    %25 = sbr.rel (0) target = $region29
  $region28: #{_lambda_.5} parent=0 // pred_region
    _
  $region29: #{_lambda_.5} parent=0 // pred_fallthru
    _
  %v27 = vld [vmem:[%s0] sm:$0xff]
  %v28 = vld [vmem:[%s0 + $0x8] sm:$0xff]
  %vm29 = vcmask 261120
  %v30 = vsel %vm29, %v27, 0.0
  %31 = vadd.xlane.f32.xlu0 %v30
  %v32 = vpop.xlane.xlu0 %31
  %v33 = vsel %vm29, %v28, 0.0
  %34 = vadd.xlane.f32.xlu0 %v33
  %v35 = vpop.xlane.xlu0 %34
  %v36 = vrcp.pop 32.0
  %v37 = vmul.f32 %v32, %v36
  %v38 = vmul.f32 %v35, %v36
  %v39 = vsub.f32 %v27, %v37
  %v40 = vsub.f32 %v28, %v38
  %v41 = vmul.f32 %v39, %v39
  %v42 = vmul.f32 %v40, %v40
  %v43 = vsel %vm29, %v41, 0.0
  %44 = vadd.xlane.f32.xlu0 %v43
  %v45 = vpop.xlane.xlu0 %44
  %v46 = vsel %vm29, %v42, 0.0
  %47 = vadd.xlane.f32.xlu0 %v46
  %v48 = vpop.xlane.xlu0 %47
  %v49 = vmul.f32 %v45, 0.032258064
  %v50 = vmul.f32 %v48, 0.032258064
  %v51 = vrsqrt.pop %v49
  %v52 = vmul.f32 %v49, %v51
  %vm53 = vcmp.eq.f32.partialorder %v49, inf
  %v54 = vsel %vm53, %v49, %v52
  %vm55 = vcmp.eq.f32.partialorder %v49, 0.0
  %v56 = vand.u32 %v49, 2147483648
  %v57 = vsel %vm55, %v56, %v54
  %v58 = vrsqrt.pop %v50
  %v59 = vmul.f32 %v50, %v58
  %vm60 = vcmp.eq.f32.partialorder %v50, inf
  %v61 = vsel %vm60, %v50, %v59
  %vm62 = vcmp.eq.f32.partialorder %v50, 0.0
  %v63 = vand.u32 %v50, 2147483648
  %v64 = vsel %vm62, %v63, %v61
  %v65 = vadd.f32 %v57, 1e-06
  %v66 = vadd.f32 %v64, 1e-06
  %v67 = vrcp.pop %v65
  %v68 = vmul.f32 1.0, %v67
  %v69 = vrcp.pop %v66
  %v70 = vmul.f32 1.0, %v69
  %v71 = vld [vmem:[%s1] sm:$0x1]
  %v73 = vlaneseq
  %v74 = vshrl.u32 %v73, 7
  %v75 = vsub.s32 0, %v74
  %v76 = vrot.slane %v71, %v75
  %v78 = vmul.f32 %v76, %v39
  %v79 = vmul.f32 %v76, %v40
  %v80 = vmul.f32 %v78, %v68
  %v81 = vmul.f32 %v79, %v70
  %v82 = vld [vmem:[%s2] sm:$0x1]
  %v84 = vlaneseq
  %v85 = vshrl.u32 %v84, 7
  %v86 = vsub.s32 0, %v85
  %v87 = vrot.slane %v82, %v86
  %v89 = vadd.f32 %v80, %v87
  %v90 = vadd.f32 %v81, %v87
  %v91 = vpack.c.bf16 %v90, %v89
  %v92 = vld [vmem:[%s3] sm:$0xf]
  %v93 = vld [vmem:[%s3 + $0x4] sm:$0xf]
  %v94 = vld [vmem:[%s3 + $0x8] sm:$0xf]
  %v95 = vld [vmem:[%s3 + $0xc] sm:$0xf]
  %v96 = vld [vmem:[%s4] sm:$0x1]
  %v98 = vlaneseq
  %v99 = vshrl.u32 %v98, 7
  %v100 = vsub.s32 0, %v99
  %v101 = vrot.slane %v96, %v100
  %v107 = vunpack.c.l.b16 %v92
  %v108 = vunpack.c.l.b16 %v93
  %v109 = vunpack.c.l.b16 %v94
  %v110 = vunpack.c.l.b16 %v95
  %v111 = vpack.c.b16 %v108, %v107
  %v112 = vpack.c.b16 %v110, %v109
  %v116 = vsel %vm29, %v91, 0
  %118 = vmatprep.subr.bf16.mxu0 0
  %119 = vmatpush1.bf16.msra.mxu0 %v111
  %120 = vmatprep.subr.bf16.mxu0 0
  %121 = vmatpush1.bf16.msra.mxu0 %v112
  %122 = vmatprep.subr.bf16.mxu0 0
  %123 = vmatpush1.bf16.msra.mxu0 0
  %124 = vmatprep.subr.bf16.mxu0 0
  %125 = vmatpush1.bf16.msra.mxu0 0
  %126 = vmatprep.subr.bf16.mxu0 0
  %127 = vmatpush1.bf16.msra.mxu0 0
  %128 = vmatprep.subr.bf16.mxu0 0
  %129 = vmatpush1.bf16.msra.mxu0 0
  %130 = vmatprep.subr.bf16.mxu0 0
  %131 = vmatpush1.bf16.msra.mxu0 0
  %132 = vmatprep.subr.bf16.mxu0 0
  %133 = vmatpush1.bf16.msra.mxu0 0
  %134 = vmatprep.subr.bf16.mxu0 0
  %135 = vmatpush1.bf16.msra.mxu0 0
  %136 = vmatprep.subr.bf16.mxu0 0
  %137 = vmatpush1.bf16.msra.mxu0 0
  %138 = vmatprep.subr.bf16.mxu0 0
  %139 = vmatpush1.bf16.msra.mxu0 0
  %140 = vmatprep.subr.bf16.mxu0 0
  %141 = vmatpush1.bf16.msra.mxu0 0
  %142 = vmatprep.subr.bf16.mxu0 0
  %143 = vmatpush1.bf16.msra.mxu0 0
  %144 = vmatprep.subr.bf16.mxu0 0
  %145 = vmatpush1.bf16.msra.mxu0 0
  %146 = vmatprep.subr.bf16.mxu0 0
  %147 = vmatpush1.bf16.msra.mxu0 0
  %148 = vmatprep.subr.bf16.mxu0 0
  %149 = vmatpush1.bf16.msra.mxu0 0
  %150 = vmatprep.mubr.bf16.mxu0 0
  %151 = vmatmul.mubr.bf16.gmra.mrb[0].mxu0 %v116
  %v152 = vpop.f32.mrb[0].mxu0
  %v153 = vadd.f32 %v101, %v152
  %v154 = vpop.f32.mrb[0].mxu0
  %v155 = vpop.f32.mrb[0].mxu0
  %v156 = vadd.f32 %v101, %v155
  %v157 = vpop.f32.mrb[0].mxu0
  %158 = vdwg.mxu0
  %v159 = vmax.f32 %v153, 0.0
  %v160 = vmax.f32 %v156, 0.0
  %v161 = vpack.c.bf16 %v160, %v159
  %v162 = vld [vmem:[%s5] sm:$0xf]
  %v163 = vld [vmem:[%s5 + $0x4] sm:$0xf]
  %v164 = vld [vmem:[%s5 + $0x8] sm:$0xf]
  %v165 = vld [vmem:[%s5 + $0xc] sm:$0xf]
  %v166 = vld [vmem:[%s5 + $0x10] sm:$0xf]
  %v167 = vld [vmem:[%s5 + $0x14] sm:$0xf]
  %v168 = vld [vmem:[%s5 + $0x18] sm:$0xf]
  %v169 = vld [vmem:[%s5 + $0x1c] sm:$0xf]
  %v170 = vld [vmem:[%s6] sm:$0x1]
  %v172 = vlaneseq
  %v173 = vshrl.u32 %v172, 7
  %v174 = vsub.s32 0, %v173
  %v175 = vrot.slane %v170, %v174
  %v185 = vunpack.c.l.b16 %v162
  %v186 = vunpack.c.l.b16 %v163
  %v187 = vunpack.c.l.b16 %v164
  %v188 = vunpack.c.l.b16 %v165
  %v189 = vunpack.c.l.b16 %v166
  %v190 = vunpack.c.l.b16 %v167
  %v191 = vunpack.c.l.b16 %v168
  %v192 = vunpack.c.l.b16 %v169
  %v193 = vpack.c.b16 %v186, %v185
  %v194 = vpack.c.b16 %v188, %v187
  %v195 = vpack.c.b16 %v190, %v189
  %v196 = vpack.c.b16 %v192, %v191
  %vm201 = vcmask 523264
  %v203 = vsel %vm201, %v161, 0
  %205 = vmatprep.subr.bf16.mxu0 0
  %206 = vmatpush1.bf16.msra.mxu0 %v193
  %207 = vmatprep.subr.bf16.mxu0 0
  %208 = vmatpush1.bf16.msra.mxu0 %v194
  %209 = vmatprep.subr.bf16.mxu0 0
  %210 = vmatpush1.bf16.msra.mxu0 %v195
  %211 = vmatprep.subr.bf16.mxu0 0
  %212 = vmatpush1.bf16.msra.mxu0 %v196
  %213 = vmatprep.subr.bf16.mxu0 0
  %214 = vmatpush1.bf16.msra.mxu0 0
  %215 = vmatprep.subr.bf16.mxu0 0
  %216 = vmatpush1.bf16.msra.mxu0 0
  %217 = vmatprep.subr.bf16.mxu0 0
  %218 = vmatpush1.bf16.msra.mxu0 0
  %219 = vmatprep.subr.bf16.mxu0 0
  %220 = vmatpush1.bf16.msra.mxu0 0
  %221 = vmatprep.subr.bf16.mxu0 0
  %222 = vmatpush1.bf16.msra.mxu0 0
  %223 = vmatprep.subr.bf16.mxu0 0
  %224 = vmatpush1.bf16.msra.mxu0 0
  %225 = vmatprep.subr.bf16.mxu0 0
  %226 = vmatpush1.bf16.msra.mxu0 0
  %227 = vmatprep.subr.bf16.mxu0 0
  %228 = vmatpush1.bf16.msra.mxu0 0
  %229 = vmatprep.subr.bf16.mxu0 0
  %230 = vmatpush1.bf16.msra.mxu0 0
  %231 = vmatprep.subr.bf16.mxu0 0
  %232 = vmatpush1.bf16.msra.mxu0 0
  %233 = vmatprep.subr.bf16.mxu0 0
  %234 = vmatpush1.bf16.msra.mxu0 0
  %235 = vmatprep.subr.bf16.mxu0 0
  %236 = vmatpush1.bf16.msra.mxu0 0
  %237 = vmatprep.mubr.bf16.mxu0 0
  %238 = vmatmul.mubr.bf16.gmra.mrb[0].mxu0 %v203
  %v239 = vpop.f32.mrb[0].mxu0
  %v240 = vadd.f32 %v175, %v239
  %v241 = vpop.f32.mrb[0].mxu0
  %v242 = vpop.f32.mrb[0].mxu0
  %v243 = vadd.f32 %v175, %v242
  %v244 = vpop.f32.mrb[0].mxu0
  %245 = vdwg.mxu0
  %v246 = vadd.f32 %v27, %v240
  %v247 = vadd.f32 %v28, %v243
  %248 = vst.msk [vmem:[%s7] sm:$0xff] %vm29, %v246
  %249 = vst.msk [vmem:[%s7 + $0x8] sm:$0xff] %vm29, %v247
  // Predicated region
  $region30: #{_lambda_.5} parent=0 // pred_check
    _
  $region31: #{_lambda_.5} parent=0 // pred_check_branch
    %251 = sbr.rel (0) target = $region33
  $region32: #{_lambda_.5} parent=0 // pred_region
    _
  $region33: #{_lambda_.5} parent=0 // pred_fallthru
    _
  // Predicated region
  $region34: #{_lambda_.5} parent=0 // pred_check
    _
  $region35: #{_lambda_.5} parent=0 // pred_check_branch
    %253 = sbr.rel (0) target = $region37
  $region36: #{_lambda_.5} parent=0 // pred_region
    _
  $region37: #{_lambda_.5} parent=0 // pred_fallthru
    _

// kernel: _lambda_.4
$region0: #{_lambda_.4}
  #allocation0 [shape = 'u32[]', space=smem, size = 0x4, offset = 0x4, fixed_abs, tag = 'smem constant byte address 0x4 - core index']
  #allocation1 [shape = 'u32[144,128]{1,0:T(1,128)}', space=vmem, size = 0x12000, scoped, tag = 'internal scratch']
  #allocation2 [shape = 'bf16[8,32]{1,0:T(8,128)(2,1)}', space=vmem, size = 0x800, scoped, tag = 'scratch operand']
  #allocation3 [shape = 'bf16[8,32]{1,0:T(8,128)(2,1)}', space=vmem, size = 0x800, scoped, tag = 'scratch operand']
  #allocation4 [shape = 'bf16[8,32]{1,0:T(8,128)(2,1)}', space=vmem, size = 0x800, scoped, tag = 'scratch operand']
  #allocation5 [shape = 'bf16[8,32]{1,0:T(8,128)(2,1)}', space=vmem, size = 0x800, scoped, tag = 'scratch operand']
  #allocation6 [shape = 'f32[8,32]{1,0:T(8,128)}', space=vmem, size = 0x1000, scoped, tag = 'scratch operand']
  %s0 = inlined_call_operand.vmem [shape: f32[2,8,32], index: 0, kind: input, shape index: {}]
  %s1 = inlined_call_operand.hbm [shape: f32[2,1,8], index: 1, kind: input, shape index: {}]
  %s2 = inlined_call_operand.vmem [shape: f32[1,32], index: 2, kind: input, shape index: {}]
  %s3 = inlined_call_operand.vmem [shape: f32[1,32], index: 3, kind: input, shape index: {}, may-alias: {3,5,7,9,11}]
  %s4 = inlined_call_operand.vmem [shape: bf16[32,32], index: 4, kind: input, shape index: {}]
  %s5 = inlined_call_operand.vmem [shape: f32[1,32], index: 5, kind: input, shape index: {}, may-alias: {3,5,7,9,11}]
  %s6 = inlined_call_operand.vmem [shape: bf16[32,32], index: 6, kind: input, shape index: {}]
  %s7 = inlined_call_operand.vmem [shape: f32[1,32], index: 7, kind: input, shape index: {}, may-alias: {3,5,7,9,11}]
  %s8 = inlined_call_operand.vmem [shape: bf16[32,32], index: 8, kind: input, shape index: {}]
  %s9 = inlined_call_operand.vmem [shape: f32[1,32], index: 9, kind: input, shape index: {}, may-alias: {3,5,7,9,11}]
  %s10 = inlined_call_operand.vmem [shape: bf16[32,32], index: 10, kind: input, shape index: {}]
  %s11 = inlined_call_operand.vmem [shape: f32[1,32], index: 11, kind: input, shape index: {}, may-alias: {3,5,7,9,11}]
  %s12 = inlined_call_operand.vmem [shape: f32[2,8,32], index: 12, kind: output, shape index: {}]
  %s13 = sld [smem:[#allocation0]]
  $region85: #{_lambda_.4} parent=0
    _
  %s15 = ssub.s32 1, %s13
  %s16 = scalar_select 0, %s15, %s13
  $region1: #{_lambda_.4} parent=0
    #allocation7 [shape = 'u8[1024]{0}', space=vmem, size = 0x400, scoped, tag = 'input window, operand 1']
    #allocation8 [shape = 's32[2]{0}', space=sflag, size = 0x8, scoped, tag = 'scoped memory for _lambda_.4']
    %17 = vsyncpa [#allocation8], 0
    %s18 = scalar_lea.sflag [#allocation8], 1
    %19 = vsyncpa %s18, 0
    loop: start=0, step=1, limit=4
    $region2: #{_lambda_.4} parent=1 // loop_pre_header
      _
    $region3: #{_lambda_.4} parent=1 // loop_header
      %s21 = sphi 0, %s25
      %p22 = scmp.ge.s32.totalorder %s21, 4
      %s28 = sphi 0, %s40
      %s29 = sphi 0, %s36
      %s30 = sphi 0, %s28
      %s31 = sphi 0, %s29
      %s32 = sphi 0, %s30
      %s33 = sphi 0, %s31
      %s43 = sphi 0, %s45
      %s46 = sphi 0, %s43
      %s47 = sphi 0, %s46
      %s63 = sphi 0, %s47
      %s69 = sphi 0, %s71
      %s72 = sphi 0, %s69
      %s73 = sphi 0, %s72
      %s89 = sphi 0, %s73
      %s93 = sphi 0, %s93
      %s95 = sphi 0, %s93
      %s96 = sphi 0, %s95
      %s110 = sphi 0, %s96
      %s114 = sphi 0, %s114
      %s116 = sphi 0, %s114
      %s117 = sphi 0, %s116
      %s131 = sphi 0, %s117
      %s135 = sphi 0, %s135
      %s137 = sphi 0, %s135
      %s138 = sphi 0, %s137
      %s152 = sphi 0, %s138
      %s156 = sphi 0, %s156
      %s158 = sphi 0, %s156
      %s159 = sphi 0, %s158
      %s173 = sphi 0, %s159
      %s177 = sphi 0, %s177
      %s179 = sphi 0, %s177
      %s180 = sphi 0, %s179
      %s194 = sphi 0, %s180
      %s198 = sphi 0, %s198
      %s200 = sphi 0, %s198
      %s201 = sphi 0, %s200
      %s215 = sphi 0, %s201
      %s219 = sphi 0, %s219
      %s221 = sphi 0, %s219
      %s222 = sphi 0, %s221
      %s236 = sphi 0, %s222
      %s240 = sphi 0, %s240
      %s242 = sphi 0, %s240
      %s243 = sphi 0, %s242
      %s257 = sphi 0, %s243
      %s261 = sphi 0, %s261
      %s263 = sphi 0, %s261
      %s264 = sphi 0, %s263
      %s278 = sphi 0, %s264
      %s282 = sphi 0, %s282
      %s284 = sphi 0, %s282
      %s285 = sphi 0, %s284
      %s299 = sphi 0, %s285
      %s307 = sphi 0, %s309
      %s310 = sphi 0, %s307
      %s311 = sphi 0, %s310
      %s327 = sphi 0, %s311
    $region4: #{_lambda_.4} parent=1 // loop_header_branch
      %24 = sbr.rel (%p22) target = $region8
    $region5: #{_lambda_.4} parent=1 // loop_body
      %s26 = ssub.s32 %s21, 1
      %s27 = ssub.s32 %s21, 2
      %s34 = sadd.s32 1, %s29
      %p35 = scmp.ge.s32.totalorder %s34, 1
      %s36 = scalar_select %p35, 0, %s34
      %s37 = sadd.s32 1, %s28
      %s38 = scalar_select %p35, %s37, %s28
      %p39 = scmp.ge.s32.totalorder %s38, 2
      %s40 = scalar_select %p39, 0, %s38
      %s41 = ssub.s32 %s28, %s40
      %p42 = scmp.eq.s32.totalorder %s41, 0
      %s44 = sadd.s32 %s43, 1
      %s45 = scalar_select %p42, %s43, %s44
      %p48 = pneg %p42
      %p49 = scmp.eq.s32.totalorder %s21, 1
      %p50 = por %p48, %p49
      %p51 = scmp.ne.s32.totalorder %s43, %s46
      %p52 = scmp.eq.s32.totalorder %s21, 0
      %p53 = por %p51, %p52
      %p54 = scmp.ne.s32.totalorder %s43, %s46
      %p55 = scmp.eq.s32.totalorder %s26, 1
      %p56 = por %p54, %p55
      %p57 = scmp.ne.s32.totalorder %s46, %s47
      %p58 = scmp.eq.s32.totalorder %s26, 0
      %p59 = por %p57, %p58
      %p60 = scmp.ne.s32.totalorder %s46, %s47
      %p61 = scmp.eq.s32.totalorder %s27, 1
      %p62 = por %p60, %p61
      %p64 = scmp.ne.s32.totalorder %s47, %s63
      %p65 = scmp.eq.s32.totalorder %s27, 0
      %p66 = por %p64, %p65
      %s67 = ssub.s32 %s28, %s40
      %p68 = scmp.eq.s32.totalorder %s67, 0
      %s70 = sadd.s32 %s69, 1
      %s71 = scalar_select %p68, %s69, %s70
      %p74 = pneg %p68
      %p75 = scmp.eq.s32.totalorder %s21, 1
      %p76 = por %p74, %p75
      %p77 = scmp.ne.s32.totalorder %s69, %s72
      %p78 = scmp.eq.s32.totalorder %s21, 0
      %p79 = por %p77, %p78
      %p80 = scmp.ne.s32.totalorder %s69, %s72
      %p81 = scmp.eq.s32.totalorder %s26, 1
      %p82 = por %p80, %p81
      %p83 = scmp.ne.s32.totalorder %s72, %s73
      %p84 = scmp.eq.s32.totalorder %s26, 0
      %p85 = por %p83, %p84
      %p86 = scmp.ne.s32.totalorder %s72, %s73
      %p87 = scmp.eq.s32.totalorder %s27, 1
      %p88 = por %p86, %p87
      %p90 = scmp.ne.s32.totalorder %s73, %s89
      %p91 = scmp.eq.s32.totalorder %s27, 0
      %p92 = por %p90, %p91
      %s94 = sadd.s32 %s93, 1
      %p97 = scmp.eq.s32.totalorder %s21, 1
      %p98 = scmp.ne.s32.totalorder %s93, %s95
      %p99 = scmp.eq.s32.totalorder %s21, 0
      %p100 = por %p98, %p99
      %p101 = scmp.ne.s32.totalorder %s93, %s95
      %p102 = scmp.eq.s32.totalorder %s26, 1
      %p103 = por %p101, %p102
      %p104 = scmp.ne.s32.totalorder %s95, %s96
      %p105 = scmp.eq.s32.totalorder %s26, 0
      %p106 = por %p104, %p105
      %p107 = scmp.ne.s32.totalorder %s95, %s96
      %p108 = scmp.eq.s32.totalorder %s27, 1
      %p109 = por %p107, %p108
      %p111 = scmp.ne.s32.totalorder %s96, %s110
      %p112 = scmp.eq.s32.totalorder %s27, 0
      %p113 = por %p111, %p112
      %s115 = sadd.s32 %s114, 1
      %p118 = scmp.eq.s32.totalorder %s21, 1
      %p119 = scmp.ne.s32.totalorder %s114, %s116
      %p120 = scmp.eq.s32.totalorder %s21, 0
      %p121 = por %p119, %p120
      %p122 = scmp.ne.s32.totalorder %s114, %s116
      %p123 = scmp.eq.s32.totalorder %s26, 1
      %p124 = por %p122, %p123
      %p125 = scmp.ne.s32.totalorder %s116, %s117
      %p126 = scmp.eq.s32.totalorder %s26, 0
      %p127 = por %p125, %p126
      %p128 = scmp.ne.s32.totalorder %s116, %s117
      %p129 = scmp.eq.s32.totalorder %s27, 1
      %p130 = por %p128, %p129
      %p132 = scmp.ne.s32.totalorder %s117, %s131
      %p133 = scmp.eq.s32.totalorder %s27, 0
      %p134 = por %p132, %p133
      %s136 = sadd.s32 %s135, 1
      %p139 = scmp.eq.s32.totalorder %s21, 1
      %p140 = scmp.ne.s32.totalorder %s135, %s137
      %p141 = scmp.eq.s32.totalorder %s21, 0
      %p142 = por %p140, %p141
      %p143 = scmp.ne.s32.totalorder %s135, %s137
      %p144 = scmp.eq.s32.totalorder %s26, 1
      %p145 = por %p143, %p144
      %p146 = scmp.ne.s32.totalorder %s137, %s138
      %p147 = scmp.eq.s32.totalorder %s26, 0
      %p148 = por %p146, %p147
      %p149 = scmp.ne.s32.totalorder %s137, %s138
      %p150 = scmp.eq.s32.totalorder %s27, 1
      %p151 = por %p149, %p150
      %p153 = scmp.ne.s32.totalorder %s138, %s152
      %p154 = scmp.eq.s32.totalorder %s27, 0
      %p155 = por %p153, %p154
      %s157 = sadd.s32 %s156, 1
      %p160 = scmp.eq.s32.totalorder %s21, 1
      %p161 = scmp.ne.s32.totalorder %s156, %s158
      %p162 = scmp.eq.s32.totalorder %s21, 0
      %p163 = por %p161, %p162
      %p164 = scmp.ne.s32.totalorder %s156, %s158
      %p165 = scmp.eq.s32.totalorder %s26, 1
      %p166 = por %p164, %p165
      %p167 = scmp.ne.s32.totalorder %s158, %s159
      %p168 = scmp.eq.s32.totalorder %s26, 0
      %p169 = por %p167, %p168
      %p170 = scmp.ne.s32.totalorder %s158, %s159
      %p171 = scmp.eq.s32.totalorder %s27, 1
      %p172 = por %p170, %p171
      %p174 = scmp.ne.s32.totalorder %s159, %s173
      %p175 = scmp.eq.s32.totalorder %s27, 0
      %p176 = por %p174, %p175
      %s178 = sadd.s32 %s177, 1
      %p181 = scmp.eq.s32.totalorder %s21, 1
      %p182 = scmp.ne.s32.totalorder %s177, %s179
      %p183 = scmp.eq.s32.totalorder %s21, 0
      %p184 = por %p182, %p183
      %p185 = scmp.ne.s32.totalorder %s177, %s179
      %p186 = scmp.eq.s32.totalorder %s26, 1
      %p187 = por %p185, %p186
      %p188 = scmp.ne.s32.totalorder %s179, %s180
      %p189 = scmp.eq.s32.totalorder %s26, 0
      %p190 = por %p188, %p189
      %p191 = scmp.ne.s32.totalorder %s179, %s180
      %p192 = scmp.eq.s32.totalorder %s27, 1
      %p193 = por %p191, %p192
      %p195 = scmp.ne.s32.totalorder %s180, %s194
      %p196 = scmp.eq.s32.totalorder %s27, 0
      %p197 = por %p195, %p196
      %s199 = sadd.s32 %s198, 1
      %p202 = scmp.eq.s32.totalorder %s21, 1
      %p203 = scmp.ne.s32.totalorder %s198, %s200
      %p204 = scmp.eq.s32.totalorder %s21, 0
      %p205 = por %p203, %p204
      %p206 = scmp.ne.s32.totalorder %s198, %s200
      %p207 = scmp.eq.s32.totalorder %s26, 1
      %p208 = por %p206, %p207
      %p209 = scmp.ne.s32.totalorder %s200, %s201
      %p210 = scmp.eq.s32.totalorder %s26, 0
      %p211 = por %p209, %p210
      %p212 = scmp.ne.s32.totalorder %s200, %s201
      %p213 = scmp.eq.s32.totalorder %s27, 1
      %p214 = por %p212, %p213
      %p216 = scmp.ne.s32.totalorder %s201, %s215
      %p217 = scmp.eq.s32.totalorder %s27, 0
      %p218 = por %p216, %p217
      %s220 = sadd.s32 %s219, 1
      %p223 = scmp.eq.s32.totalorder %s21, 1
      %p224 = scmp.ne.s32.totalorder %s219, %s221
      %p225 = scmp.eq.s32.totalorder %s21, 0
      %p226 = por %p224, %p225
      %p227 = scmp.ne.s32.totalorder %s219, %s221
      %p228 = scmp.eq.s32.totalorder %s26, 1
      %p229 = por %p227, %p228
      %p230 = scmp.ne.s32.totalorder %s221, %s222
      %p231 = scmp.eq.s32.totalorder %s26, 0
      %p232 = por %p230, %p231
      %p233 = scmp.ne.s32.totalorder %s221, %s222
      %p234 = scmp.eq.s32.totalorder %s27, 1
      %p235 = por %p233, %p234
      %p237 = scmp.ne.s32.totalorder %s222, %s236
      %p238 = scmp.eq.s32.totalorder %s27, 0
      %p239 = por %p237, %p238
      %s241 = sadd.s32 %s240, 1
      %p244 = scmp.eq.s32.totalorder %s21, 1
      %p245 = scmp.ne.s32.totalorder %s240, %s242
      %p246 = scmp.eq.s32.totalorder %s21, 0
      %p247 = por %p245, %p246
      %p248 = scmp.ne.s32.totalorder %s240, %s242
      %p249 = scmp.eq.s32.totalorder %s26, 1
      %p250 = por %p248, %p249
      %p251 = scmp.ne.s32.totalorder %s242, %s243
      %p252 = scmp.eq.s32.totalorder %s26, 0
      %p253 = por %p251, %p252
      %p254 = scmp.ne.s32.totalorder %s242, %s243
      %p255 = scmp.eq.s32.totalorder %s27, 1
      %p256 = por %p254, %p255
      %p258 = scmp.ne.s32.totalorder %s243, %s257
      %p259 = scmp.eq.s32.totalorder %s27, 0
      %p260 = por %p258, %p259
      %s262 = sadd.s32 %s261, 1
      %p265 = scmp.eq.s32.totalorder %s21, 1
      %p266 = scmp.ne.s32.totalorder %s261, %s263
      %p267 = scmp.eq.s32.totalorder %s21, 0
      %p268 = por %p266, %p267
      %p269 = scmp.ne.s32.totalorder %s261, %s263
      %p270 = scmp.eq.s32.totalorder %s26, 1
      %p271 = por %p269, %p270
      %p272 = scmp.ne.s32.totalorder %s263, %s264
      %p273 = scmp.eq.s32.totalorder %s26, 0
      %p274 = por %p272, %p273
      %p275 = scmp.ne.s32.totalorder %s263, %s264
      %p276 = scmp.eq.s32.totalorder %s27, 1
      %p277 = por %p275, %p276
      %p279 = scmp.ne.s32.totalorder %s264, %s278
      %p280 = scmp.eq.s32.totalorder %s27, 0
      %p281 = por %p279, %p280
      %s283 = sadd.s32 %s282, 1
      %p286 = scmp.eq.s32.totalorder %s21, 1
      %p287 = scmp.ne.s32.totalorder %s282, %s284
      %p288 = scmp.eq.s32.totalorder %s21, 0
      %p289 = por %p287, %p288
      %p290 = scmp.ne.s32.totalorder %s282, %s284
      %p291 = scmp.eq.s32.totalorder %s26, 1
      %p292 = por %p290, %p291
      %p293 = scmp.ne.s32.totalorder %s284, %s285
      %p294 = scmp.eq.s32.totalorder %s26, 0
      %p295 = por %p293, %p294
      %p296 = scmp.ne.s32.totalorder %s284, %s285
      %p297 = scmp.eq.s32.totalorder %s27, 1
      %p298 = por %p296, %p297
      %p300 = scmp.ne.s32.totalorder %s285, %s299
      %p301 = scmp.eq.s32.totalorder %s27, 0
      %p302 = por %p300, %p301
      %s303 = ssub.s32 %s28, %s40
      %s304 = ssub.s32 %s29, %s36
      %s305 = sor.u32 %s303, %s304
      %p306 = scmp.eq.s32.totalorder %s305, 0
      %s308 = sadd.s32 %s307, 1
      %s309 = scalar_select %p306, %s307, %s308
      %p312 = pneg %p306
      %p313 = scmp.eq.s32.totalorder %s21, 1
      %p314 = por %p312, %p313
      %p315 = scmp.ne.s32.totalorder %s307, %s310
      %p316 = scmp.eq.s32.totalorder %s21, 0
      %p317 = por %p315, %p316
      %p318 = scmp.ne.s32.totalorder %s307, %s310
      %p319 = scmp.eq.s32.totalorder %s26, 1
      %p320 = por %p318, %p319
      %p321 = scmp.ne.s32.totalorder %s310, %s311
      %p322 = scmp.eq.s32.totalorder %s26, 0
      %p323 = por %p321, %p322
      %p324 = scmp.ne.s32.totalorder %s310, %s311
      %p325 = scmp.eq.s32.totalorder %s27, 1
      %p326 = por %p324, %p325
      %p328 = scmp.ne.s32.totalorder %s311, %s327
      %p329 = scmp.eq.s32.totalorder %s27, 0
      %p330 = por %p328, %p329
      %p331 = scmp.le.s32.totalorder 1, %s21
      %p332 = scmp.lt.s32.totalorder %s21, 3
      %p333 = pnand %p331, %p332
      %p334 = pneg %p333
      // Predicated region
      $region9: #{_lambda_.4} parent=5 // pred_check
        _
      $region10: #{_lambda_.4} parent=5 // pred_check_branch
        %336 = sbr.rel (%p333) target = $region12
      $region11: #{_lambda_.4} parent=5 // pred_region
        %s337 = ssub.s32 %s21, 1
        // Predicated region
        $region13: #{_lambda_.4} parent=11 // pred_check
          %p338 = pneg %p106
        $region14: #{_lambda_.4} parent=11 // pred_check_branch
          %340 = sbr.rel (%p338) target = $region16
        $region15: #{_lambda_.4} parent=11 // pred_region
          _
        $region16: #{_lambda_.4} parent=11 // pred_fallthru
          _
        // Predicated region
        $region17: #{_lambda_.4} parent=11 // pred_check
          %p341 = pneg %p127
        $region18: #{_lambda_.4} parent=11 // pred_check_branch
          %343 = sbr.rel (%p341) target = $region20
        $region19: #{_lambda_.4} parent=11 // pred_region
          _
        $region20: #{_lambda_.4} parent=11 // pred_fallthru
          _
        // Predicated region
        $region21: #{_lambda_.4} parent=11 // pred_check
          %p344 = pneg %p148
        $region22: #{_lambda_.4} parent=11 // pred_check_branch
          %346 = sbr.rel (%p344) target = $region24
        $region23: #{_lambda_.4} parent=11 // pred_region
          _
        $region24: #{_lambda_.4} parent=11 // pred_fallthru
          _
        // Predicated region
        $region25: #{_lambda_.4} parent=11 // pred_check
          %p347 = pneg %p169
        $region26: #{_lambda_.4} parent=11 // pred_check_branch
          %349 = sbr.rel (%p347) target = $region28
        $region27: #{_lambda_.4} parent=11 // pred_region
          _
        $region28: #{_lambda_.4} parent=11 // pred_fallthru
          _
        // Predicated region
        $region29: #{_lambda_.4} parent=11 // pred_check
          %p350 = pneg %p190
        $region30: #{_lambda_.4} parent=11 // pred_check_branch
          %352 = sbr.rel (%p350) target = $region32
        $region31: #{_lambda_.4} parent=11 // pred_region
          _
        $region32: #{_lambda_.4} parent=11 // pred_fallthru
          _
        // Predicated region
        $region33: #{_lambda_.4} parent=11 // pred_check
          %p353 = pneg %p211
        $region34: #{_lambda_.4} parent=11 // pred_check_branch
          %355 = sbr.rel (%p353) target = $region36
        $region35: #{_lambda_.4} parent=11 // pred_region
          _
        $region36: #{_lambda_.4} parent=11 // pred_fallthru
          _
        // Predicated region
        $region37: #{_lambda_.4} parent=11 // pred_check
          %p356 = pneg %p232
        $region38: #{_lambda_.4} parent=11 // pred_check_branch
          %358 = sbr.rel (%p356) target = $region40
        $region39: #{_lambda_.4} parent=11 // pred_region
          _
        $region40: #{_lambda_.4} parent=11 // pred_fallthru
          _
        // Predicated region
        $region41: #{_lambda_.4} parent=11 // pred_check
          %p359 = pneg %p253
        $region42: #{_lambda_.4} parent=11 // pred_check_branch
          %361 = sbr.rel (%p359) target = $region44
        $region43: #{_lambda_.4} parent=11 // pred_region
          _
        $region44: #{_lambda_.4} parent=11 // pred_fallthru
          _
        // Predicated region
        $region45: #{_lambda_.4} parent=11 // pred_check
          %p362 = pneg %p274
        $region46: #{_lambda_.4} parent=11 // pred_check_branch
          %364 = sbr.rel (%p362) target = $region48
        $region47: #{_lambda_.4} parent=11 // pred_region
          _
        $region48: #{_lambda_.4} parent=11 // pred_fallthru
          _
        // Predicated region
        $region49: #{_lambda_.4} parent=11 // pred_check
          %p365 = pneg %p295
        $region50: #{_lambda_.4} parent=11 // pred_check_branch
          %367 = sbr.rel (%p365) target = $region52
        $region51: #{_lambda_.4} parent=11 // pred_region
          _
        $region52: #{_lambda_.4} parent=11 // pred_fallthru
          _
      $region12: #{_lambda_.4} parent=5 // pred_fallthru
        _
      %p368 = scmp.lt.s32.totalorder %s21, 2
      // Predicated region
      $region53: #{_lambda_.4} parent=5 // pred_check
        %p369 = pneg %p368
      $region54: #{_lambda_.4} parent=5 // pred_check_branch
        %371 = sbr.rel (%p369) target = $region56
      $region55: #{_lambda_.4} parent=5 // pred_region
        // Predicated region
        $region57: #{_lambda_.4} parent=55 // pred_check
          %p372 = pneg %p53
        $region58: #{_lambda_.4} parent=55 // pred_check_branch
          %374 = sbr.rel (%p372) target = $region60
        $region59: #{_lambda_.4} parent=55 // pred_region
          %p375 = scmp.lt.s32.totalorder %s28, 1
          %s376 = scalar_select %p375, %s28, 1
          %s377 = smul.addr %s376, 8
          %s378 = scalar_lea.vmem %s0, %s377
        $region60: #{_lambda_.4} parent=55 // pred_fallthru
          _
        // Predicated region
        $region61: #{_lambda_.4} parent=55 // pred_check
          %p379 = pneg %p79
        $region62: #{_lambda_.4} parent=55 // pred_check_branch
          %381 = sbr.rel (%p379) target = $region64
        $region63: #{_lambda_.4} parent=55 // pred_region
          %s382 = sand.u32 %s69, 1
          %s383 = scalar_lea.sflag [#allocation8], %s382
          %s384 = sand.u32 %s69, 1
          %s385 = scalar_lea.vmem [#allocation7], %s384
          %s387 = ssub.s32 16, 16
          %388 = vsyncadd %s383, %s387
          %s389 = smul.addr %s28, 16
          %s390 = scalar_lea.hbm %s1, %s389
          %s392 = sshll.u32 %s385, 4
          %s393 = int_to_ptr.vmem [resolvable:$true] %s392
          %395 = dma.hbm_to_vmem [thread:$0]  %s390, 16, %s393, %s383
        $region64: #{_lambda_.4} parent=55 // pred_fallthru
          _
      $region56: #{_lambda_.4} parent=5 // pred_fallthru
        _
      %p396 = scmp.le.s32.totalorder 1, %s21
      %p397 = scmp.lt.s32.totalorder %s21, 3
      %p398 = pnand %p396, %p397
      %p399 = pneg %p398
      // Predicated region
      $region65: #{_lambda_.4} parent=5 // pred_check
        _
      $region66: #{_lambda_.4} parent=5 // pred_check_branch
        %401 = sbr.rel (%p398) target = $region68
      $region67: #{_lambda_.4} parent=5 // pred_region
        %s402 = ssub.s32 %s21, 1
        %s403 = sand.u32 %s72, 1
        %s404 = scalar_lea.sflag [#allocation8], %s403
        %s405 = sand.u32 %s72, 1
        %s406 = scalar_lea.vmem [#allocation7], %s405
        // Predicated region
        $region69: #{_lambda_.4} parent=67 // pred_check
          %p407 = pneg %p85
        $region70: #{_lambda_.4} parent=67 // pred_check_branch
          %409 = sbr.rel (%p407) target = $region72
        $region71: #{_lambda_.4} parent=67 // pred_region
          %410 = dma.done %s404, 16
        $region72: #{_lambda_.4} parent=67 // pred_fallthru
          _
        %p411 = scmp.lt.s32.totalorder %s30, 1
        %s412 = scalar_select %p411, %s30, 1
        %s413 = smul.addr %s412, 8
        %s414 = scalar_lea.vmem %s0, %s413
        %p415 = pneg %p59
        %p416 = pneg %p56
        %s417 = sand.u32 %s72, 1
        %s418 = scalar_lea.sflag [#allocation8], %s417
        %s419 = sand.u32 %s72, 1
        %s420 = scalar_lea.vmem [#allocation7], %s419
        %p421 = pneg %p85
        %p422 = pneg %p82
        %p423 = pneg %p106
        %p424 = pneg %p103
        %p425 = pneg %p127
        %p426 = pneg %p124
        %p427 = pneg %p148
        %p428 = pneg %p145
        %p429 = pneg %p169
        %p430 = pneg %p166
        %p431 = pneg %p190
        %p432 = pneg %p187
        %p433 = pneg %p211
        %p434 = pneg %p208
        %p435 = pneg %p232
        %p436 = pneg %p229
        %p437 = pneg %p253
        %p438 = pneg %p250
        %p439 = pneg %p274
        %p440 = pneg %p271
        %p441 = pneg %p295
        %p442 = pneg %p292
        %p443 = pneg %p323
        %p444 = pneg %p320
        %p445 = scmp.lt.s32.totalorder %s30, 1
        %s446 = scalar_select %p445, %s30, 1
        %p447 = scmp.lt.s32.totalorder %s31, 0
        %s448 = scalar_select %p447, %s31, 0
        %s449 = sadd.s32 %s448, %s446
        %s450 = smul.addr %s449, 8
        %s451 = scalar_lea.vmem %s12, %s450
        %p452 = scmp.lt.s32.totalorder %s30, 1
        %s453 = scalar_select %p452, %s30, 1
        %s454 = smul.addr %s453, 8
        %s455 = scalar_lea.vmem %s0, %s454
        %p456 = scmp.lt.s32.totalorder %s30, 1
        %s457 = scalar_select %p456, %s30, 1
        %p458 = scmp.lt.s32.totalorder %s31, 0
        %s459 = scalar_select %p458, %s31, 0
        %s460 = sadd.s32 %s459, %s457
        %s461 = smul.addr %s460, 8
        %s462 = scalar_lea.vmem %s12, %s461
        %s464 = smul.u32 %s31, 8
        %v465 = vld [vmem:[%s455] sm:$0xff]
        %vm466 = vcmask 261120
        %v467 = vsel %vm466, %v465, 0.0
        %468 = vadd.xlane.f32.xlu0 %v467
        %v469 = vpop.xlane.xlu0 %468
        %v470 = vrcp.pop 32.0
        %v471 = vmul.f32 %v469, %v470
        %v472 = vsub.f32 %v465, %v471
        %v473 = vmul.f32 %v472, %v472
        %v474 = vsel %vm466, %v473, 0.0
        %475 = vadd.xlane.f32.xlu0 %v474
        %v476 = vpop.xlane.xlu0 %475
        %v477 = vmul.f32 %v476, 0.032258064
        %v478 = vrsqrt.pop %v477
        %v479 = vmul.f32 %v477, %v478
        %vm480 = vcmp.eq.f32.partialorder %v477, inf
        %v481 = vsel %vm480, %v477, %v479
        %vm482 = vcmp.eq.f32.partialorder %v477, 0.0
        %v483 = vand.u32 %v477, 2147483648
        %v484 = vsel %vm482, %v483, %v481
        %v485 = vadd.f32 %v484, 1e-06
        %v486 = vrcp.pop %v485
        %v487 = vmul.f32 1.0, %v486
        %v488 = vld [vmem:[%s2] sm:$0x1]
        %v490 = vlaneseq
        %v491 = vshrl.u32 %v490, 7
        %v492 = vsub.s32 0, %v491
        %v493 = vrot.slane %v488, %v492
        %v495 = vmul.f32 %v493, %v472
        %v496 = vmul.f32 %v495, %v487
        %v497 = vld [vmem:[%s3] sm:$0x1]
        %v499 = vlaneseq
        %v500 = vshrl.u32 %v499, 7
        %v501 = vsub.s32 0, %v500
        %v502 = vrot.slane %v497, %v501
        %v504 = vadd.f32 %v496, %v502
        %v505 = vpack.c.bf16 %v504, %v504
        %vm506 = vcmask 257024
        %507 = vst.msk [vmem:[#allocation2] sm:$0xf] %vm506, %v505
        %v508 = vld [vmem:[%s6] sm:$0xf]
        %v509 = vld [vmem:[%s6 + $0x4] sm:$0xf]
        %v510 = vld [vmem:[%s6 + $0x8] sm:$0xf]
        %v511 = vld [vmem:[%s6 + $0xc] sm:$0xf]
        %v512 = vld [vmem:[%s7] sm:$0x1]
        %v514 = vlaneseq
        %v515 = vshrl.u32 %v514, 7
        %v516 = vsub.s32 0, %v515
        %v517 = vrot.slane %v512, %v516
        %v523 = vunpack.c.l.b16 %v508
        %v524 = vunpack.c.l.b16 %v509
        %v525 = vunpack.c.l.b16 %v510
        %v526 = vunpack.c.l.b16 %v511
        %v527 = vpack.c.b16 %v524, %v523
        %v528 = vpack.c.b16 %v526, %v525
        %v532 = vsel %vm466, %v505, 0
        %534 = vmatprep.subr.bf16.mxu0 0
        %535 = vmatpush1.bf16.msra.mxu0 %v527
        %536 = vmatprep.subr.bf16.mxu0 0
        %537 = vmatpush1.bf16.msra.mxu0 %v528
        %538 = vmatprep.subr.bf16.mxu0 0
        %539 = vmatpush1.bf16.msra.mxu0 0
        %540 = vmatprep.subr.bf16.mxu0 0
        %541 = vmatpush1.bf16.msra.mxu0 0
        %542 = vmatprep.subr.bf16.mxu0 0
        %543 = vmatpush1.bf16.msra.mxu0 0
        %544 = vmatprep.subr.bf16.mxu0 0
        %545 = vmatpush1.bf16.msra.mxu0 0
        %546 = vmatprep.subr.bf16.mxu0 0
        %547 = vmatpush1.bf16.msra.mxu0 0
        %548 = vmatprep.subr.bf16.mxu0 0
        %549 = vmatpush1.bf16.msra.mxu0 0
        %550 = vmatprep.subr.bf16.mxu0 0
        %551 = vmatpush1.bf16.msra.mxu0 0
        %552 = vmatprep.subr.bf16.mxu0 0
        %553 = vmatpush1.bf16.msra.mxu0 0
        %554 = vmatprep.subr.bf16.mxu0 0
        %555 = vmatpush1.bf16.msra.mxu0 0
        %556 = vmatprep.subr.bf16.mxu0 0
        %557 = vmatpush1.bf16.msra.mxu0 0
        %558 = vmatprep.subr.bf16.mxu0 0
        %559 = vmatpush1.bf16.msra.mxu0 0
        %560 = vmatprep.subr.bf16.mxu0 0
        %561 = vmatpush1.bf16.msra.mxu0 0
        %562 = vmatprep.subr.bf16.mxu0 0
        %563 = vmatpush1.bf16.msra.mxu0 0
        %564 = vmatprep.subr.bf16.mxu0 0
        %565 = vmatpush1.bf16.msra.mxu0 0
        %566 = vmatprep.mubr.bf16.mxu0 0
        %567 = vmatmul.mubr.bf16.gmra.mrb[0].mxu0 %v532
        %v568 = vpop.f32.mrb[0].mxu0
        %v569 = vadd.f32 %v517, %v568
        %v570 = vpop.f32.mrb[0].mxu0
        %v571 = vpop.f32.mrb[0].mxu0
        %v572 = vpop.f32.mrb[0].mxu0
        %573 = vdwg.mxu0
        %v574 = vpack.c.bf16 %v569, %v569
        %575 = vst.msk [vmem:[#allocation4] sm:$0xf] %vm506, %v574
        %v576 = vld [vmem:[%s8] sm:$0xf]
        %v577 = vld [vmem:[%s8 + $0x4] sm:$0xf]
        %v578 = vld [vmem:[%s8 + $0x8] sm:$0xf]
        %v579 = vld [vmem:[%s8 + $0xc] sm:$0xf]
        %v580 = vld [vmem:[%s9] sm:$0x1]
        %v582 = vlaneseq
        %v583 = vshrl.u32 %v582, 7
        %v584 = vsub.s32 0, %v583
        %v585 = vrot.slane %v580, %v584
        %v591 = vunpack.c.l.b16 %v576
        %v592 = vunpack.c.l.b16 %v577
        %v593 = vunpack.c.l.b16 %v578
        %v594 = vunpack.c.l.b16 %v579
        %v595 = vpack.c.b16 %v592, %v591
        %v596 = vpack.c.b16 %v594, %v593
        %599 = vmatprep.subr.bf16.mxu0 0
        %600 = vmatpush1.bf16.msra.mxu0 %v595
        %601 = vmatprep.subr.bf16.mxu0 0
        %602 = vmatpush1.bf16.msra.mxu0 %v596
        %603 = vmatprep.subr.bf16.mxu0 0
        %604 = vmatpush1.bf16.msra.mxu0 0
        %605 = vmatprep.subr.bf16.mxu0 0
        %606 = vmatpush1.bf16.msra.mxu0 0
        %607 = vmatprep.subr.bf16.mxu0 0
        %608 = vmatpush1.bf16.msra.mxu0 0
        %609 = vmatprep.subr.bf16.mxu0 0
        %610 = vmatpush1.bf16.msra.mxu0 0
        %611 = vmatprep.subr.bf16.mxu0 0
        %612 = vmatpush1.bf16.msra.mxu0 0
        %613 = vmatprep.subr.bf16.mxu0 0
        %614 = vmatpush1.bf16.msra.mxu0 0
        %615 = vmatprep.subr.bf16.mxu0 0
        %616 = vmatpush1.bf16.msra.mxu0 0
        %617 = vmatprep.subr.bf16.mxu0 0
        %618 = vmatpush1.bf16.msra.mxu0 0
        %619 = vmatprep.subr.bf16.mxu0 0
        %620 = vmatpush1.bf16.msra.mxu0 0
        %621 = vmatprep.subr.bf16.mxu0 0
        %622 = vmatpush1.bf16.msra.mxu0 0
        %623 = vmatprep.subr.bf16.mxu0 0
        %624 = vmatpush1.bf16.msra.mxu0 0
        %625 = vmatprep.subr.bf16.mxu0 0
        %626 = vmatpush1.bf16.msra.mxu0 0
        %627 = vmatprep.subr.bf16.mxu0 0
        %628 = vmatpush1.bf16.msra.mxu0 0
        %629 = vmatprep.subr.bf16.mxu0 0
        %630 = vmatpush1.bf16.msra.mxu0 0
        %631 = vmatprep.mubr.bf16.mxu0 0
        %632 = vmatmul.mubr.bf16.gmra.mrb[0].mxu0 %v532
        %v633 = vpop.f32.mrb[0].mxu0
        %v634 = vadd.f32 %v585, %v633
        %v635 = vpop.f32.mrb[0].mxu0
        %v636 = vpop.f32.mrb[0].mxu0
        %v637 = vpop.f32.mrb[0].mxu0
        %638 = vdwg.mxu0
        %v639 = vpack.c.bf16 %v634, %v634
        %640 = vst.msk [vmem:[#allocation5] sm:$0xf] %vm506, %v639
        %s641 = sshra.s32 %s464, 3
        %s642 = sand.u32 %s464, 7
        %s643 = smul.addr %s641, 4
        %s644 = scalar_lea.vmem [#allocation2], %s643
        %v645 = vld [vmem:[%s644] sm:$0xf]
        %v646 = vld [vmem:[%s4] sm:$0xf]
        %v647 = vld [vmem:[%s4 + $0x4] sm:$0xf]
        %v648 = vld [vmem:[%s4 + $0x8] sm:$0xf]
        %v649 = vld [vmem:[%s4 + $0xc] sm:$0xf]
        %v650 = vld [vmem:[%s5] sm:$0x1]
        %v652 = vlaneseq
        %v653 = vshrl.u32 %v652, 7
        %v654 = vsub.s32 0, %v653
        %v655 = vrot.slane %v650, %v654
        %v661 = vunpack.c.l.b16 %v646
        %v662 = vunpack.c.l.b16 %v647
        %v663 = vunpack.c.l.b16 %v648
        %v664 = vunpack.c.l.b16 %v649
        %v665 = vpack.c.b16 %v662, %v661
        %v666 = vpack.c.b16 %v664, %v663
        %v670 = vsel %vm466, %v645, 0
        %672 = vmatprep.subr.bf16.mxu0 0
        %673 = vmatpush1.bf16.msra.mxu0 %v665
        %674 = vmatprep.subr.bf16.mxu0 0
        %675 = vmatpush1.bf16.msra.mxu0 %v666
        %676 = vmatprep.subr.bf16.mxu0 0
        %677 = vmatpush1.bf16.msra.mxu0 0
        %678 = vmatprep.subr.bf16.mxu0 0
        %679 = vmatpush1.bf16.msra.mxu0 0
        %680 = vmatprep.subr.bf16.mxu0 0
        %681 = vmatpush1.bf16.msra.mxu0 0
        %682 = vmatprep.subr.bf16.mxu0 0
        %683 = vmatpush1.bf16.msra.mxu0 0
        %684 = vmatprep.subr.bf16.mxu0 0
        %685 = vmatpush1.bf16.msra.mxu0 0
        %686 = vmatprep.subr.bf16.mxu0 0
        %687 = vmatpush1.bf16.msra.mxu0 0
        %688 = vmatprep.subr.bf16.mxu0 0
        %689 = vmatpush1.bf16.msra.mxu0 0
        %690 = vmatprep.subr.bf16.mxu0 0
        %691 = vmatpush1.bf16.msra.mxu0 0
        %692 = vmatprep.subr.bf16.mxu0 0
        %693 = vmatpush1.bf16.msra.mxu0 0
        %694 = vmatprep.subr.bf16.mxu0 0
        %695 = vmatpush1.bf16.msra.mxu0 0
        %696 = vmatprep.subr.bf16.mxu0 0
        %697 = vmatpush1.bf16.msra.mxu0 0
        %698 = vmatprep.subr.bf16.mxu0 0
        %699 = vmatpush1.bf16.msra.mxu0 0
        %700 = vmatprep.subr.bf16.mxu0 0
        %701 = vmatpush1.bf16.msra.mxu0 0
        %702 = vmatprep.subr.bf16.mxu0 0
        %703 = vmatpush1.bf16.msra.mxu0 0
        %704 = vmatprep.mubr.bf16.mxu0 0
        %705 = vmatmul.mubr.bf16.gmra.mrb[0].mxu0 %v670
        %v706 = vpop.f32.mrb[0].mxu0
        %v707 = vadd.f32 %v655, %v706
        %v708 = vpop.f32.mrb[0].mxu0
        %v709 = vpop.f32.mrb[0].mxu0
        %v710 = vpop.f32.mrb[0].mxu0
        %711 = vdwg.mxu0
        %v712 = vpack.c.bf16 %v707, %v707
        %713 = vst.msk [vmem:[#allocation3] sm:$0xf] %vm506, %v712
        %v714 = vld [vmem:[%s406] sm:$0x1]
        %vm715 = vcmp.eq.f32.partialorder %v714, 0.0
        %v716 = vsel %vm715, -1e+09, 0.0
        %v717 = vld [vmem:[#allocation3] sm:$0xf]
        %v718 = vld [vmem:[#allocation4] sm:$0xf]
        %v719 = vld [vmem:[#allocation5] sm:$0xf]
        %vm720 = vcmask 64512
        %v722 = vsel %vm720, %v717, 0
        %v725 = vsel %vm720, %v718, 0
        %727 = vmatprep.subr.bf16.mxu0 0
        %728 = vmatpush1.bf16.xpose.msra.mxu0 %v725
        %729 = vmatprep.subr.bf16.mxu0 0
        %730 = vmatpush1.bf16.xpose.msra.mxu0 0
        %731 = vmatprep.subr.bf16.mxu0 0
        %732 = vmatpush1.bf16.xpose.msra.mxu0 0
        %733 = vmatprep.subr.bf16.mxu0 0
        %734 = vmatpush1.bf16.xpose.msra.mxu0 0
        %735 = vmatprep.subr.bf16.mxu0 0
        %736 = vmatpush1.bf16.xpose.msra.mxu0 0
        %737 = vmatprep.subr.bf16.mxu0 0
        %738 = vmatpush1.bf16.xpose.msra.mxu0 0
        %739 = vmatprep.subr.bf16.mxu0 0
        %740 = vmatpush1.bf16.xpose.msra.mxu0 0
        %741 = vmatprep.subr.bf16.mxu0 0
        %742 = vmatpush1.bf16.xpose.msra.mxu0 0
        %743 = vmatprep.subr.bf16.mxu0 0
        %744 = vmatpush1.bf16.xpose.msra.mxu0 0
        %745 = vmatprep.subr.bf16.mxu0 0
        %746 = vmatpush1.bf16.xpose.msra.mxu0 0
        %747 = vmatprep.subr.bf16.mxu0 0
        %748 = vmatpush1.bf16.xpose.msra.mxu0 0
        %749 = vmatprep.subr.bf16.mxu0 0
        %750 = vmatpush1.bf16.xpose.msra.mxu0 0
        %751 = vmatprep.subr.bf16.mxu0 0
        %752 = vmatpush1.bf16.xpose.msra.mxu0 0
        %753 = vmatprep.subr.bf16.mxu0 0
        %754 = vmatpush1.bf16.xpose.msra.mxu0 0
        %755 = vmatprep.subr.bf16.mxu0 0
        %756 = vmatpush1.bf16.xpose.msra.mxu0 0
        %757 = vmatprep.subr.bf16.mxu0 0
        %758 = vmatpush1.bf16.xpose.msra.mxu0 0
        %759 = vmatprep.mubr.bf16.mxu0 0
        %760 = vmatmul.mubr.bf16.gmra.mrb[0].mxu0 %v722
        %v761 = vpop.f32.mrb[0].mxu0
        %v762 = vadd.f32 0.0, %v761
        %v763 = vpop.f32.mrb[0].mxu0
        %v764 = vpop.f32.mrb[0].mxu0
        %v765 = vpop.f32.mrb[0].mxu0
        %766 = vdwg.mxu0
        %v767 = vmul.f32 %v762, 0.35355338
        %v769 = vlaneseq
        %v770 = vshrl.u32 %v769, 7
        %v771 = vsub.s32 0, %v770
        %v772 = vrot.slane %v716, %v771
        %v774 = vadd.f32 %v767, %v772
        %v775 = vsel %vm720, %v774, -inf
        %776 = vmax.xlane.f32.xlu0 %v775
        %v777 = vpop.xlane.xlu0 %776
        %v778 = vsub.f32 %v774, %v777
        %v779 = vmul.f32 %v778, 1.442695
        %v780 = vpow.pop %v779
        %v781 = vsel %vm720, %v780, 0.0
        %782 = vadd.xlane.f32.xlu0 %v781
        %v783 = vpop.xlane.xlu0 %782
        %v784 = vrcp.pop %v783
        %v785 = vmul.f32 %v780, %v784
        %v786 = vpack.c.bf16 %v785, %v785
        %v788 = vsel %vm720, %v786, 0
        %vm790 = vcmask 1043456
        %v792 = vsel %vm790, %v719, 0
        %794 = vmatprep.subr.bf16.mxu0 0
        %795 = vmatpush1.bf16.msra.mxu0 %v792
        %796 = vmatprep.subr.bf16.mxu0 0
        %797 = vmatpush1.bf16.msra.mxu0 0
        %798 = vmatprep.subr.bf16.mxu0 0
        %799 = vmatpush1.bf16.msra.mxu0 0
        %800 = vmatprep.subr.bf16.mxu0 0
        %801 = vmatpush1.bf16.msra.mxu0 0
        %802 = vmatprep.subr.bf16.mxu0 0
        %803 = vmatpush1.bf16.msra.mxu0 0
        %804 = vmatprep.subr.bf16.mxu0 0
        %805 = vmatpush1.bf16.msra.mxu0 0
        %806 = vmatprep.subr.bf16.mxu0 0
        %807 = vmatpush1.bf16.msra.mxu0 0
        %808 = vmatprep.subr.bf16.mxu0 0
        %809 = vmatpush1.bf16.msra.mxu0 0
        %810 = vmatprep.subr.bf16.mxu0 0
        %811 = vmatpush1.bf16.msra.mxu0 0
        %812 = vmatprep.subr.bf16.mxu0 0
        %813 = vmatpush1.bf16.msra.mxu0 0
        %814 = vmatprep.subr.bf16.mxu0 0
        %815 = vmatpush1.bf16.msra.mxu0 0
        %816 = vmatprep.subr.bf16.mxu0 0
        %817 = vmatpush1.bf16.msra.mxu0 0
        %818 = vmatprep.subr.bf16.mxu0 0
        %819 = vmatpush1.bf16.msra.mxu0 0
        %820 = vmatprep.subr.bf16.mxu0 0
        %821 = vmatpush1.bf16.msra.mxu0 0
        %822 = vmatprep.subr.bf16.mxu0 0
        %823 = vmatpush1.bf16.msra.mxu0 0
        %824 = vmatprep.subr.bf16.mxu0 0
        %825 = vmatpush1.bf16.msra.mxu0 0
        %826 = vmatprep.mubr.bf16.mxu0 0
        %827 = vmatmul.mubr.bf16.gmra.mrb[0].mxu0 %v788
        %v828 = vpop.f32.mrb[0].mxu0
        %v829 = vadd.f32 0.0, %v828
        %v830 = vpop.f32.mrb[0].mxu0
        %v831 = vpop.f32.mrb[0].mxu0
        %v832 = vpop.f32.mrb[0].mxu0
        %833 = vdwg.mxu0
        %834 = vst.msk [vmem:[#allocation6] sm:$0xff] %vm720, %v829
        %v835 = vld [vmem:[#allocation3] sm:$0xf]
        %v836 = vld [vmem:[#allocation4] sm:$0xf]
        %v837 = vld [vmem:[#allocation5] sm:$0xf]
        %v839 = vunpack.c.l.b16 %v835
        %v840 = vpack.c.b16 %v839, %v839
        %841 = vrot.lane.b32.xlu0 %v840, 120
        %v842 = vpop.permute.xlu0 %841
        %v844 = vunpack.c.l.b16 %v836
        %v845 = vpack.c.b16 %v844, %v844
        %846 = vrot.lane.b32.xlu0 %v845, 120
        %v847 = vpop.permute.xlu0 %846
        %v849 = vsel %vm720, %v842, 0
        %v852 = vsel %vm720, %v847, 0
        %854 = vmatprep.subr.bf16.mxu0 0
        %855 = vmatpush1.bf16.xpose.msra.mxu0 %v852
        %856 = vmatprep.subr.bf16.mxu0 0
        %857 = vmatpush1.bf16.xpose.msra.mxu0 0
        %858 = vmatprep.subr.bf16.mxu0 0
        %859 = vmatpush1.bf16.xpose.msra.mxu0 0
        %860 = vmatprep.subr.bf16.mxu0 0
        %861 = vmatpush1.bf16.xpose.msra.mxu0 0
        %862 = vmatprep.subr.bf16.mxu0 0
        %863 = vmatpush1.bf16.xpose.msra.mxu0 0
        %864 = vmatprep.subr.bf16.mxu0 0
        %865 = vmatpush1.bf16.xpose.msra.mxu0 0
        %866 = vmatprep.subr.bf16.mxu0 0
        %867 = vmatpush1.bf16.xpose.msra.mxu0 0
        %868 = vmatprep.subr.bf16.mxu0 0
        %869 = vmatpush1.bf16.xpose.msra.mxu0 0
        %870 = vmatprep.subr.bf16.mxu0 0
        %871 = vmatpush1.bf16.xpose.msra.mxu0 0
        %872 = vmatprep.subr.bf16.mxu0 0
        %873 = vmatpush1.bf16.xpose.msra.mxu0 0
        %874 = vmatprep.subr.bf16.mxu0 0
        %875 = vmatpush1.bf16.xpose.msra.mxu0 0
        %876 = vmatprep.subr.bf16.mxu0 0
        %877 = vmatpush1.bf16.xpose.msra.mxu0 0
        %878 = vmatprep.subr.bf16.mxu0 0
        %879 = vmatpush1.bf16.xpose.msra.mxu0 0
        %880 = vmatprep.subr.bf16.mxu0 0
        %881 = vmatpush1.bf16.xpose.msra.mxu0 0
        %882 = vmatprep.subr.bf16.mxu0 0
        %883 = vmatpush1.bf16.xpose.msra.mxu0 0
        %884 = vmatprep.subr.bf16.mxu0 0
        %885 = vmatpush1.bf16.xpose.msra.mxu0 0
        %886 = vmatprep.mubr.bf16.mxu0 0
        %887 = vmatmul.mubr.bf16.gmra.mrb[0].mxu0 %v849
        %v888 = vpop.f32.mrb[0].mxu0
        %v889 = vadd.f32 0.0, %v888
        %v890 = vpop.f32.mrb[0].mxu0
        %v891 = vpop.f32.mrb[0].mxu0
        %v892 = vpop.f32.mrb[0].mxu0
        %893 = vdwg.mxu0
        %v894 = vmul.f32 %v889, 0.35355338
        %v895 = vadd.f32 %v894, %v772
        %v896 = vsel %vm720, %v895, -inf
        %897 = vmax.xlane.f32.xlu0 %v896
        %v898 = vpop.xlane.xlu0 %897
        %v899 = vsub.f32 %v895, %v898
        %v900 = vmul.f32 %v899, 1.442695
        %v901 = vpow.pop %v900
        %v902 = vsel %vm720, %v901, 0.0
        %903 = vadd.xlane.f32.xlu0 %v902
        %v904 = vpop.xlane.xlu0 %903
        %v905 = vrcp.pop %v904
        %v906 = vmul.f32 %v901, %v905
        %v907 = vpack.c.bf16 %v906, %v906
        %v909 = vunpack.c.l.b16 %v837
        %v910 = vpack.c.b16 %v909, %v909
        %911 = vrot.lane.b32.xlu0 %v910, 120
        %v912 = vpop.permute.xlu0 %911
        %v914 = vsel %vm720, %v907, 0
        %v917 = vsel %vm790, %v912, 0
        %919 = vmatprep.subr.bf16.mxu0 0
        %920 = vmatpush1.bf16.msra.mxu0 %v917
        %921 = vmatprep.subr.bf16.mxu0 0
        %922 = vmatpush1.bf16.msra.mxu0 0
        %923 = vmatprep.subr.bf16.mxu0 0
        %924 = vmatpush1.bf16.msra.mxu0 0
        %925 = vmatprep.subr.bf16.mxu0 0
        %926 = vmatpush1.bf16.msra.mxu0 0
        %927 = vmatprep.subr.bf16.mxu0 0
        %928 = vmatpush1.bf16.msra.mxu0 0
        %929 = vmatprep.subr.bf16.mxu0 0
        %930 = vmatpush1.bf16.msra.mxu0 0
        %931 = vmatprep.subr.bf16.mxu0 0
        %932 = vmatpush1.bf16.msra.mxu0 0
        %933 = vmatprep.subr.bf16.mxu0 0
        %934 = vmatpush1.bf16.msra.mxu0 0
        %935 = vmatprep.subr.bf16.mxu0 0
        %936 = vmatpush1.bf16.msra.mxu0 0
        %937 = vmatprep.subr.bf16.mxu0 0
        %938 = vmatpush1.bf16.msra.mxu0 0
        %939 = vmatprep.subr.bf16.mxu0 0
        %940 = vmatpush1.bf16.msra.mxu0 0
        %941 = vmatprep.subr.bf16.mxu0 0
        %942 = vmatpush1.bf16.msra.mxu0 0
        %943 = vmatprep.subr.bf16.mxu0 0
        %944 = vmatpush1.bf16.msra.mxu0 0
        %945 = vmatprep.subr.bf16.mxu0 0
        %946 = vmatpush1.bf16.msra.mxu0 0
        %947 = vmatprep.subr.bf16.mxu0 0
        %948 = vmatpush1.bf16.msra.mxu0 0
        %949 = vmatprep.subr.bf16.mxu0 0
        %950 = vmatpush1.bf16.msra.mxu0 0
        %951 = vmatprep.mubr.bf16.mxu0 0
        %952 = vmatmul.mubr.bf16.gmra.mrb[0].mxu0 %v914
        %v953 = vpop.f32.mrb[0].mxu0
        %v954 = vadd.f32 0.0, %v953
        %v955 = vpop.f32.mrb[0].mxu0
        %v956 = vpop.f32.mrb[0].mxu0
        %v957 = vpop.f32.mrb[0].mxu0
        %958 = vdwg.mxu0
        %960 = vrot.lane.b32.xlu0 %v954, 8
        %v961 = vpop.permute.xlu0 %960
        %vm963 = vcmask 130112
        %964 = vst.msk [vmem:[#allocation6] sm:$0xff] %vm963, %v961
        %v965 = vld [vmem:[#allocation3] sm:$0xf]
        %v966 = vld [vmem:[#allocation4] sm:$0xf]
        %v967 = vld [vmem:[#allocation5] sm:$0xf]
        %v969 = vunpack.c.l.b16 %v965
        %v970 = vpack.c.b16 %v969, %v969
        %971 = vrot.lane.b32.xlu0 %v970, 112
        %v972 = vpop.permute.xlu0 %971
        %v974 = vunpack.c.l.b16 %v966
        %v975 = vpack.c.b16 %v974, %v974
        %976 = vrot.lane.b32.xlu0 %v975, 112
        %v977 = vpop.permute.xlu0 %976
        %v979 = vsel %vm720, %v972, 0
        %v982 = vsel %vm720, %v977, 0
        %984 = vmatprep.subr.bf16.mxu0 0
        %985 = vmatpush1.bf16.xpose.msra.mxu0 %v982
        %986 = vmatprep.subr.bf16.mxu0 0
        %987 = vmatpush1.bf16.xpose.msra.mxu0 0
        %988 = vmatprep.subr.bf16.mxu0 0
        %989 = vmatpush1.bf16.xpose.msra.mxu0 0
        %990 = vmatprep.subr.bf16.mxu0 0
        %991 = vmatpush1.bf16.xpose.msra.mxu0 0
        %992 = vmatprep.subr.bf16.mxu0 0
        %993 = vmatpush1.bf16.xpose.msra.mxu0 0
        %994 = vmatprep.subr.bf16.mxu0 0
        %995 = vmatpush1.bf16.xpose.msra.mxu0 0
        %996 = vmatprep.subr.bf16.mxu0 0
        %997 = vmatpush1.bf16.xpose.msra.mxu0 0
        %998 = vmatprep.subr.bf16.mxu0 0
        %999 = vmatpush1.bf16.xpose.msra.mxu0 0
        %1000 = vmatprep.subr.bf16.mxu0 0
        %1001 = vmatpush1.bf16.xpose.msra.mxu0 0
        %1002 = vmatprep.subr.bf16.mxu0 0
        %1003 = vmatpush1.bf16.xpose.msra.mxu0 0
        %1004 = vmatprep.subr.bf16.mxu0 0
        %1005 = vmatpush1.bf16.xpose.msra.mxu0 0
        %1006 = vmatprep.subr.bf16.mxu0 0
        %1007 = vmatpush1.bf16.xpose.msra.mxu0 0
        %1008 = vmatprep.subr.bf16.mxu0 0
        %1009 = vmatpush1.bf16.xpose.msra.mxu0 0
        %1010 = vmatprep.subr.bf16.mxu0 0
        %1011 = vmatpush1.bf16.xpose.msra.mxu0 0
        %1012 = vmatprep.subr.bf16.mxu0 0
        %1013 = vmatpush1.bf16.xpose.msra.mxu0 0
        %1014 = vmatprep.subr.bf16.mxu0 0
        %1015 = vmatpush1.bf16.xpose.msra.mxu0 0
        %1016 = vmatprep.mubr.bf16.mxu0 0
        %1017 = vmatmul.mubr.bf16.gmra.mrb[0].mxu0 %v979
        %v1018 = vpop.f32.mrb[0].mxu0
        %v1019 = vadd.f32 0.0, %v1018
        %v1020 = vpop.f32.mrb[0].mxu0
        %v1021 = vpop.f32.mrb[0].mxu0
        %v1022 = vpop.f32.mrb[0].mxu0
        %1023 = vdwg.mxu0
        %v1024 = vmul.f32 %v1019, 0.35355338
        %v1025 = vadd.f32 %v1024, %v772
        %v1026 = vsel %vm720, %v1025, -inf
        %1027 = vmax.xlane.f32.xlu0 %v1026
        %v1028 = vpop.xlane.xlu0 %1027
        %v1029 = vsub.f32 %v1025, %v1028
        %v1030 = vmul.f32 %v1029, 1.442695
        %v1031 = vpow.pop %v1030
        %v1032 = vsel %vm720, %v1031, 0.0
        %1033 = vadd.xlane.f32.xlu0 %v1032
        %v1034 = vpop.xlane.xlu0 %1033
        %v1035 = vrcp.pop %v1034
        %v1036 = vmul.f32 %v1031, %v1035
        %v1037 = vpack.c.bf16 %v1036, %v1036
        %v1039 = vunpack.c.l.b16 %v967
        %v1040 = vpack.c.b16 %v1039, %v1039
        %1041 = vrot.lane.b32.xlu0 %v1040, 112
        %v1042 = vpop.permute.xlu0 %1041
        %v1044 = vsel %vm720, %v1037, 0
        %v1047 = vsel %vm790, %v1042, 0
        %1049 = vmatprep.subr.bf16.mxu0 0
        %1050 = vmatpush1.bf16.msra.mxu0 %v1047
        %1051 = vmatprep.subr.bf16.mxu0 0
        %1052 = vmatpush1.bf16.msra.mxu0 0
        %1053 = vmatprep.subr.bf16.mxu0 0
        %1054 = vmatpush1.bf16.msra.mxu0 0
        %1055 = vmatprep.subr.bf16.mxu0 0
        %1056 = vmatpush1.bf16.msra.mxu0 0
        %1057 = vmatprep.subr.bf16.mxu0 0
        %1058 = vmatpush1.bf16.msra.mxu0 0
        %1059 = vmatprep.subr.bf16.mxu0 0
        %1060 = vmatpush1.bf16.msra.mxu0 0
        %1061 = vmatprep.subr.bf16.mxu0 0
        %1062 = vmatpush1.bf16.msra.mxu0 0
        %1063 = vmatprep.subr.bf16.mxu0 0
        %1064 = vmatpush1.bf16.msra.mxu0 0
        %1065 = vmatprep.subr.bf16.mxu0 0
        %1066 = vmatpush1.bf16.msra.mxu0 0
        %1067 = vmatprep.subr.bf16.mxu0 0
        %1068 = vmatpush1.bf16.msra.mxu0 0
        %1069 = vmatprep.subr.bf16.mxu0 0
        %1070 = vmatpush1.bf16.msra.mxu0 0
        %1071 = vmatprep.subr.bf16.mxu0 0
        %1072 = vmatpush1.bf16.msra.mxu0 0
        %1073 = vmatprep.subr.bf16.mxu0 0
        %1074 = vmatpush1.bf16.msra.mxu0 0
        %1075 = vmatprep.subr.bf16.mxu0 0
        %1076 = vmatpush1.bf16.msra.mxu0 0
        %1077 = vmatprep.subr.bf16.mxu0 0
        %1078 = vmatpush1.bf16.msra.mxu0 0
        %1079 = vmatprep.subr.bf16.mxu0 0
        %1080 = vmatpush1.bf16.msra.mxu0 0
        %1081 = vmatprep.mubr.bf16.mxu0 0
        %1082 = vmatmul.mubr.bf16.gmra.mrb[0].mxu0 %v1044
        %v1083 = vpop.f32.mrb[0].mxu0
        %v1084 = vadd.f32 0.0, %v1083
        %v1085 = vpop.f32.mrb[0].mxu0
        %v1086 = vpop.f32.mrb[0].mxu0
        %v1087 = vpop.f32.mrb[0].mxu0
        %1088 = vdwg.mxu0
        %1090 = vrot.lane.b32.xlu0 %v1084, 16
        %v1091 = vpop.permute.xlu0 %1090
        %vm1093 = vcmask 195712
        %1094 = vst.msk [vmem:[#allocation6] sm:$0xff] %vm1093, %v1091
        %v1095 = vld [vmem:[#allocation3] sm:$0xf]
        %v1096 = vld [vmem:[#allocation4] sm:$0xf]
        %v1097 = vld [vmem:[#allocation5] sm:$0xf]
        %v1099 = vunpack.c.l.b16 %v1095
        %v1100 = vpack.c.b16 %v1099, %v1099
        %1101 = vrot.lane.b32.xlu0 %v1100, 104
        %v1102 = vpop.permute.xlu0 %1101
        %v1104 = vunpack.c.l.b16 %v1096
        %v1105 = vpack.c.b16 %v1104, %v1104
        %1106 = vrot.lane.b32.xlu0 %v1105, 104
        %v1107 = vpop.permute.xlu0 %1106
        %v1109 = vsel %vm720, %v1102, 0
        %v1112 = vsel %vm720, %v1107, 0
        %1114 = vmatprep.subr.bf16.mxu0 0
        %1115 = vmatpush1.bf16.xpose.msra.mxu0 %v1112
        %1116 = vmatprep.subr.bf16.mxu0 0
        %1117 = vmatpush1.bf16.xpose.msra.mxu0 0
        %1118 = vmatprep.subr.bf16.mxu0 0
        %1119 = vmatpush1.bf16.xpose.msra.mxu0 0
        %1120 = vmatprep.subr.bf16.mxu0 0
        %1121 = vmatpush1.bf16.xpose.msra.mxu0 0
        %1122 = vmatprep.subr.bf16.mxu0 0
        %1123 = vmatpush1.bf16.xpose.msra.mxu0 0
        %1124 = vmatprep.subr.bf16.mxu0 0
        %1125 = vmatpush1.bf16.xpose.msra.mxu0 0
        %1126 = vmatprep.subr.bf16.mxu0 0
        %1127 = vmatpush1.bf16.xpose.msra.mxu0 0
        %1128 = vmatprep.subr.bf16.mxu0 0
        %1129 = vmatpush1.bf16.xpose.msra.mxu0 0
        %1130 = vmatprep.subr.bf16.mxu0 0
        %1131 = vmatpush1.bf16.xpose.msra.mxu0 0
        %1132 = vmatprep.subr.bf16.mxu0 0
        %1133 = vmatpush1.bf16.xpose.msra.mxu0 0
        %1134 = vmatprep.subr.bf16.mxu0 0
        %1135 = vmatpush1.bf16.xpose.msra.mxu0 0
        %1136 = vmatprep.subr.bf16.mxu0 0
        %1137 = vmatpush1.bf16.xpose.msra.mxu0 0
        %1138 = vmatprep.subr.bf16.mxu0 0
        %1139 = vmatpush1.bf16.xpose.msra.mxu0 0
        %1140 = vmatprep.subr.bf16.mxu0 0
        %1141 = vmatpush1.bf16.xpose.msra.mxu0 0
        %1142 = vmatprep.subr.bf16.mxu0 0
        %1143 = vmatpush1.bf16.xpose.msra.mxu0 0
        %1144 = vmatprep.subr.bf16.mxu0 0
        %1145 = vmatpush1.bf16.xpose.msra.mxu0 0
        %1146 = vmatprep.mubr.bf16.mxu0 0
        %1147 = vmatmul.mubr.bf16.gmra.mrb[0].mxu0 %v1109
        %v1148 = vpop.f32.mrb[0].mxu0
        %v1149 = vadd.f32 0.0, %v1148
        %v1150 = vpop.f32.mrb[0].mxu0
        %v1151 = vpop.f32.mrb[0].mxu0
        %v1152 = vpop.f32.mrb[0].mxu0
        %1153 = vdwg.mxu0
        %v1154 = vmul.f32 %v1149, 0.35355338
        %v1155 = vadd.f32 %v1154, %v772
        %v1156 = vsel %vm720, %v1155, -inf
        %1157 = vmax.xlane.f32.xlu0 %v1156
        %v1158 = vpop.xlane.xlu0 %1157
        %v1159 = vsub.f32 %v1155, %v1158
        %v1160 = vmul.f32 %v1159, 1.442695
        %v1161 = vpow.pop %v1160
        %v1162 = vsel %vm720, %v1161, 0.0
        %1163 = vadd.xlane.f32.xlu0 %v1162
        %v1164 = vpop.xlane.xlu0 %1163
        %v1165 = vrcp.pop %v1164
        %v1166 = vmul.f32 %v1161, %v1165
        %v1167 = vpack.c.bf16 %v1166, %v1166
        %v1169 = vunpack.c.l.b16 %v1097
        %v1170 = vpack.c.b16 %v1169, %v1169
        %1171 = vrot.lane.b32.xlu0 %v1170, 104
        %v1172 = vpop.permute.xlu0 %1171
        %v1174 = vsel %vm720, %v1167, 0
        %v1177 = vsel %vm790, %v1172, 0
        %1179 = vmatprep.subr.bf16.mxu0 0
        %1180 = vmatpush1.bf16.msra.mxu0 %v1177
        %1181 = vmatprep.subr.bf16.mxu0 0
        %1182 = vmatpush1.bf16.msra.mxu0 0
        %1183 = vmatprep.subr.bf16.mxu0 0
        %1184 = vmatpush1.bf16.msra.mxu0 0
        %1185 = vmatprep.subr.bf16.mxu0 0
        %1186 = vmatpush1.bf16.msra.mxu0 0
        %1187 = vmatprep.subr.bf16.mxu0 0
        %1188 = vmatpush1.bf16.msra.mxu0 0
        %1189 = vmatprep.subr.bf16.mxu0 0
        %1190 = vmatpush1.bf16.msra.mxu0 0
        %1191 = vmatprep.subr.bf16.mxu0 0
        %1192 = vmatpush1.bf16.msra.mxu0 0
        %1193 = vmatprep.subr.bf16.mxu0 0
        %1194 = vmatpush1.bf16.msra.mxu0 0
        %1195 = vmatprep.subr.bf16.mxu0 0
        %1196 = vmatpush1.bf16.msra.mxu0 0
        %1197 = vmatprep.subr.bf16.mxu0 0
        %1198 = vmatpush1.bf16.msra.mxu0 0
        %1199 = vmatprep.subr.bf16.mxu0 0
        %1200 = vmatpush1.bf16.msra.mxu0 0
        %1201 = vmatprep.subr.bf16.mxu0 0
        %1202 = vmatpush1.bf16.msra.mxu0 0
        %1203 = vmatprep.subr.bf16.mxu0 0
        %1204 = vmatpush1.bf16.msra.mxu0 0
        %1205 = vmatprep.subr.bf16.mxu0 0
        %1206 = vmatpush1.bf16.msra.mxu0 0
        %1207 = vmatprep.subr.bf16.mxu0 0
        %1208 = vmatpush1.bf16.msra.mxu0 0
        %1209 = vmatprep.subr.bf16.mxu0 0
        %1210 = vmatpush1.bf16.msra.mxu0 0
        %1211 = vmatprep.mubr.bf16.mxu0 0
        %1212 = vmatmul.mubr.bf16.gmra.mrb[0].mxu0 %v1174
        %v1213 = vpop.f32.mrb[0].mxu0
        %v1214 = vadd.f32 0.0, %v1213
        %v1215 = vpop.f32.mrb[0].mxu0
        %v1216 = vpop.f32.mrb[0].mxu0
        %v1217 = vpop.f32.mrb[0].mxu0
        %1218 = vdwg.mxu0
        %1220 = vrot.lane.b32.xlu0 %v1214, 24
        %v1221 = vpop.permute.xlu0 %1220
        %vm1223 = vcmask 261312
        %1224 = vst.msk [vmem:[#allocation6] sm:$0xff] %vm1223, %v1221
        %v1225 = vld [vmem:[#allocation6] sm:$0xff]
        %v1226 = vpack.c.bf16 %v1225, %v1225
        %v1227 = vld [vmem:[%s10] sm:$0xf]
        %v1228 = vld [vmem:[%s10 + $0x4] sm:$0xf]
        %v1229 = vld [vmem:[%s10 + $0x8] sm:$0xf]
        %v1230 = vld [vmem:[%s10 + $0xc] sm:$0xf]
        %v1231 = vld [vmem:[%s11] sm:$0x1]
        %v1233 = vlaneseq
        %v1234 = vshrl.u32 %v1233, 7
        %v1235 = vsub.s32 0, %v1234
        %v1236 = vrot.slane %v1231, %v1235
        %v1242 = vunpack.c.l.b16 %v1227
        %v1243 = vunpack.c.l.b16 %v1228
        %v1244 = vunpack.c.l.b16 %v1229
        %v1245 = vunpack.c.l.b16 %v1230
        %v1246 = vpack.c.b16 %v1243, %v1242
        %v1247 = vpack.c.b16 %v1245, %v1244
        %v1251 = vsel %vm466, %v1226, 0
        %1253 = vmatprep.subr.bf16.mxu0 0
        %1254 = vmatpush1.bf16.msra.mxu0 %v1246
        %1255 = vmatprep.subr.bf16.mxu0 0
        %1256 = vmatpush1.bf16.msra.mxu0 %v1247
        %1257 = vmatprep.subr.bf16.mxu0 0
        %1258 = vmatpush1.bf16.msra.mxu0 0
        %1259 = vmatprep.subr.bf16.mxu0 0
        %1260 = vmatpush1.bf16.msra.mxu0 0
        %1261 = vmatprep.subr.bf16.mxu0 0
        %1262 = vmatpush1.bf16.msra.mxu0 0
        %1263 = vmatprep.subr.bf16.mxu0 0
        %1264 = vmatpush1.bf16.msra.mxu0 0
        %1265 = vmatprep.subr.bf16.mxu0 0
        %1266 = vmatpush1.bf16.msra.mxu0 0
        %1267 = vmatprep.subr.bf16.mxu0 0
        %1268 = vmatpush1.bf16.msra.mxu0 0
        %1269 = vmatprep.subr.bf16.mxu0 0
        %1270 = vmatpush1.bf16.msra.mxu0 0
        %1271 = vmatprep.subr.bf16.mxu0 0
        %1272 = vmatpush1.bf16.msra.mxu0 0
        %1273 = vmatprep.subr.bf16.mxu0 0
        %1274 = vmatpush1.bf16.msra.mxu0 0
        %1275 = vmatprep.subr.bf16.mxu0 0
        %1276 = vmatpush1.bf16.msra.mxu0 0
        %1277 = vmatprep.subr.bf16.mxu0 0
        %1278 = vmatpush1.bf16.msra.mxu0 0
        %1279 = vmatprep.subr.bf16.mxu0 0
        %1280 = vmatpush1.bf16.msra.mxu0 0
        %1281 = vmatprep.subr.bf16.mxu0 0
        %1282 = vmatpush1.bf16.msra.mxu0 0
        %1283 = vmatprep.subr.bf16.mxu0 0
        %1284 = vmatpush1.bf16.msra.mxu0 0
        %1285 = vmatprep.mubr.bf16.mxu0 0
        %1286 = vmatmul.mubr.bf16.gmra.mrb[0].mxu0 %v1251
        %v1287 = vpop.f32.mrb[0].mxu0
        %v1288 = vadd.f32 %v1236, %v1287
        %v1289 = vpop.f32.mrb[0].mxu0
        %v1290 = vpop.f32.mrb[0].mxu0
        %v1291 = vpop.f32.mrb[0].mxu0
        %1292 = vdwg.mxu0
        %s1293 = scalar_lea.vmem %s455, %s464
        %v1294 = vld [vmem:[%s1293] sm:$0xff]
        %v1295 = vadd.f32 %v1294, %v1288
        %1296 = vst.msk [vmem:[%s462] sm:$0xff] %vm466, %v1295
        %p1297 = scmp.lt.s32.totalorder %s30, 1
        %s1298 = scalar_select %p1297, %s30, 1
        %p1299 = scmp.lt.s32.totalorder %s31, 0
        %s1300 = scalar_select %p1299, %s31, 0
        %s1301 = sadd.s32 %s1300, %s1298
        %s1302 = smul.addr %s1301, 8
        %s1303 = scalar_lea.vmem %s12, %s1302
        // Predicated region
        $region73: #{_lambda_.4} parent=67 // pred_check
          %p1304 = pneg %p320
        $region74: #{_lambda_.4} parent=67 // pred_check_branch
          %1306 = sbr.rel (%p1304) target = $region76
        $region75: #{_lambda_.4} parent=67 // pred_region
          _
        $region76: #{_lambda_.4} parent=67 // pred_fallthru
          _
      $region68: #{_lambda_.4} parent=5 // pred_fallthru
        _
      %p1307 = scmp.le.s32.totalorder 2, %s21
      // Predicated region
      $region77: #{_lambda_.4} parent=5 // pred_check
        %p1308 = pneg %p1307
      $region78: #{_lambda_.4} parent=5 // pred_check_branch
        %1310 = sbr.rel (%p1308) target = $region80
      $region79: #{_lambda_.4} parent=5 // pred_region
        %s1311 = ssub.s32 %s21, 2
        // Predicated region
        $region81: #{_lambda_.4} parent=79 // pred_check
          %p1312 = pneg %p326
        $region82: #{_lambda_.4} parent=79 // pred_check_branch
          %1314 = sbr.rel (%p1312) target = $region84
        $region83: #{_lambda_.4} parent=79 // pred_region
          %p1315 = scmp.lt.s32.totalorder %s32, 1
          %s1316 = scalar_select %p1315, %s32, 1
          %p1317 = scmp.lt.s32.totalorder %s33, 0
          %s1318 = scalar_select %p1317, %s33, 0
          %s1319 = sadd.s32 %s1318, %s1316
          %s1320 = smul.addr %s1319, 8
          %s1321 = scalar_lea.vmem %s12, %s1320
        $region84: #{_lambda_.4} parent=79 // pred_fallthru
          _
      $region80: #{_lambda_.4} parent=5 // pred_fallthru
        _
    $region6: #{_lambda_.4} parent=1 // loop_footer
      %s25 = sadd.s32 1, %s21
    $region7: #{_lambda_.4} parent=1 // loop_footer_branch
      %20 = sbr.rel target = $region3
    $region8: #{_lambda_.4} parent=1 // loop_exit
      _
    %1322 = vsyncpa [#allocation8], 1
    %s1323 = scalar_lea.sflag [#allocation8], 1
    %1324 = vsyncpa %s1323, 1

// kernel: _lambda_.6
$region0: #{_lambda_.6}
  #allocation0 [shape = 'u32[]', space=smem, size = 0x4, offset = 0x4, fixed_abs, tag = 'smem constant byte address 0x4 - core index']
  #allocation1 [shape = 'u32[144,128]{1,0:T(1,128)}', space=vmem, size = 0x12000, scoped, tag = 'internal scratch']
  #allocation2 [shape = 'bf16[8,32]{1,0:T(8,128)(2,1)}', space=vmem, size = 0x800, scoped, tag = 'scratch operand']
  #allocation3 [shape = 'bf16[8,32]{1,0:T(8,128)(2,1)}', space=vmem, size = 0x800, scoped, tag = 'scratch operand']
  #allocation4 [shape = 'bf16[8,32]{1,0:T(8,128)(2,1)}', space=vmem, size = 0x800, scoped, tag = 'scratch operand']
  #allocation5 [shape = 'bf16[8,32]{1,0:T(8,128)(2,1)}', space=vmem, size = 0x800, scoped, tag = 'scratch operand']
  #allocation6 [shape = 'f32[8,32]{1,0:T(8,128)}', space=vmem, size = 0x1000, scoped, tag = 'scratch operand']
  %s0 = inlined_call_operand.vmem [shape: f32[2,8,32], index: 0, kind: input, shape index: {}]
  %s1 = inlined_call_operand.vmem [shape: f32[2,1,8], index: 1, kind: input, shape index: {}]
  %s2 = inlined_call_operand.vmem [shape: f32[1,32], index: 2, kind: input, shape index: {}]
  %s3 = inlined_call_operand.vmem [shape: f32[1,32], index: 3, kind: input, shape index: {}, may-alias: {3,5,7,9,11}]
  %s4 = inlined_call_operand.vmem [shape: bf16[32,32], index: 4, kind: input, shape index: {}]
  %s5 = inlined_call_operand.vmem [shape: f32[1,32], index: 5, kind: input, shape index: {}, may-alias: {3,5,7,9,11}]
  %s6 = inlined_call_operand.vmem [shape: bf16[32,32], index: 6, kind: input, shape index: {}]
  %s7 = inlined_call_operand.vmem [shape: f32[1,32], index: 7, kind: input, shape index: {}, may-alias: {3,5,7,9,11}]
  %s8 = inlined_call_operand.vmem [shape: bf16[32,32], index: 8, kind: input, shape index: {}]
  %s9 = inlined_call_operand.vmem [shape: f32[1,32], index: 9, kind: input, shape index: {}, may-alias: {3,5,7,9,11}]
  %s10 = inlined_call_operand.vmem [shape: bf16[32,32], index: 10, kind: input, shape index: {}]
  %s11 = inlined_call_operand.vmem [shape: f32[1,32], index: 11, kind: input, shape index: {}, may-alias: {3,5,7,9,11}]
  %s12 = inlined_call_operand.vmem [shape: f32[2,8,32], index: 12, kind: output, shape index: {}]
  %s13 = sld [smem:[#allocation0]]
  $region81: #{_lambda_.6} parent=0
    _
  %s15 = ssub.s32 1, %s13
  %s16 = scalar_select 0, %s15, %s13
  loop: start=0, step=1, limit=4
  $region2: #{_lambda_.6} parent=0 // loop_pre_header
    _
  $region3: #{_lambda_.6} parent=0 // loop_header
    %s18 = sphi 0, %s22
    %p19 = scmp.ge.s32.totalorder %s18, 4
    %s25 = sphi 0, %s37
    %s26 = sphi 0, %s33
    %s27 = sphi 0, %s25
    %s28 = sphi 0, %s26
    %s29 = sphi 0, %s27
    %s30 = sphi 0, %s28
    %s40 = sphi 0, %s42
    %s43 = sphi 0, %s40
    %s44 = sphi 0, %s43
    %s60 = sphi 0, %s44
    %s66 = sphi 0, %s68
    %s69 = sphi 0, %s66
    %s70 = sphi 0, %s69
    %s86 = sphi 0, %s70
    %s90 = sphi 0, %s90
    %s92 = sphi 0, %s90
    %s93 = sphi 0, %s92
    %s107 = sphi 0, %s93
    %s111 = sphi 0, %s111
    %s113 = sphi 0, %s111
    %s114 = sphi 0, %s113
    %s128 = sphi 0, %s114
    %s132 = sphi 0, %s132
    %s134 = sphi 0, %s132
    %s135 = sphi 0, %s134
    %s149 = sphi 0, %s135
    %s153 = sphi 0, %s153
    %s155 = sphi 0, %s153
    %s156 = sphi 0, %s155
    %s170 = sphi 0, %s156
    %s174 = sphi 0, %s174
    %s176 = sphi 0, %s174
    %s177 = sphi 0, %s176
    %s191 = sphi 0, %s177
    %s195 = sphi 0, %s195
    %s197 = sphi 0, %s195
    %s198 = sphi 0, %s197
    %s212 = sphi 0, %s198
    %s216 = sphi 0, %s216
    %s218 = sphi 0, %s216
    %s219 = sphi 0, %s218
    %s233 = sphi 0, %s219
    %s237 = sphi 0, %s237
    %s239 = sphi 0, %s237
    %s240 = sphi 0, %s239
    %s254 = sphi 0, %s240
    %s258 = sphi 0, %s258
    %s260 = sphi 0, %s258
    %s261 = sphi 0, %s260
    %s275 = sphi 0, %s261
    %s279 = sphi 0, %s279
    %s281 = sphi 0, %s279
    %s282 = sphi 0, %s281
    %s296 = sphi 0, %s282
    %s304 = sphi 0, %s306
    %s307 = sphi 0, %s304
    %s308 = sphi 0, %s307
    %s324 = sphi 0, %s308
  $region4: #{_lambda_.6} parent=0 // loop_header_branch
    %21 = sbr.rel (%p19) target = $region8
  $region5: #{_lambda_.6} parent=0 // loop_body
    %s23 = ssub.s32 %s18, 1
    %s24 = ssub.s32 %s18, 2
    %s31 = sadd.s32 1, %s26
    %p32 = scmp.ge.s32.totalorder %s31, 1
    %s33 = scalar_select %p32, 0, %s31
    %s34 = sadd.s32 1, %s25
    %s35 = scalar_select %p32, %s34, %s25
    %p36 = scmp.ge.s32.totalorder %s35, 2
    %s37 = scalar_select %p36, 0, %s35
    %s38 = ssub.s32 %s25, %s37
    %p39 = scmp.eq.s32.totalorder %s38, 0
    %s41 = sadd.s32 %s40, 1
    %s42 = scalar_select %p39, %s40, %s41
    %p45 = pneg %p39
    %p46 = scmp.eq.s32.totalorder %s18, 1
    %p47 = por %p45, %p46
    %p48 = scmp.ne.s32.totalorder %s40, %s43
    %p49 = scmp.eq.s32.totalorder %s18, 0
    %p50 = por %p48, %p49
    %p51 = scmp.ne.s32.totalorder %s40, %s43
    %p52 = scmp.eq.s32.totalorder %s23, 1
    %p53 = por %p51, %p52
    %p54 = scmp.ne.s32.totalorder %s43, %s44
    %p55 = scmp.eq.s32.totalorder %s23, 0
    %p56 = por %p54, %p55
    %p57 = scmp.ne.s32.totalorder %s43, %s44
    %p58 = scmp.eq.s32.totalorder %s24, 1
    %p59 = por %p57, %p58
    %p61 = scmp.ne.s32.totalorder %s44, %s60
    %p62 = scmp.eq.s32.totalorder %s24, 0
    %p63 = por %p61, %p62
    %s64 = ssub.s32 %s25, %s37
    %p65 = scmp.eq.s32.totalorder %s64, 0
    %s67 = sadd.s32 %s66, 1
    %s68 = scalar_select %p65, %s66, %s67
    %p71 = pneg %p65
    %p72 = scmp.eq.s32.totalorder %s18, 1
    %p73 = por %p71, %p72
    %p74 = scmp.ne.s32.totalorder %s66, %s69
    %p75 = scmp.eq.s32.totalorder %s18, 0
    %p76 = por %p74, %p75
    %p77 = scmp.ne.s32.totalorder %s66, %s69
    %p78 = scmp.eq.s32.totalorder %s23, 1
    %p79 = por %p77, %p78
    %p80 = scmp.ne.s32.totalorder %s69, %s70
    %p81 = scmp.eq.s32.totalorder %s23, 0
    %p82 = por %p80, %p81
    %p83 = scmp.ne.s32.totalorder %s69, %s70
    %p84 = scmp.eq.s32.totalorder %s24, 1
    %p85 = por %p83, %p84
    %p87 = scmp.ne.s32.totalorder %s70, %s86
    %p88 = scmp.eq.s32.totalorder %s24, 0
    %p89 = por %p87, %p88
    %s91 = sadd.s32 %s90, 1
    %p94 = scmp.eq.s32.totalorder %s18, 1
    %p95 = scmp.ne.s32.totalorder %s90, %s92
    %p96 = scmp.eq.s32.totalorder %s18, 0
    %p97 = por %p95, %p96
    %p98 = scmp.ne.s32.totalorder %s90, %s92
    %p99 = scmp.eq.s32.totalorder %s23, 1
    %p100 = por %p98, %p99
    %p101 = scmp.ne.s32.totalorder %s92, %s93
    %p102 = scmp.eq.s32.totalorder %s23, 0
    %p103 = por %p101, %p102
    %p104 = scmp.ne.s32.totalorder %s92, %s93
    %p105 = scmp.eq.s32.totalorder %s24, 1
    %p106 = por %p104, %p105
    %p108 = scmp.ne.s32.totalorder %s93, %s107
    %p109 = scmp.eq.s32.totalorder %s24, 0
    %p110 = por %p108, %p109
    %s112 = sadd.s32 %s111, 1
    %p115 = scmp.eq.s32.totalorder %s18, 1
    %p116 = scmp.ne.s32.totalorder %s111, %s113
    %p117 = scmp.eq.s32.totalorder %s18, 0
    %p118 = por %p116, %p117
    %p119 = scmp.ne.s32.totalorder %s111, %s113
    %p120 = scmp.eq.s32.totalorder %s23, 1
    %p121 = por %p119, %p120
    %p122 = scmp.ne.s32.totalorder %s113, %s114
    %p123 = scmp.eq.s32.totalorder %s23, 0
    %p124 = por %p122, %p123
    %p125 = scmp.ne.s32.totalorder %s113, %s114
    %p126 = scmp.eq.s32.totalorder %s24, 1
    %p127 = por %p125, %p126
    %p129 = scmp.ne.s32.totalorder %s114, %s128
    %p130 = scmp.eq.s32.totalorder %s24, 0
    %p131 = por %p129, %p130
    %s133 = sadd.s32 %s132, 1
    %p136 = scmp.eq.s32.totalorder %s18, 1
    %p137 = scmp.ne.s32.totalorder %s132, %s134
    %p138 = scmp.eq.s32.totalorder %s18, 0
    %p139 = por %p137, %p138
    %p140 = scmp.ne.s32.totalorder %s132, %s134
    %p141 = scmp.eq.s32.totalorder %s23, 1
    %p142 = por %p140, %p141
    %p143 = scmp.ne.s32.totalorder %s134, %s135
    %p144 = scmp.eq.s32.totalorder %s23, 0
    %p145 = por %p143, %p144
    %p146 = scmp.ne.s32.totalorder %s134, %s135
    %p147 = scmp.eq.s32.totalorder %s24, 1
    %p148 = por %p146, %p147
    %p150 = scmp.ne.s32.totalorder %s135, %s149
    %p151 = scmp.eq.s32.totalorder %s24, 0
    %p152 = por %p150, %p151
    %s154 = sadd.s32 %s153, 1
    %p157 = scmp.eq.s32.totalorder %s18, 1
    %p158 = scmp.ne.s32.totalorder %s153, %s155
    %p159 = scmp.eq.s32.totalorder %s18, 0
    %p160 = por %p158, %p159
    %p161 = scmp.ne.s32.totalorder %s153, %s155
    %p162 = scmp.eq.s32.totalorder %s23, 1
    %p163 = por %p161, %p162
    %p164 = scmp.ne.s32.totalorder %s155, %s156
    %p165 = scmp.eq.s32.totalorder %s23, 0
    %p166 = por %p164, %p165
    %p167 = scmp.ne.s32.totalorder %s155, %s156
    %p168 = scmp.eq.s32.totalorder %s24, 1
    %p169 = por %p167, %p168
    %p171 = scmp.ne.s32.totalorder %s156, %s170
    %p172 = scmp.eq.s32.totalorder %s24, 0
    %p173 = por %p171, %p172
    %s175 = sadd.s32 %s174, 1
    %p178 = scmp.eq.s32.totalorder %s18, 1
    %p179 = scmp.ne.s32.totalorder %s174, %s176
    %p180 = scmp.eq.s32.totalorder %s18, 0
    %p181 = por %p179, %p180
    %p182 = scmp.ne.s32.totalorder %s174, %s176
    %p183 = scmp.eq.s32.totalorder %s23, 1
    %p184 = por %p182, %p183
    %p185 = scmp.ne.s32.totalorder %s176, %s177
    %p186 = scmp.eq.s32.totalorder %s23, 0
    %p187 = por %p185, %p186
    %p188 = scmp.ne.s32.totalorder %s176, %s177
    %p189 = scmp.eq.s32.totalorder %s24, 1
    %p190 = por %p188, %p189
    %p192 = scmp.ne.s32.totalorder %s177, %s191
    %p193 = scmp.eq.s32.totalorder %s24, 0
    %p194 = por %p192, %p193
    %s196 = sadd.s32 %s195, 1
    %p199 = scmp.eq.s32.totalorder %s18, 1
    %p200 = scmp.ne.s32.totalorder %s195, %s197
    %p201 = scmp.eq.s32.totalorder %s18, 0
    %p202 = por %p200, %p201
    %p203 = scmp.ne.s32.totalorder %s195, %s197
    %p204 = scmp.eq.s32.totalorder %s23, 1
    %p205 = por %p203, %p204
    %p206 = scmp.ne.s32.totalorder %s197, %s198
    %p207 = scmp.eq.s32.totalorder %s23, 0
    %p208 = por %p206, %p207
    %p209 = scmp.ne.s32.totalorder %s197, %s198
    %p210 = scmp.eq.s32.totalorder %s24, 1
    %p211 = por %p209, %p210
    %p213 = scmp.ne.s32.totalorder %s198, %s212
    %p214 = scmp.eq.s32.totalorder %s24, 0
    %p215 = por %p213, %p214
    %s217 = sadd.s32 %s216, 1
    %p220 = scmp.eq.s32.totalorder %s18, 1
    %p221 = scmp.ne.s32.totalorder %s216, %s218
    %p222 = scmp.eq.s32.totalorder %s18, 0
    %p223 = por %p221, %p222
    %p224 = scmp.ne.s32.totalorder %s216, %s218
    %p225 = scmp.eq.s32.totalorder %s23, 1
    %p226 = por %p224, %p225
    %p227 = scmp.ne.s32.totalorder %s218, %s219
    %p228 = scmp.eq.s32.totalorder %s23, 0
    %p229 = por %p227, %p228
    %p230 = scmp.ne.s32.totalorder %s218, %s219
    %p231 = scmp.eq.s32.totalorder %s24, 1
    %p232 = por %p230, %p231
    %p234 = scmp.ne.s32.totalorder %s219, %s233
    %p235 = scmp.eq.s32.totalorder %s24, 0
    %p236 = por %p234, %p235
    %s238 = sadd.s32 %s237, 1
    %p241 = scmp.eq.s32.totalorder %s18, 1
    %p242 = scmp.ne.s32.totalorder %s237, %s239
    %p243 = scmp.eq.s32.totalorder %s18, 0
    %p244 = por %p242, %p243
    %p245 = scmp.ne.s32.totalorder %s237, %s239
    %p246 = scmp.eq.s32.totalorder %s23, 1
    %p247 = por %p245, %p246
    %p248 = scmp.ne.s32.totalorder %s239, %s240
    %p249 = scmp.eq.s32.totalorder %s23, 0
    %p250 = por %p248, %p249
    %p251 = scmp.ne.s32.totalorder %s239, %s240
    %p252 = scmp.eq.s32.totalorder %s24, 1
    %p253 = por %p251, %p252
    %p255 = scmp.ne.s32.totalorder %s240, %s254
    %p256 = scmp.eq.s32.totalorder %s24, 0
    %p257 = por %p255, %p256
    %s259 = sadd.s32 %s258, 1
    %p262 = scmp.eq.s32.totalorder %s18, 1
    %p263 = scmp.ne.s32.totalorder %s258, %s260
    %p264 = scmp.eq.s32.totalorder %s18, 0
    %p265 = por %p263, %p264
    %p266 = scmp.ne.s32.totalorder %s258, %s260
    %p267 = scmp.eq.s32.totalorder %s23, 1
    %p268 = por %p266, %p267
    %p269 = scmp.ne.s32.totalorder %s260, %s261
    %p270 = scmp.eq.s32.totalorder %s23, 0
    %p271 = por %p269, %p270
    %p272 = scmp.ne.s32.totalorder %s260, %s261
    %p273 = scmp.eq.s32.totalorder %s24, 1
    %p274 = por %p272, %p273
    %p276 = scmp.ne.s32.totalorder %s261, %s275
    %p277 = scmp.eq.s32.totalorder %s24, 0
    %p278 = por %p276, %p277
    %s280 = sadd.s32 %s279, 1
    %p283 = scmp.eq.s32.totalorder %s18, 1
    %p284 = scmp.ne.s32.totalorder %s279, %s281
    %p285 = scmp.eq.s32.totalorder %s18, 0
    %p286 = por %p284, %p285
    %p287 = scmp.ne.s32.totalorder %s279, %s281
    %p288 = scmp.eq.s32.totalorder %s23, 1
    %p289 = por %p287, %p288
    %p290 = scmp.ne.s32.totalorder %s281, %s282
    %p291 = scmp.eq.s32.totalorder %s23, 0
    %p292 = por %p290, %p291
    %p293 = scmp.ne.s32.totalorder %s281, %s282
    %p294 = scmp.eq.s32.totalorder %s24, 1
    %p295 = por %p293, %p294
    %p297 = scmp.ne.s32.totalorder %s282, %s296
    %p298 = scmp.eq.s32.totalorder %s24, 0
    %p299 = por %p297, %p298
    %s300 = ssub.s32 %s25, %s37
    %s301 = ssub.s32 %s26, %s33
    %s302 = sor.u32 %s300, %s301
    %p303 = scmp.eq.s32.totalorder %s302, 0
    %s305 = sadd.s32 %s304, 1
    %s306 = scalar_select %p303, %s304, %s305
    %p309 = pneg %p303
    %p310 = scmp.eq.s32.totalorder %s18, 1
    %p311 = por %p309, %p310
    %p312 = scmp.ne.s32.totalorder %s304, %s307
    %p313 = scmp.eq.s32.totalorder %s18, 0
    %p314 = por %p312, %p313
    %p315 = scmp.ne.s32.totalorder %s304, %s307
    %p316 = scmp.eq.s32.totalorder %s23, 1
    %p317 = por %p315, %p316
    %p318 = scmp.ne.s32.totalorder %s307, %s308
    %p319 = scmp.eq.s32.totalorder %s23, 0
    %p320 = por %p318, %p319
    %p321 = scmp.ne.s32.totalorder %s307, %s308
    %p322 = scmp.eq.s32.totalorder %s24, 1
    %p323 = por %p321, %p322
    %p325 = scmp.ne.s32.totalorder %s308, %s324
    %p326 = scmp.eq.s32.totalorder %s24, 0
    %p327 = por %p325, %p326
    %p328 = scmp.le.s32.totalorder 1, %s18
    %p329 = scmp.lt.s32.totalorder %s18, 3
    %p330 = pnand %p328, %p329
    %p331 = pneg %p330
    // Predicated region
    $region9: #{_lambda_.6} parent=5 // pred_check
      _
    $region10: #{_lambda_.6} parent=5 // pred_check_branch
      %333 = sbr.rel (%p330) target = $region12
    $region11: #{_lambda_.6} parent=5 // pred_region
      %s334 = ssub.s32 %s18, 1
      // Predicated region
      $region13: #{_lambda_.6} parent=11 // pred_check
        %p335 = pneg %p103
      $region14: #{_lambda_.6} parent=11 // pred_check_branch
        %337 = sbr.rel (%p335) target = $region16
      $region15: #{_lambda_.6} parent=11 // pred_region
        _
      $region16: #{_lambda_.6} parent=11 // pred_fallthru
        _
      // Predicated region
      $region17: #{_lambda_.6} parent=11 // pred_check
        %p338 = pneg %p124
      $region18: #{_lambda_.6} parent=11 // pred_check_branch
        %340 = sbr.rel (%p338) target = $region20
      $region19: #{_lambda_.6} parent=11 // pred_region
        _
      $region20: #{_lambda_.6} parent=11 // pred_fallthru
        _
      // Predicated region
      $region21: #{_lambda_.6} parent=11 // pred_check
        %p341 = pneg %p145
      $region22: #{_lambda_.6} parent=11 // pred_check_branch
        %343 = sbr.rel (%p341) target = $region24
      $region23: #{_lambda_.6} parent=11 // pred_region
        _
      $region24: #{_lambda_.6} parent=11 // pred_fallthru
        _
      // Predicated region
      $region25: #{_lambda_.6} parent=11 // pred_check
        %p344 = pneg %p166
      $region26: #{_lambda_.6} parent=11 // pred_check_branch
        %346 = sbr.rel (%p344) target = $region28
      $region27: #{_lambda_.6} parent=11 // pred_region
        _
      $region28: #{_lambda_.6} parent=11 // pred_fallthru
        _
      // Predicated region
      $region29: #{_lambda_.6} parent=11 // pred_check
        %p347 = pneg %p187
      $region30: #{_lambda_.6} parent=11 // pred_check_branch
        %349 = sbr.rel (%p347) target = $region32
      $region31: #{_lambda_.6} parent=11 // pred_region
        _
      $region32: #{_lambda_.6} parent=11 // pred_fallthru
        _
      // Predicated region
      $region33: #{_lambda_.6} parent=11 // pred_check
        %p350 = pneg %p208
      $region34: #{_lambda_.6} parent=11 // pred_check_branch
        %352 = sbr.rel (%p350) target = $region36
      $region35: #{_lambda_.6} parent=11 // pred_region
        _
      $region36: #{_lambda_.6} parent=11 // pred_fallthru
        _
      // Predicated region
      $region37: #{_lambda_.6} parent=11 // pred_check
        %p353 = pneg %p229
      $region38: #{_lambda_.6} parent=11 // pred_check_branch
        %355 = sbr.rel (%p353) target = $region40
      $region39: #{_lambda_.6} parent=11 // pred_region
        _
      $region40: #{_lambda_.6} parent=11 // pred_fallthru
        _
      // Predicated region
      $region41: #{_lambda_.6} parent=11 // pred_check
        %p356 = pneg %p250
      $region42: #{_lambda_.6} parent=11 // pred_check_branch
        %358 = sbr.rel (%p356) target = $region44
      $region43: #{_lambda_.6} parent=11 // pred_region
        _
      $region44: #{_lambda_.6} parent=11 // pred_fallthru
        _
      // Predicated region
      $region45: #{_lambda_.6} parent=11 // pred_check
        %p359 = pneg %p271
      $region46: #{_lambda_.6} parent=11 // pred_check_branch
        %361 = sbr.rel (%p359) target = $region48
      $region47: #{_lambda_.6} parent=11 // pred_region
        _
      $region48: #{_lambda_.6} parent=11 // pred_fallthru
        _
      // Predicated region
      $region49: #{_lambda_.6} parent=11 // pred_check
        %p362 = pneg %p292
      $region50: #{_lambda_.6} parent=11 // pred_check_branch
        %364 = sbr.rel (%p362) target = $region52
      $region51: #{_lambda_.6} parent=11 // pred_region
        _
      $region52: #{_lambda_.6} parent=11 // pred_fallthru
        _
    $region12: #{_lambda_.6} parent=5 // pred_fallthru
      _
    %p365 = scmp.lt.s32.totalorder %s18, 2
    // Predicated region
    $region53: #{_lambda_.6} parent=5 // pred_check
      %p366 = pneg %p365
    $region54: #{_lambda_.6} parent=5 // pred_check_branch
      %368 = sbr.rel (%p366) target = $region56
    $region55: #{_lambda_.6} parent=5 // pred_region
      // Predicated region
      $region57: #{_lambda_.6} parent=55 // pred_check
        %p369 = pneg %p50
      $region58: #{_lambda_.6} parent=55 // pred_check_branch
        %371 = sbr.rel (%p369) target = $region60
      $region59: #{_lambda_.6} parent=55 // pred_region
        %p372 = scmp.lt.s32.totalorder %s25, 1
        %s373 = scalar_select %p372, %s25, 1
        %s374 = smul.addr %s373, 8
        %s375 = scalar_lea.vmem %s0, %s374
      $region60: #{_lambda_.6} parent=55 // pred_fallthru
        _
      // Predicated region
      $region61: #{_lambda_.6} parent=55 // pred_check
        %p376 = pneg %p76
      $region62: #{_lambda_.6} parent=55 // pred_check_branch
        %378 = sbr.rel (%p376) target = $region64
      $region63: #{_lambda_.6} parent=55 // pred_region
        %p379 = scmp.lt.s32.totalorder %s25, 1
        %s380 = scalar_select %p379, %s25, 1
        %s381 = scalar_lea.vmem %s1, %s380
      $region64: #{_lambda_.6} parent=55 // pred_fallthru
        _
    $region56: #{_lambda_.6} parent=5 // pred_fallthru
      _
    %p382 = scmp.le.s32.totalorder 1, %s18
    %p383 = scmp.lt.s32.totalorder %s18, 3
    %p384 = pnand %p382, %p383
    %p385 = pneg %p384
    // Predicated region
    $region65: #{_lambda_.6} parent=5 // pred_check
      _
    $region66: #{_lambda_.6} parent=5 // pred_check_branch
      %387 = sbr.rel (%p384) target = $region68
    $region67: #{_lambda_.6} parent=5 // pred_region
      %s388 = ssub.s32 %s18, 1
      %p389 = scmp.lt.s32.totalorder %s27, 1
      %s390 = scalar_select %p389, %s27, 1
      %s391 = smul.addr %s390, 8
      %s392 = scalar_lea.vmem %s0, %s391
      %p393 = pneg %p56
      %p394 = pneg %p53
      %p395 = scmp.lt.s32.totalorder %s27, 1
      %s396 = scalar_select %p395, %s27, 1
      %s397 = scalar_lea.vmem %s1, %s396
      %p398 = pneg %p82
      %p399 = pneg %p79
      %p400 = pneg %p103
      %p401 = pneg %p100
      %p402 = pneg %p124
      %p403 = pneg %p121
      %p404 = pneg %p145
      %p405 = pneg %p142
      %p406 = pneg %p166
      %p407 = pneg %p163
      %p408 = pneg %p187
      %p409 = pneg %p184
      %p410 = pneg %p208
      %p411 = pneg %p205
      %p412 = pneg %p229
      %p413 = pneg %p226
      %p414 = pneg %p250
      %p415 = pneg %p247
      %p416 = pneg %p271
      %p417 = pneg %p268
      %p418 = pneg %p292
      %p419 = pneg %p289
      %p420 = pneg %p320
      %p421 = pneg %p317
      %p422 = scmp.lt.s32.totalorder %s27, 1
      %s423 = scalar_select %p422, %s27, 1
      %p424 = scmp.lt.s32.totalorder %s28, 0
      %s425 = scalar_select %p424, %s28, 0
      %s426 = sadd.s32 %s425, %s423
      %s427 = smul.addr %s426, 8
      %s428 = scalar_lea.vmem %s12, %s427
      %p429 = scmp.lt.s32.totalorder %s27, 1
      %s430 = scalar_select %p429, %s27, 1
      %s431 = smul.addr %s430, 8
      %s432 = scalar_lea.vmem %s0, %s431
      %p433 = scmp.lt.s32.totalorder %s27, 1
      %s434 = scalar_select %p433, %s27, 1
      %s435 = scalar_lea.vmem %s1, %s434
      %p436 = scmp.lt.s32.totalorder %s27, 1
      %s437 = scalar_select %p436, %s27, 1
      %p438 = scmp.lt.s32.totalorder %s28, 0
      %s439 = scalar_select %p438, %s28, 0
      %s440 = sadd.s32 %s439, %s437
      %s441 = smul.addr %s440, 8
      %s442 = scalar_lea.vmem %s12, %s441
      %s444 = smul.u32 %s28, 8
      %v445 = vld [vmem:[%s432] sm:$0xff]
      %vm446 = vcmask 261120
      %v447 = vsel %vm446, %v445, 0.0
      %448 = vadd.xlane.f32.xlu0 %v447
      %v449 = vpop.xlane.xlu0 %448
      %v450 = vrcp.pop 32.0
      %v451 = vmul.f32 %v449, %v450
      %v452 = vsub.f32 %v445, %v451
      %v453 = vmul.f32 %v452, %v452
      %v454 = vsel %vm446, %v453, 0.0
      %455 = vadd.xlane.f32.xlu0 %v454
      %v456 = vpop.xlane.xlu0 %455
      %v457 = vmul.f32 %v456, 0.032258064
      %v458 = vrsqrt.pop %v457
      %v459 = vmul.f32 %v457, %v458
      %vm460 = vcmp.eq.f32.partialorder %v457, inf
      %v461 = vsel %vm460, %v457, %v459
      %vm462 = vcmp.eq.f32.partialorder %v457, 0.0
      %v463 = vand.u32 %v457, 2147483648
      %v464 = vsel %vm462, %v463, %v461
      %v465 = vadd.f32 %v464, 1e-06
      %v466 = vrcp.pop %v465
      %v467 = vmul.f32 1.0, %v466
      %v468 = vld [vmem:[%s2] sm:$0x1]
      %v470 = vlaneseq
      %v471 = vshrl.u32 %v470, 7
      %v472 = vsub.s32 0, %v471
      %v473 = vrot.slane %v468, %v472
      %v475 = vmul.f32 %v473, %v452
      %v476 = vmul.f32 %v475, %v467
      %v477 = vld [vmem:[%s3] sm:$0x1]
      %v479 = vlaneseq
      %v480 = vshrl.u32 %v479, 7
      %v481 = vsub.s32 0, %v480
      %v482 = vrot.slane %v477, %v481
      %v484 = vadd.f32 %v476, %v482
      %v485 = vpack.c.bf16 %v484, %v484
      %vm486 = vcmask 257024
      %487 = vst.msk [vmem:[#allocation2] sm:$0xf] %vm486, %v485
      %v488 = vld [vmem:[%s6] sm:$0xf]
      %v489 = vld [vmem:[%s6 + $0x4] sm:$0xf]
      %v490 = vld [vmem:[%s6 + $0x8] sm:$0xf]
      %v491 = vld [vmem:[%s6 + $0xc] sm:$0xf]
      %v492 = vld [vmem:[%s7] sm:$0x1]
      %v494 = vlaneseq
      %v495 = vshrl.u32 %v494, 7
      %v496 = vsub.s32 0, %v495
      %v497 = vrot.slane %v492, %v496
      %v503 = vunpack.c.l.b16 %v488
      %v504 = vunpack.c.l.b16 %v489
      %v505 = vunpack.c.l.b16 %v490
      %v506 = vunpack.c.l.b16 %v491
      %v507 = vpack.c.b16 %v504, %v503
      %v508 = vpack.c.b16 %v506, %v505
      %v512 = vsel %vm446, %v485, 0
      %514 = vmatprep.subr.bf16.mxu0 0
      %515 = vmatpush1.bf16.msra.mxu0 %v507
      %516 = vmatprep.subr.bf16.mxu0 0
      %517 = vmatpush1.bf16.msra.mxu0 %v508
      %518 = vmatprep.subr.bf16.mxu0 0
      %519 = vmatpush1.bf16.msra.mxu0 0
      %520 = vmatprep.subr.bf16.mxu0 0
      %521 = vmatpush1.bf16.msra.mxu0 0
      %522 = vmatprep.subr.bf16.mxu0 0
      %523 = vmatpush1.bf16.msra.mxu0 0
      %524 = vmatprep.subr.bf16.mxu0 0
      %525 = vmatpush1.bf16.msra.mxu0 0
      %526 = vmatprep.subr.bf16.mxu0 0
      %527 = vmatpush1.bf16.msra.mxu0 0
      %528 = vmatprep.subr.bf16.mxu0 0
      %529 = vmatpush1.bf16.msra.mxu0 0
      %530 = vmatprep.subr.bf16.mxu0 0
      %531 = vmatpush1.bf16.msra.mxu0 0
      %532 = vmatprep.subr.bf16.mxu0 0
      %533 = vmatpush1.bf16.msra.mxu0 0
      %534 = vmatprep.subr.bf16.mxu0 0
      %535 = vmatpush1.bf16.msra.mxu0 0
      %536 = vmatprep.subr.bf16.mxu0 0
      %537 = vmatpush1.bf16.msra.mxu0 0
      %538 = vmatprep.subr.bf16.mxu0 0
      %539 = vmatpush1.bf16.msra.mxu0 0
      %540 = vmatprep.subr.bf16.mxu0 0
      %541 = vmatpush1.bf16.msra.mxu0 0
      %542 = vmatprep.subr.bf16.mxu0 0
      %543 = vmatpush1.bf16.msra.mxu0 0
      %544 = vmatprep.subr.bf16.mxu0 0
      %545 = vmatpush1.bf16.msra.mxu0 0
      %546 = vmatprep.mubr.bf16.mxu0 0
      %547 = vmatmul.mubr.bf16.gmra.mrb[0].mxu0 %v512
      %v548 = vpop.f32.mrb[0].mxu0
      %v549 = vadd.f32 %v497, %v548
      %v550 = vpop.f32.mrb[0].mxu0
      %v551 = vpop.f32.mrb[0].mxu0
      %v552 = vpop.f32.mrb[0].mxu0
      %553 = vdwg.mxu0
      %v554 = vpack.c.bf16 %v549, %v549
      %555 = vst.msk [vmem:[#allocation4] sm:$0xf] %vm486, %v554
      %v556 = vld [vmem:[%s8] sm:$0xf]
      %v557 = vld [vmem:[%s8 + $0x4] sm:$0xf]
      %v558 = vld [vmem:[%s8 + $0x8] sm:$0xf]
      %v559 = vld [vmem:[%s8 + $0xc] sm:$0xf]
      %v560 = vld [vmem:[%s9] sm:$0x1]
      %v562 = vlaneseq
      %v563 = vshrl.u32 %v562, 7
      %v564 = vsub.s32 0, %v563
      %v565 = vrot.slane %v560, %v564
      %v571 = vunpack.c.l.b16 %v556
      %v572 = vunpack.c.l.b16 %v557
      %v573 = vunpack.c.l.b16 %v558
      %v574 = vunpack.c.l.b16 %v559
      %v575 = vpack.c.b16 %v572, %v571
      %v576 = vpack.c.b16 %v574, %v573
      %579 = vmatprep.subr.bf16.mxu0 0
      %580 = vmatpush1.bf16.msra.mxu0 %v575
      %581 = vmatprep.subr.bf16.mxu0 0
      %582 = vmatpush1.bf16.msra.mxu0 %v576
      %583 = vmatprep.subr.bf16.mxu0 0
      %584 = vmatpush1.bf16.msra.mxu0 0
      %585 = vmatprep.subr.bf16.mxu0 0
      %586 = vmatpush1.bf16.msra.mxu0 0
      %587 = vmatprep.subr.bf16.mxu0 0
      %588 = vmatpush1.bf16.msra.mxu0 0
      %589 = vmatprep.subr.bf16.mxu0 0
      %590 = vmatpush1.bf16.msra.mxu0 0
      %591 = vmatprep.subr.bf16.mxu0 0
      %592 = vmatpush1.bf16.msra.mxu0 0
      %593 = vmatprep.subr.bf16.mxu0 0
      %594 = vmatpush1.bf16.msra.mxu0 0
      %595 = vmatprep.subr.bf16.mxu0 0
      %596 = vmatpush1.bf16.msra.mxu0 0
      %597 = vmatprep.subr.bf16.mxu0 0
      %598 = vmatpush1.bf16.msra.mxu0 0
      %599 = vmatprep.subr.bf16.mxu0 0
      %600 = vmatpush1.bf16.msra.mxu0 0
      %601 = vmatprep.subr.bf16.mxu0 0
      %602 = vmatpush1.bf16.msra.mxu0 0
      %603 = vmatprep.subr.bf16.mxu0 0
      %604 = vmatpush1.bf16.msra.mxu0 0
      %605 = vmatprep.subr.bf16.mxu0 0
      %606 = vmatpush1.bf16.msra.mxu0 0
      %607 = vmatprep.subr.bf16.mxu0 0
      %608 = vmatpush1.bf16.msra.mxu0 0
      %609 = vmatprep.subr.bf16.mxu0 0
      %610 = vmatpush1.bf16.msra.mxu0 0
      %611 = vmatprep.mubr.bf16.mxu0 0
      %612 = vmatmul.mubr.bf16.gmra.mrb[0].mxu0 %v512
      %v613 = vpop.f32.mrb[0].mxu0
      %v614 = vadd.f32 %v565, %v613
      %v615 = vpop.f32.mrb[0].mxu0
      %v616 = vpop.f32.mrb[0].mxu0
      %v617 = vpop.f32.mrb[0].mxu0
      %618 = vdwg.mxu0
      %v619 = vpack.c.bf16 %v614, %v614
      %620 = vst.msk [vmem:[#allocation5] sm:$0xf] %vm486, %v619
      %s621 = sshra.s32 %s444, 3
      %s622 = sand.u32 %s444, 7
      %s623 = smul.addr %s621, 4
      %s624 = scalar_lea.vmem [#allocation2], %s623
      %v625 = vld [vmem:[%s624] sm:$0xf]
      %v626 = vld [vmem:[%s4] sm:$0xf]
      %v627 = vld [vmem:[%s4 + $0x4] sm:$0xf]
      %v628 = vld [vmem:[%s4 + $0x8] sm:$0xf]
      %v629 = vld [vmem:[%s4 + $0xc] sm:$0xf]
      %v630 = vld [vmem:[%s5] sm:$0x1]
      %v632 = vlaneseq
      %v633 = vshrl.u32 %v632, 7
      %v634 = vsub.s32 0, %v633
      %v635 = vrot.slane %v630, %v634
      %v641 = vunpack.c.l.b16 %v626
      %v642 = vunpack.c.l.b16 %v627
      %v643 = vunpack.c.l.b16 %v628
      %v644 = vunpack.c.l.b16 %v629
      %v645 = vpack.c.b16 %v642, %v641
      %v646 = vpack.c.b16 %v644, %v643
      %v650 = vsel %vm446, %v625, 0
      %652 = vmatprep.subr.bf16.mxu0 0
      %653 = vmatpush1.bf16.msra.mxu0 %v645
      %654 = vmatprep.subr.bf16.mxu0 0
      %655 = vmatpush1.bf16.msra.mxu0 %v646
      %656 = vmatprep.subr.bf16.mxu0 0
      %657 = vmatpush1.bf16.msra.mxu0 0
      %658 = vmatprep.subr.bf16.mxu0 0
      %659 = vmatpush1.bf16.msra.mxu0 0
      %660 = vmatprep.subr.bf16.mxu0 0
      %661 = vmatpush1.bf16.msra.mxu0 0
      %662 = vmatprep.subr.bf16.mxu0 0
      %663 = vmatpush1.bf16.msra.mxu0 0
      %664 = vmatprep.subr.bf16.mxu0 0
      %665 = vmatpush1.bf16.msra.mxu0 0
      %666 = vmatprep.subr.bf16.mxu0 0
      %667 = vmatpush1.bf16.msra.mxu0 0
      %668 = vmatprep.subr.bf16.mxu0 0
      %669 = vmatpush1.bf16.msra.mxu0 0
      %670 = vmatprep.subr.bf16.mxu0 0
      %671 = vmatpush1.bf16.msra.mxu0 0
      %672 = vmatprep.subr.bf16.mxu0 0
      %673 = vmatpush1.bf16.msra.mxu0 0
      %674 = vmatprep.subr.bf16.mxu0 0
      %675 = vmatpush1.bf16.msra.mxu0 0
      %676 = vmatprep.subr.bf16.mxu0 0
      %677 = vmatpush1.bf16.msra.mxu0 0
      %678 = vmatprep.subr.bf16.mxu0 0
      %679 = vmatpush1.bf16.msra.mxu0 0
      %680 = vmatprep.subr.bf16.mxu0 0
      %681 = vmatpush1.bf16.msra.mxu0 0
      %682 = vmatprep.subr.bf16.mxu0 0
      %683 = vmatpush1.bf16.msra.mxu0 0
      %684 = vmatprep.mubr.bf16.mxu0 0
      %685 = vmatmul.mubr.bf16.gmra.mrb[0].mxu0 %v650
      %v686 = vpop.f32.mrb[0].mxu0
      %v687 = vadd.f32 %v635, %v686
      %v688 = vpop.f32.mrb[0].mxu0
      %v689 = vpop.f32.mrb[0].mxu0
      %v690 = vpop.f32.mrb[0].mxu0
      %691 = vdwg.mxu0
      %v692 = vpack.c.bf16 %v687, %v687
      %693 = vst.msk [vmem:[#allocation3] sm:$0xf] %vm486, %v692
      %v694 = vld [vmem:[%s435] sm:$0x1]
      %vm695 = vcmp.eq.f32.partialorder %v694, 0.0
      %v696 = vsel %vm695, -1e+09, 0.0
      %v697 = vld [vmem:[#allocation3] sm:$0xf]
      %v698 = vld [vmem:[#allocation4] sm:$0xf]
      %v699 = vld [vmem:[#allocation5] sm:$0xf]
      %vm700 = vcmask 64512
      %v702 = vsel %vm700, %v697, 0
      %v705 = vsel %vm700, %v698, 0
      %707 = vmatprep.subr.bf16.mxu0 0
      %708 = vmatpush1.bf16.xpose.msra.mxu0 %v705
      %709 = vmatprep.subr.bf16.mxu0 0
      %710 = vmatpush1.bf16.xpose.msra.mxu0 0
      %711 = vmatprep.subr.bf16.mxu0 0
      %712 = vmatpush1.bf16.xpose.msra.mxu0 0
      %713 = vmatprep.subr.bf16.mxu0 0
      %714 = vmatpush1.bf16.xpose.msra.mxu0 0
      %715 = vmatprep.subr.bf16.mxu0 0
      %716 = vmatpush1.bf16.xpose.msra.mxu0 0
      %717 = vmatprep.subr.bf16.mxu0 0
      %718 = vmatpush1.bf16.xpose.msra.mxu0 0
      %719 = vmatprep.subr.bf16.mxu0 0
      %720 = vmatpush1.bf16.xpose.msra.mxu0 0
      %721 = vmatprep.subr.bf16.mxu0 0
      %722 = vmatpush1.bf16.xpose.msra.mxu0 0
      %723 = vmatprep.subr.bf16.mxu0 0
      %724 = vmatpush1.bf16.xpose.msra.mxu0 0
      %725 = vmatprep.subr.bf16.mxu0 0
      %726 = vmatpush1.bf16.xpose.msra.mxu0 0
      %727 = vmatprep.subr.bf16.mxu0 0
      %728 = vmatpush1.bf16.xpose.msra.mxu0 0
      %729 = vmatprep.subr.bf16.mxu0 0
      %730 = vmatpush1.bf16.xpose.msra.mxu0 0
      %731 = vmatprep.subr.bf16.mxu0 0
      %732 = vmatpush1.bf16.xpose.msra.mxu0 0
      %733 = vmatprep.subr.bf16.mxu0 0
      %734 = vmatpush1.bf16.xpose.msra.mxu0 0
      %735 = vmatprep.subr.bf16.mxu0 0
      %736 = vmatpush1.bf16.xpose.msra.mxu0 0
      %737 = vmatprep.subr.bf16.mxu0 0
      %738 = vmatpush1.bf16.xpose.msra.mxu0 0
      %739 = vmatprep.mubr.bf16.mxu0 0
      %740 = vmatmul.mubr.bf16.gmra.mrb[0].mxu0 %v702
      %v741 = vpop.f32.mrb[0].mxu0
      %v742 = vadd.f32 0.0, %v741
      %v743 = vpop.f32.mrb[0].mxu0
      %v744 = vpop.f32.mrb[0].mxu0
      %v745 = vpop.f32.mrb[0].mxu0
      %746 = vdwg.mxu0
      %v747 = vmul.f32 %v742, 0.35355338
      %v749 = vlaneseq
      %v750 = vshrl.u32 %v749, 7
      %v751 = vsub.s32 0, %v750
      %v752 = vrot.slane %v696, %v751
      %v754 = vadd.f32 %v747, %v752
      %v755 = vsel %vm700, %v754, -inf
      %756 = vmax.xlane.f32.xlu0 %v755
      %v757 = vpop.xlane.xlu0 %756
      %v758 = vsub.f32 %v754, %v757
      %v759 = vmul.f32 %v758, 1.442695
      %v760 = vpow.pop %v759
      %v761 = vsel %vm700, %v760, 0.0
      %762 = vadd.xlane.f32.xlu0 %v761
      %v763 = vpop.xlane.xlu0 %762
      %v764 = vrcp.pop %v763
      %v765 = vmul.f32 %v760, %v764
      %v766 = vpack.c.bf16 %v765, %v765
      %v768 = vsel %vm700, %v766, 0
      %vm770 = vcmask 1043456
      %v772 = vsel %vm770, %v699, 0
      %774 = vmatprep.subr.bf16.mxu0 0
      %775 = vmatpush1.bf16.msra.mxu0 %v772
      %776 = vmatprep.subr.bf16.mxu0 0
      %777 = vmatpush1.bf16.msra.mxu0 0
      %778 = vmatprep.subr.bf16.mxu0 0
      %779 = vmatpush1.bf16.msra.mxu0 0
      %780 = vmatprep.subr.bf16.mxu0 0
      %781 = vmatpush1.bf16.msra.mxu0 0
      %782 = vmatprep.subr.bf16.mxu0 0
      %783 = vmatpush1.bf16.msra.mxu0 0
      %784 = vmatprep.subr.bf16.mxu0 0
      %785 = vmatpush1.bf16.msra.mxu0 0
      %786 = vmatprep.subr.bf16.mxu0 0
      %787 = vmatpush1.bf16.msra.mxu0 0
      %788 = vmatprep.subr.bf16.mxu0 0
      %789 = vmatpush1.bf16.msra.mxu0 0
      %790 = vmatprep.subr.bf16.mxu0 0
      %791 = vmatpush1.bf16.msra.mxu0 0
      %792 = vmatprep.subr.bf16.mxu0 0
      %793 = vmatpush1.bf16.msra.mxu0 0
      %794 = vmatprep.subr.bf16.mxu0 0
      %795 = vmatpush1.bf16.msra.mxu0 0
      %796 = vmatprep.subr.bf16.mxu0 0
      %797 = vmatpush1.bf16.msra.mxu0 0
      %798 = vmatprep.subr.bf16.mxu0 0
      %799 = vmatpush1.bf16.msra.mxu0 0
      %800 = vmatprep.subr.bf16.mxu0 0
      %801 = vmatpush1.bf16.msra.mxu0 0
      %802 = vmatprep.subr.bf16.mxu0 0
      %803 = vmatpush1.bf16.msra.mxu0 0
      %804 = vmatprep.subr.bf16.mxu0 0
      %805 = vmatpush1.bf16.msra.mxu0 0
      %806 = vmatprep.mubr.bf16.mxu0 0
      %807 = vmatmul.mubr.bf16.gmra.mrb[0].mxu0 %v768
      %v808 = vpop.f32.mrb[0].mxu0
      %v809 = vadd.f32 0.0, %v808
      %v810 = vpop.f32.mrb[0].mxu0
      %v811 = vpop.f32.mrb[0].mxu0
      %v812 = vpop.f32.mrb[0].mxu0
      %813 = vdwg.mxu0
      %814 = vst.msk [vmem:[#allocation6] sm:$0xff] %vm700, %v809
      %v815 = vld [vmem:[#allocation3] sm:$0xf]
      %v816 = vld [vmem:[#allocation4] sm:$0xf]
      %v817 = vld [vmem:[#allocation5] sm:$0xf]
      %v819 = vunpack.c.l.b16 %v815
      %v820 = vpack.c.b16 %v819, %v819
      %821 = vrot.lane.b32.xlu0 %v820, 120
      %v822 = vpop.permute.xlu0 %821
      %v824 = vunpack.c.l.b16 %v816
      %v825 = vpack.c.b16 %v824, %v824
      %826 = vrot.lane.b32.xlu0 %v825, 120
      %v827 = vpop.permute.xlu0 %826
      %v829 = vsel %vm700, %v822, 0
      %v832 = vsel %vm700, %v827, 0
      %834 = vmatprep.subr.bf16.mxu0 0
      %835 = vmatpush1.bf16.xpose.msra.mxu0 %v832
      %836 = vmatprep.subr.bf16.mxu0 0
      %837 = vmatpush1.bf16.xpose.msra.mxu0 0
      %838 = vmatprep.subr.bf16.mxu0 0
      %839 = vmatpush1.bf16.xpose.msra.mxu0 0
      %840 = vmatprep.subr.bf16.mxu0 0
      %841 = vmatpush1.bf16.xpose.msra.mxu0 0
      %842 = vmatprep.subr.bf16.mxu0 0
      %843 = vmatpush1.bf16.xpose.msra.mxu0 0
      %844 = vmatprep.subr.bf16.mxu0 0
      %845 = vmatpush1.bf16.xpose.msra.mxu0 0
      %846 = vmatprep.subr.bf16.mxu0 0
      %847 = vmatpush1.bf16.xpose.msra.mxu0 0
      %848 = vmatprep.subr.bf16.mxu0 0
      %849 = vmatpush1.bf16.xpose.msra.mxu0 0
      %850 = vmatprep.subr.bf16.mxu0 0
      %851 = vmatpush1.bf16.xpose.msra.mxu0 0
      %852 = vmatprep.subr.bf16.mxu0 0
      %853 = vmatpush1.bf16.xpose.msra.mxu0 0
      %854 = vmatprep.subr.bf16.mxu0 0
      %855 = vmatpush1.bf16.xpose.msra.mxu0 0
      %856 = vmatprep.subr.bf16.mxu0 0
      %857 = vmatpush1.bf16.xpose.msra.mxu0 0
      %858 = vmatprep.subr.bf16.mxu0 0
      %859 = vmatpush1.bf16.xpose.msra.mxu0 0
      %860 = vmatprep.subr.bf16.mxu0 0
      %861 = vmatpush1.bf16.xpose.msra.mxu0 0
      %862 = vmatprep.subr.bf16.mxu0 0
      %863 = vmatpush1.bf16.xpose.msra.mxu0 0
      %864 = vmatprep.subr.bf16.mxu0 0
      %865 = vmatpush1.bf16.xpose.msra.mxu0 0
      %866 = vmatprep.mubr.bf16.mxu0 0
      %867 = vmatmul.mubr.bf16.gmra.mrb[0].mxu0 %v829
      %v868 = vpop.f32.mrb[0].mxu0
      %v869 = vadd.f32 0.0, %v868
      %v870 = vpop.f32.mrb[0].mxu0
      %v871 = vpop.f32.mrb[0].mxu0
      %v872 = vpop.f32.mrb[0].mxu0
      %873 = vdwg.mxu0
      %v874 = vmul.f32 %v869, 0.35355338
      %v875 = vadd.f32 %v874, %v752
      %v876 = vsel %vm700, %v875, -inf
      %877 = vmax.xlane.f32.xlu0 %v876
      %v878 = vpop.xlane.xlu0 %877
      %v879 = vsub.f32 %v875, %v878
      %v880 = vmul.f32 %v879, 1.442695
      %v881 = vpow.pop %v880
      %v882 = vsel %vm700, %v881, 0.0
      %883 = vadd.xlane.f32.xlu0 %v882
      %v884 = vpop.xlane.xlu0 %883
      %v885 = vrcp.pop %v884
      %v886 = vmul.f32 %v881, %v885
      %v887 = vpack.c.bf16 %v886, %v886
      %v889 = vunpack.c.l.b16 %v817
      %v890 = vpack.c.b16 %v889, %v889
      %891 = vrot.lane.b32.xlu0 %v890, 120
      %v892 = vpop.permute.xlu0 %891
      %v894 = vsel %vm700, %v887, 0
      %v897 = vsel %vm770, %v892, 0
      %899 = vmatprep.subr.bf16.mxu0 0
      %900 = vmatpush1.bf16.msra.mxu0 %v897
      %901 = vmatprep.subr.bf16.mxu0 0
      %902 = vmatpush1.bf16.msra.mxu0 0
      %903 = vmatprep.subr.bf16.mxu0 0
      %904 = vmatpush1.bf16.msra.mxu0 0
      %905 = vmatprep.subr.bf16.mxu0 0
      %906 = vmatpush1.bf16.msra.mxu0 0
      %907 = vmatprep.subr.bf16.mxu0 0
      %908 = vmatpush1.bf16.msra.mxu0 0
      %909 = vmatprep.subr.bf16.mxu0 0
      %910 = vmatpush1.bf16.msra.mxu0 0
      %911 = vmatprep.subr.bf16.mxu0 0
      %912 = vmatpush1.bf16.msra.mxu0 0
      %913 = vmatprep.subr.bf16.mxu0 0
      %914 = vmatpush1.bf16.msra.mxu0 0
      %915 = vmatprep.subr.bf16.mxu0 0
      %916 = vmatpush1.bf16.msra.mxu0 0
      %917 = vmatprep.subr.bf16.mxu0 0
      %918 = vmatpush1.bf16.msra.mxu0 0
      %919 = vmatprep.subr.bf16.mxu0 0
      %920 = vmatpush1.bf16.msra.mxu0 0
      %921 = vmatprep.subr.bf16.mxu0 0
      %922 = vmatpush1.bf16.msra.mxu0 0
      %923 = vmatprep.subr.bf16.mxu0 0
      %924 = vmatpush1.bf16.msra.mxu0 0
      %925 = vmatprep.subr.bf16.mxu0 0
      %926 = vmatpush1.bf16.msra.mxu0 0
      %927 = vmatprep.subr.bf16.mxu0 0
      %928 = vmatpush1.bf16.msra.mxu0 0
      %929 = vmatprep.subr.bf16.mxu0 0
      %930 = vmatpush1.bf16.msra.mxu0 0
      %931 = vmatprep.mubr.bf16.mxu0 0
      %932 = vmatmul.mubr.bf16.gmra.mrb[0].mxu0 %v894
      %v933 = vpop.f32.mrb[0].mxu0
      %v934 = vadd.f32 0.0, %v933
      %v935 = vpop.f32.mrb[0].mxu0
      %v936 = vpop.f32.mrb[0].mxu0
      %v937 = vpop.f32.mrb[0].mxu0
      %938 = vdwg.mxu0
      %940 = vrot.lane.b32.xlu0 %v934, 8
      %v941 = vpop.permute.xlu0 %940
      %vm943 = vcmask 130112
      %944 = vst.msk [vmem:[#allocation6] sm:$0xff] %vm943, %v941
      %v945 = vld [vmem:[#allocation3] sm:$0xf]
      %v946 = vld [vmem:[#allocation4] sm:$0xf]
      %v947 = vld [vmem:[#allocation5] sm:$0xf]
      %v949 = vunpack.c.l.b16 %v945
      %v950 = vpack.c.b16 %v949, %v949
      %951 = vrot.lane.b32.xlu0 %v950, 112
      %v952 = vpop.permute.xlu0 %951
      %v954 = vunpack.c.l.b16 %v946
      %v955 = vpack.c.b16 %v954, %v954
      %956 = vrot.lane.b32.xlu0 %v955, 112
      %v957 = vpop.permute.xlu0 %956
      %v959 = vsel %vm700, %v952, 0
      %v962 = vsel %vm700, %v957, 0
      %964 = vmatprep.subr.bf16.mxu0 0
      %965 = vmatpush1.bf16.xpose.msra.mxu0 %v962
      %966 = vmatprep.subr.bf16.mxu0 0
      %967 = vmatpush1.bf16.xpose.msra.mxu0 0
      %968 = vmatprep.subr.bf16.mxu0 0
      %969 = vmatpush1.bf16.xpose.msra.mxu0 0
      %970 = vmatprep.subr.bf16.mxu0 0
      %971 = vmatpush1.bf16.xpose.msra.mxu0 0
      %972 = vmatprep.subr.bf16.mxu0 0
      %973 = vmatpush1.bf16.xpose.msra.mxu0 0
      %974 = vmatprep.subr.bf16.mxu0 0
      %975 = vmatpush1.bf16.xpose.msra.mxu0 0
      %976 = vmatprep.subr.bf16.mxu0 0
      %977 = vmatpush1.bf16.xpose.msra.mxu0 0
      %978 = vmatprep.subr.bf16.mxu0 0
      %979 = vmatpush1.bf16.xpose.msra.mxu0 0
      %980 = vmatprep.subr.bf16.mxu0 0
      %981 = vmatpush1.bf16.xpose.msra.mxu0 0
      %982 = vmatprep.subr.bf16.mxu0 0
      %983 = vmatpush1.bf16.xpose.msra.mxu0 0
      %984 = vmatprep.subr.bf16.mxu0 0
      %985 = vmatpush1.bf16.xpose.msra.mxu0 0
      %986 = vmatprep.subr.bf16.mxu0 0
      %987 = vmatpush1.bf16.xpose.msra.mxu0 0
      %988 = vmatprep.subr.bf16.mxu0 0
      %989 = vmatpush1.bf16.xpose.msra.mxu0 0
      %990 = vmatprep.subr.bf16.mxu0 0
      %991 = vmatpush1.bf16.xpose.msra.mxu0 0
      %992 = vmatprep.subr.bf16.mxu0 0
      %993 = vmatpush1.bf16.xpose.msra.mxu0 0
      %994 = vmatprep.subr.bf16.mxu0 0
      %995 = vmatpush1.bf16.xpose.msra.mxu0 0
      %996 = vmatprep.mubr.bf16.mxu0 0
      %997 = vmatmul.mubr.bf16.gmra.mrb[0].mxu0 %v959
      %v998 = vpop.f32.mrb[0].mxu0
      %v999 = vadd.f32 0.0, %v998
      %v1000 = vpop.f32.mrb[0].mxu0
      %v1001 = vpop.f32.mrb[0].mxu0
      %v1002 = vpop.f32.mrb[0].mxu0
      %1003 = vdwg.mxu0
      %v1004 = vmul.f32 %v999, 0.35355338
      %v1005 = vadd.f32 %v1004, %v752
      %v1006 = vsel %vm700, %v1005, -inf
      %1007 = vmax.xlane.f32.xlu0 %v1006
      %v1008 = vpop.xlane.xlu0 %1007
      %v1009 = vsub.f32 %v1005, %v1008
      %v1010 = vmul.f32 %v1009, 1.442695
      %v1011 = vpow.pop %v1010
      %v1012 = vsel %vm700, %v1011, 0.0
      %1013 = vadd.xlane.f32.xlu0 %v1012
      %v1014 = vpop.xlane.xlu0 %1013
      %v1015 = vrcp.pop %v1014
      %v1016 = vmul.f32 %v1011, %v1015
      %v1017 = vpack.c.bf16 %v1016, %v1016
      %v1019 = vunpack.c.l.b16 %v947
      %v1020 = vpack.c.b16 %v1019, %v1019
      %1021 = vrot.lane.b32.xlu0 %v1020, 112
      %v1022 = vpop.permute.xlu0 %1021
      %v1024 = vsel %vm700, %v1017, 0
      %v1027 = vsel %vm770, %v1022, 0
      %1029 = vmatprep.subr.bf16.mxu0 0
      %1030 = vmatpush1.bf16.msra.mxu0 %v1027
      %1031 = vmatprep.subr.bf16.mxu0 0
      %1032 = vmatpush1.bf16.msra.mxu0 0
      %1033 = vmatprep.subr.bf16.mxu0 0
      %1034 = vmatpush1.bf16.msra.mxu0 0
      %1035 = vmatprep.subr.bf16.mxu0 0
      %1036 = vmatpush1.bf16.msra.mxu0 0
      %1037 = vmatprep.subr.bf16.mxu0 0
      %1038 = vmatpush1.bf16.msra.mxu0 0
      %1039 = vmatprep.subr.bf16.mxu0 0
      %1040 = vmatpush1.bf16.msra.mxu0 0
      %1041 = vmatprep.subr.bf16.mxu0 0
      %1042 = vmatpush1.bf16.msra.mxu0 0
      %1043 = vmatprep.subr.bf16.mxu0 0
      %1044 = vmatpush1.bf16.msra.mxu0 0
      %1045 = vmatprep.subr.bf16.mxu0 0
      %1046 = vmatpush1.bf16.msra.mxu0 0
      %1047 = vmatprep.subr.bf16.mxu0 0
      %1048 = vmatpush1.bf16.msra.mxu0 0
      %1049 = vmatprep.subr.bf16.mxu0 0
      %1050 = vmatpush1.bf16.msra.mxu0 0
      %1051 = vmatprep.subr.bf16.mxu0 0
      %1052 = vmatpush1.bf16.msra.mxu0 0
      %1053 = vmatprep.subr.bf16.mxu0 0
      %1054 = vmatpush1.bf16.msra.mxu0 0
      %1055 = vmatprep.subr.bf16.mxu0 0
      %1056 = vmatpush1.bf16.msra.mxu0 0
      %1057 = vmatprep.subr.bf16.mxu0 0
      %1058 = vmatpush1.bf16.msra.mxu0 0
      %1059 = vmatprep.subr.bf16.mxu0 0
      %1060 = vmatpush1.bf16.msra.mxu0 0
      %1061 = vmatprep.mubr.bf16.mxu0 0
      %1062 = vmatmul.mubr.bf16.gmra.mrb[0].mxu0 %v1024
      %v1063 = vpop.f32.mrb[0].mxu0
      %v1064 = vadd.f32 0.0, %v1063
      %v1065 = vpop.f32.mrb[0].mxu0
      %v1066 = vpop.f32.mrb[0].mxu0
      %v1067 = vpop.f32.mrb[0].mxu0
      %1068 = vdwg.mxu0
      %1070 = vrot.lane.b32.xlu0 %v1064, 16
      %v1071 = vpop.permute.xlu0 %1070
      %vm1073 = vcmask 195712
      %1074 = vst.msk [vmem:[#allocation6] sm:$0xff] %vm1073, %v1071
      %v1075 = vld [vmem:[#allocation3] sm:$0xf]
      %v1076 = vld [vmem:[#allocation4] sm:$0xf]
      %v1077 = vld [vmem:[#allocation5] sm:$0xf]
      %v1079 = vunpack.c.l.b16 %v1075
      %v1080 = vpack.c.b16 %v1079, %v1079
      %1081 = vrot.lane.b32.xlu0 %v1080, 104
      %v1082 = vpop.permute.xlu0 %1081
      %v1084 = vunpack.c.l.b16 %v1076
      %v1085 = vpack.c.b16 %v1084, %v1084
      %1086 = vrot.lane.b32.xlu0 %v1085, 104
      %v1087 = vpop.permute.xlu0 %1086
      %v1089 = vsel %vm700, %v1082, 0
      %v1092 = vsel %vm700, %v1087, 0
      %1094 = vmatprep.subr.bf16.mxu0 0
      %1095 = vmatpush1.bf16.xpose.msra.mxu0 %v1092
      %1096 = vmatprep.subr.bf16.mxu0 0
      %1097 = vmatpush1.bf16.xpose.msra.mxu0 0
      %1098 = vmatprep.subr.bf16.mxu0 0
      %1099 = vmatpush1.bf16.xpose.msra.mxu0 0
      %1100 = vmatprep.subr.bf16.mxu0 0
      %1101 = vmatpush1.bf16.xpose.msra.mxu0 0
      %1102 = vmatprep.subr.bf16.mxu0 0
      %1103 = vmatpush1.bf16.xpose.msra.mxu0 0
      %1104 = vmatprep.subr.bf16.mxu0 0
      %1105 = vmatpush1.bf16.xpose.msra.mxu0 0
      %1106 = vmatprep.subr.bf16.mxu0 0
      %1107 = vmatpush1.bf16.xpose.msra.mxu0 0
      %1108 = vmatprep.subr.bf16.mxu0 0
      %1109 = vmatpush1.bf16.xpose.msra.mxu0 0
      %1110 = vmatprep.subr.bf16.mxu0 0
      %1111 = vmatpush1.bf16.xpose.msra.mxu0 0
      %1112 = vmatprep.subr.bf16.mxu0 0
      %1113 = vmatpush1.bf16.xpose.msra.mxu0 0
      %1114 = vmatprep.subr.bf16.mxu0 0
      %1115 = vmatpush1.bf16.xpose.msra.mxu0 0
      %1116 = vmatprep.subr.bf16.mxu0 0
      %1117 = vmatpush1.bf16.xpose.msra.mxu0 0
      %1118 = vmatprep.subr.bf16.mxu0 0
      %1119 = vmatpush1.bf16.xpose.msra.mxu0 0
      %1120 = vmatprep.subr.bf16.mxu0 0
      %1121 = vmatpush1.bf16.xpose.msra.mxu0 0
      %1122 = vmatprep.subr.bf16.mxu0 0
      %1123 = vmatpush1.bf16.xpose.msra.mxu0 0
      %1124 = vmatprep.subr.bf16.mxu0 0
      %1125 = vmatpush1.bf16.xpose.msra.mxu0 0
      %1126 = vmatprep.mubr.bf16.mxu0 0
      %1127 = vmatmul.mubr.bf16.gmra.mrb[0].mxu0 %v1089
      %v1128 = vpop.f32.mrb[0].mxu0
      %v1129 = vadd.f32 0.0, %v1128
      %v1130 = vpop.f32.mrb[0].mxu0
      %v1131 = vpop.f32.mrb[0].mxu0
      %v1132 = vpop.f32.mrb[0].mxu0
      %1133 = vdwg.mxu0
      %v1134 = vmul.f32 %v1129, 0.35355338
      %v1135 = vadd.f32 %v1134, %v752
      %v1136 = vsel %vm700, %v1135, -inf
      %1137 = vmax.xlane.f32.xlu0 %v1136
      %v1138 = vpop.xlane.xlu0 %1137
      %v1139 = vsub.f32 %v1135, %v1138
      %v1140 = vmul.f32 %v1139, 1.442695
      %v1141 = vpow.pop %v1140
      %v1142 = vsel %vm700, %v1141, 0.0
      %1143 = vadd.xlane.f32.xlu0 %v1142
      %v1144 = vpop.xlane.xlu0 %1143
      %v1145 = vrcp.pop %v1144
      %v1146 = vmul.f32 %v1141, %v1145
      %v1147 = vpack.c.bf16 %v1146, %v1146
      %v1149 = vunpack.c.l.b16 %v1077
      %v1150 = vpack.c.b16 %v1149, %v1149
      %1151 = vrot.lane.b32.xlu0 %v1150, 104
      %v1152 = vpop.permute.xlu0 %1151
      %v1154 = vsel %vm700, %v1147, 0
      %v1157 = vsel %vm770, %v1152, 0
      %1159 = vmatprep.subr.bf16.mxu0 0
      %1160 = vmatpush1.bf16.msra.mxu0 %v1157
      %1161 = vmatprep.subr.bf16.mxu0 0
      %1162 = vmatpush1.bf16.msra.mxu0 0
      %1163 = vmatprep.subr.bf16.mxu0 0
      %1164 = vmatpush1.bf16.msra.mxu0 0
      %1165 = vmatprep.subr.bf16.mxu0 0
      %1166 = vmatpush1.bf16.msra.mxu0 0
      %1167 = vmatprep.subr.bf16.mxu0 0
      %1168 = vmatpush1.bf16.msra.mxu0 0
      %1169 = vmatprep.subr.bf16.mxu0 0
      %1170 = vmatpush1.bf16.msra.mxu0 0
      %1171 = vmatprep.subr.bf16.mxu0 0
      %1172 = vmatpush1.bf16.msra.mxu0 0
      %1173 = vmatprep.subr.bf16.mxu0 0
      %1174 = vmatpush1.bf16.msra.mxu0 0
      %1175 = vmatprep.subr.bf16.mxu0 0
      %1176 = vmatpush1.bf16.msra.mxu0 0
      %1177 = vmatprep.subr.bf16.mxu0 0
      %1178 = vmatpush1.bf16.msra.mxu0 0
      %1179 = vmatprep.subr.bf16.mxu0 0
      %1180 = vmatpush1.bf16.msra.mxu0 0
      %1181 = vmatprep.subr.bf16.mxu0 0
      %1182 = vmatpush1.bf16.msra.mxu0 0
      %1183 = vmatprep.subr.bf16.mxu0 0
      %1184 = vmatpush1.bf16.msra.mxu0 0
      %1185 = vmatprep.subr.bf16.mxu0 0
      %1186 = vmatpush1.bf16.msra.mxu0 0
      %1187 = vmatprep.subr.bf16.mxu0 0
      %1188 = vmatpush1.bf16.msra.mxu0 0
      %1189 = vmatprep.subr.bf16.mxu0 0
      %1190 = vmatpush1.bf16.msra.mxu0 0
      %1191 = vmatprep.mubr.bf16.mxu0 0
      %1192 = vmatmul.mubr.bf16.gmra.mrb[0].mxu0 %v1154
      %v1193 = vpop.f32.mrb[0].mxu0
      %v1194 = vadd.f32 0.0, %v1193
      %v1195 = vpop.f32.mrb[0].mxu0
      %v1196 = vpop.f32.mrb[0].mxu0
      %v1197 = vpop.f32.mrb[0].mxu0
      %1198 = vdwg.mxu0
      %1200 = vrot.lane.b32.xlu0 %v1194, 24
      %v1201 = vpop.permute.xlu0 %1200
      %vm1203 = vcmask 261312
      %1204 = vst.msk [vmem:[#allocation6] sm:$0xff] %vm1203, %v1201
      %v1205 = vld [vmem:[#allocation6] sm:$0xff]
      %v1206 = vpack.c.bf16 %v1205, %v1205
      %v1207 = vld [vmem:[%s10] sm:$0xf]
      %v1208 = vld [vmem:[%s10 + $0x4] sm:$0xf]
      %v1209 = vld [vmem:[%s10 + $0x8] sm:$0xf]
      %v1210 = vld [vmem:[%s10 + $0xc] sm:$0xf]
      %v1211 = vld [vmem:[%s11] sm:$0x1]
      %v1213 = vlaneseq
      %v1214 = vshrl.u32 %v1213, 7
      %v1215 = vsub.s32 0, %v1214
      %v1216 = vrot.slane %v1211, %v1215
      %v1222 = vunpack.c.l.b16 %v1207
      %v1223 = vunpack.c.l.b16 %v1208
      %v1224 = vunpack.c.l.b16 %v1209
      %v1225 = vunpack.c.l.b16 %v1210
      %v1226 = vpack.c.b16 %v1223, %v1222
      %v1227 = vpack.c.b16 %v1225, %v1224
      %v1231 = vsel %vm446, %v1206, 0
      %1233 = vmatprep.subr.bf16.mxu0 0
      %1234 = vmatpush1.bf16.msra.mxu0 %v1226
      %1235 = vmatprep.subr.bf16.mxu0 0
      %1236 = vmatpush1.bf16.msra.mxu0 %v1227
      %1237 = vmatprep.subr.bf16.mxu0 0
      %1238 = vmatpush1.bf16.msra.mxu0 0
      %1239 = vmatprep.subr.bf16.mxu0 0
      %1240 = vmatpush1.bf16.msra.mxu0 0
      %1241 = vmatprep.subr.bf16.mxu0 0
      %1242 = vmatpush1.bf16.msra.mxu0 0
      %1243 = vmatprep.subr.bf16.mxu0 0
      %1244 = vmatpush1.bf16.msra.mxu0 0
      %1245 = vmatprep.subr.bf16.mxu0 0
      %1246 = vmatpush1.bf16.msra.mxu0 0
      %1247 = vmatprep.subr.bf16.mxu0 0
      %1248 = vmatpush1.bf16.msra.mxu0 0
      %1249 = vmatprep.subr.bf16.mxu0 0
      %1250 = vmatpush1.bf16.msra.mxu0 0
      %1251 = vmatprep.subr.bf16.mxu0 0
      %1252 = vmatpush1.bf16.msra.mxu0 0
      %1253 = vmatprep.subr.bf16.mxu0 0
      %1254 = vmatpush1.bf16.msra.mxu0 0
      %1255 = vmatprep.subr.bf16.mxu0 0
      %1256 = vmatpush1.bf16.msra.mxu0 0
      %1257 = vmatprep.subr.bf16.mxu0 0
      %1258 = vmatpush1.bf16.msra.mxu0 0
      %1259 = vmatprep.subr.bf16.mxu0 0
      %1260 = vmatpush1.bf16.msra.mxu0 0
      %1261 = vmatprep.subr.bf16.mxu0 0
      %1262 = vmatpush1.bf16.msra.mxu0 0
      %1263 = vmatprep.subr.bf16.mxu0 0
      %1264 = vmatpush1.bf16.msra.mxu0 0
      %1265 = vmatprep.mubr.bf16.mxu0 0
      %1266 = vmatmul.mubr.bf16.gmra.mrb[0].mxu0 %v1231
      %v1267 = vpop.f32.mrb[0].mxu0
      %v1268 = vadd.f32 %v1216, %v1267
      %v1269 = vpop.f32.mrb[0].mxu0
      %v1270 = vpop.f32.mrb[0].mxu0
      %v1271 = vpop.f32.mrb[0].mxu0
      %1272 = vdwg.mxu0
      %s1273 = scalar_lea.vmem %s432, %s444
      %v1274 = vld [vmem:[%s1273] sm:$0xff]
      %v1275 = vadd.f32 %v1274, %v1268
      %1276 = vst.msk [vmem:[%s442] sm:$0xff] %vm446, %v1275
      %p1277 = scmp.lt.s32.totalorder %s27, 1
      %s1278 = scalar_select %p1277, %s27, 1
      %p1279 = scmp.lt.s32.totalorder %s28, 0
      %s1280 = scalar_select %p1279, %s28, 0
      %s1281 = sadd.s32 %s1280, %s1278
      %s1282 = smul.addr %s1281, 8
      %s1283 = scalar_lea.vmem %s12, %s1282
      // Predicated region
      $region69: #{_lambda_.6} parent=67 // pred_check
        %p1284 = pneg %p317
      $region70: #{_lambda_.6} parent=67 // pred_check_branch
        %1286 = sbr.rel (%p1284) target = $region72
      $region71: #{_lambda_.6} parent=67 // pred_region
        _
      $region72: #{_lambda_.6} parent=67 // pred_fallthru
        _
    $region68: #{_lambda_.6} parent=5 // pred_fallthru
      _
    %p1287 = scmp.le.s32.totalorder 2, %s18
    // Predicated region
    $region73: #{_lambda_.6} parent=5 // pred_check
      %p1288 = pneg %p1287
    $region74: #{_lambda_.6} parent=5 // pred_check_branch
      %1290 = sbr.rel (%p1288) target = $region76
    $region75: #{_lambda_.6} parent=5 // pred_region
      %s1291 = ssub.s32 %s18, 2
      // Predicated region
      $region77: #{_lambda_.6} parent=75 // pred_check
        %p1292 = pneg %p323
      $region78: #{_lambda_.6} parent=75 // pred_check_branch
        %1294 = sbr.rel (%p1292) target = $region80
      $region79: #{_lambda_.6} parent=75 // pred_region
        %p1295 = scmp.lt.s32.totalorder %s29, 1
        %s1296 = scalar_select %p1295, %s29, 1
        %p1297 = scmp.lt.s32.totalorder %s30, 0
        %s1298 = scalar_select %p1297, %s30, 0
        %s1299 = sadd.s32 %s1298, %s1296
        %s1300 = smul.addr %s1299, 8
        %s1301 = scalar_lea.vmem %s12, %s1300
      $region80: #{_lambda_.6} parent=75 // pred_fallthru
        _
    $region76: #{_lambda_.6} parent=5 // pred_fallthru
      _
  $region6: #{_lambda_.6} parent=0 // loop_footer
    %s22 = sadd.s32 1, %s18
  $region7: #{_lambda_.6} parent=0 // loop_footer_branch
    %17 = sbr.rel target = $region3
  $region8: #{_lambda_.6} parent=0 // loop_exit
    _

</llo_original>
